<compile_context>
chip_gen: v5e
topology: v5e:2x2
jax: 0.10.0
libtpu: 0.0.40
codegen_flags: <defaults>
</compile_context>

<pallas_src>
import numpy as np

import jax
import jax.numpy as jnp
from jax.experimental import pallas as pl
from jax.experimental.pallas import tpu as pltpu


B = 8  # images per grid step (one 8-sublane tile per image-row group)


# ---------------------------------------------------------------------------
# The fused kernel (one grid step == B images)
# ---------------------------------------------------------------------------

def _pool_pairs(h, npairs):
    """h: (2*npairs*B, 128), rows ordered (conv_row, image).  Max over the two
    conv rows of each pooled row -> (npairs*B, 128).  Tile-exact for B=8."""
    h = h.reshape(npairs, 2 * B, 128)
    return jnp.maximum(h[:, :B, :], h[:, B:, :]).reshape(npairs * B, 128)


def _net_kernel(x_ref, t1_ref, b1_ref, t2_ref, b2_ref,
                w1_ref, fb1_ref, w2_ref, fb2_ref, w3_ref, fb3_ref,
                o_ref, acc1_ref, acc2_ref, p1_ref):
    f32 = jnp.float32
    bf16 = jnp.bfloat16

    # ---- stage 1: conv1 (3->6, 5x5) + bias + ReLU + 2x2 max-pool ------------
    # Input sublane = image_row*B + image, so the LHS for conv-kernel-row tap i
    # is one contiguous tile-aligned slice covering all 28 conv output rows of
    # all B images; the two horizontal pool phases live in the two 128-lane
    # halves of the Toeplitz columns.  One RHS push per tap per step.
    for i in range(5):
        lhs = x_ref[0, pl.ds(i * B, 28 * B), :].astype(bf16)          # (28B, 128)
        d = jnp.dot(lhs, t1_ref[i], preferred_element_type=f32)       # (28B, 256)
        if i == 0:
            acc1_ref[...] = d
        else:
            acc1_ref[...] += d
    h1 = jnp.maximum(acc1_ref[:, :128], acc1_ref[:, 128:])            # horiz pool
    p1 = _pool_pairs(h1, 14)                                          # vert pool
    p1_ref[...] = jnp.maximum(p1 + b1_ref[...], 0.0)  # bias+ReLU (f32); pad lanes stay 0

    # ---- stage 2: conv2 (6->16, 5x5) + bias + ReLU + 2x2 max-pool -----------
    for i in range(5):
        lhs = p1_ref[pl.ds(i * B, 10 * B), :].astype(bf16)            # (10B, 128)
        d = jnp.dot(lhs, t2_ref[i], preferred_element_type=f32)       # (10B, 256)
        if i == 0:
            acc2_ref[...] = d
        else:
            acc2_ref[...] += d
    h2 = jnp.maximum(acc2_ref[:, :128], acc2_ref[:, 128:])            # (10B, 128)
    p2 = _pool_pairs(h2, 5)                                           # (5B, 128)
    p2 = jnp.maximum(p2 + b2_ref[...], 0.0)

    # ---- stage 3: fc1 -> ReLU -> fc2 -> ReLU -> fc3 -------------------------
    # Per-image NCHW flatten == concatenate the 5 pooled rows along lanes
    # (lane-aligned, tile-exact), then a single K=640 dot on the fc1 slab.
    lhs1 = jnp.concatenate([p2[h * B:(h + 1) * B, :] for h in range(5)],
                           axis=1).astype(bf16)                       # (B, 640)
    z1 = jnp.maximum(
        jnp.dot(lhs1, w1_ref[...], preferred_element_type=f32) + fb1_ref[...],
        0.0)                                                          # (B, 128)
    z2 = jnp.maximum(
        jnp.dot(z1.astype(bf16), w2_ref[...], preferred_element_type=f32)
        + fb2_ref[...], 0.0)                                          # (B, 128)
    out = (jnp.dot(z2.astype(bf16), w3_ref[...], preferred_element_type=f32)
           + fb3_ref[...])                                            # (B, 128)
    o_ref[...] = out.astype(o_ref.dtype)      # sublane-dense; lanes 0..1 = logits


# ---------------------------------------------------------------------------
# Forward pass (thin wrapper around one pallas_call)
# ---------------------------------------------------------------------------

def net_forward(x_nchw, packed):
    """x_nchw: (N, 3, 32, 32) float32 -> logits (N, 2)."""
    N = x_nchw.shape[0]
    nblk = (N + B - 1) // B
    Np = nblk * B
    # NCHW -> rows-of-(W*C), 128-lane zero pad, then interleave the B images of
    # each block along sublanes (sublane = row*B + image) so every conv tap in
    # the kernel is a single contiguous, tile-aligned slice.
    # TODO(synk): this one-time repack could be fused into the producer of x.
    x2d = jnp.transpose(x_nchw, (0, 2, 3, 1)).reshape(N, 32, 96)
    x2d = jnp.pad(x2d, ((0, Np - N), (0, 0), (0, 32)))                # (Np, 32, 128)
    xi = (x2d.reshape(nblk, B, 32, 128)
              .transpose(0, 2, 1, 3)
              .reshape(nblk, 32 * B, 128))                            # (nblk, 32B, 128)

    out = pl.pallas_call(
        _net_kernel,
        out_shape=jax.ShapeDtypeStruct((Np, 128), jnp.float32),
        grid=(nblk,),
        in_specs=[
            pl.BlockSpec((1, 32 * B, 128), lambda n: (n, 0, 0)),      # images (f32)
            pl.BlockSpec((5, 128, 256), lambda n: (0, 0, 0)),         # conv1 Toeplitz
            pl.BlockSpec((1, 128), lambda n: (0, 0)),                 # conv1 bias row
            pl.BlockSpec((5, 128, 256), lambda n: (0, 0, 0)),         # conv2 Toeplitz
            pl.BlockSpec((1, 128), lambda n: (0, 0)),                 # conv2 bias row
            pl.BlockSpec((640, 128), lambda n: (0, 0)),               # fc1 slab
            pl.BlockSpec((1, 128), lambda n: (0, 0)),                 # fc1 bias
            pl.BlockSpec((128, 128), lambda n: (0, 0)),               # fc2
            pl.BlockSpec((1, 128), lambda n: (0, 0)),                 # fc2 bias
            pl.BlockSpec((128, 128), lambda n: (0, 0)),               # fc3 (padded)
            pl.BlockSpec((1, 128), lambda n: (0, 0)),                 # fc3 bias
        ],
        out_specs=pl.BlockSpec((B, 128), lambda n: (n, 0)),
        scratch_shapes=[
            pltpu.VMEM((28 * B, 256), jnp.float32),    # conv1 accumulator
            pltpu.VMEM((10 * B, 256), jnp.float32),    # conv2 accumulator
            pltpu.VMEM((14 * B, 128), jnp.float32),    # pooled conv1 activations
        ],
        compiler_params=pltpu.CompilerParams(dimension_semantics=("parallel",)),
    )(xi, packed["t1"], packed["b1"], packed["t2"], packed["b2"],
      packed["w1"], packed["fb1"], packed["w2"], packed["fb2"],
      packed["w3"], packed["fb3"])
    return out[:N, :2]


# ---------------------------------------------------------------------------
# One-time parameter packing (hoisted out of the forward pass)
# ---------------------------------------------------------------------------

def pack_params(params):
    w1 = np.asarray(params["conv1_w"], np.float32)   # (6, 3, 5, 5)  (oc, ic, kh, kw)
    b1 = np.asarray(params["conv1_b"], np.float32)
    w2 = np.asarray(params["conv2_w"], np.float32)   # (16, 6, 5, 5)
    b2 = np.asarray(params["conv2_b"], np.float32)
    f1w = np.asarray(params["fc1_w"], np.float32)    # (120, 400)
    f1b = np.asarray(params["fc1_b"], np.float32)
    f2w = np.asarray(params["fc2_w"], np.float32)    # (84, 120)
    f2b = np.asarray(params["fc2_b"], np.float32)
    f3w = np.asarray(params["fc3_w"], np.float32)    # (2, 84)
    f3b = np.asarray(params["fc3_b"], np.float32)

    # conv1 Toeplitz: rows = input-row lane (w*3+ic), cols = 128*b + pw*6 + oc,
    # b = horizontal pool phase, pw = pooled output column.
    t1 = np.zeros((5, 128, 256), np.float32)
    for i in range(5):
        for b in range(2):
            for pw in range(14):
                for j in range(5):
                    r0 = (2 * pw + b + j) * 3
                    c0 = 128 * b + pw * 6
                    t1[i, r0:r0 + 3, c0:c0 + 6] = w1[:, :, i, j].T    # (ic, oc)

    # conv2 Toeplitz: rows = pooled-conv1 lane (pw*6+ic), cols = 128*b + pw2*16 + oc.
    t2 = np.zeros((5, 128, 256), np.float32)
    for i in range(5):
        for b in range(2):
            for pw in range(5):
                for j in range(5):
                    r0 = (2 * pw + b + j) * 6
                    c0 = 128 * b + pw * 16
                    t2[i, r0:r0 + 6, c0:c0 + 16] = w2[:, :, i, j].T   # (ic, oc)

    b1row = np.zeros((1, 128), np.float32)
    b1row[0, :84] = np.tile(b1, 14)                  # lane = pw*6 + oc
    b2row = np.zeros((1, 128), np.float32)
    b2row[0, :80] = np.tile(b2, 5)                   # lane = pw*16 + oc

    # fc1 slab (640,128): row = h*128 + (w*16 + oc), col = n.  Matches torch's
    # NCHW .view(-1, 400) flatten order (feature = oc*25 + h*5 + w).
    w1slab = np.zeros((640, 128), np.float32)
    f1w_r = f1w.reshape(120, 16, 5, 5)               # (n, oc, h, w)
    for h in range(5):
        blk = np.transpose(f1w_r[:, :, h, :], (2, 1, 0)).reshape(80, 120)
        w1slab[h * 128:h * 128 + 80, :120] = blk     # [w*16+oc, n]

    fb1 = np.zeros((1, 128), np.float32); fb1[0, :120] = f1b
    w2p = np.zeros((128, 128), np.float32); w2p[:120, :84] = f2w.T
    fb2 = np.zeros((1, 128), np.float32); fb2[0, :84] = f2b
    w3p = np.zeros((128, 128), np.float32); w3p[:84, :2] = f3w.T
    fb3 = np.zeros((1, 128), np.float32); fb3[0, :2] = f3b

    # Matmul operands in bf16 (single-pass MXU); biases stay f32.
    return {
        "t1": jnp.asarray(t1, jnp.bfloat16), "b1": jnp.asarray(b1row),
        "t2": jnp.asarray(t2, jnp.bfloat16), "b2": jnp.asarray(b2row),
        "w1": jnp.asarray(w1slab, jnp.bfloat16), "fb1": jnp.asarray(fb1),
        "w2": jnp.asarray(w2p, jnp.bfloat16), "fb2": jnp.asarray(fb2),
        "w3": jnp.asarray(w3p, jnp.bfloat16), "fb3": jnp.asarray(fb3),
    }


# ---------------------------------------------------------------------------
# Parameters (PyTorch layouts) and a pure-JAX reference for validation
# ---------------------------------------------------------------------------

def init_params(key):
    ks = jax.random.split(key, 10)
    s = 0.05
    return {
        "conv1_w": s * jax.random.normal(ks[0], (6, 3, 5, 5), jnp.float32),
        "conv1_b": s * jax.random.normal(ks[1], (6,), jnp.float32),
        "conv2_w": s * jax.random.normal(ks[2], (16, 6, 5, 5), jnp.float32),
        "conv2_b": s * jax.random.normal(ks[3], (16,), jnp.float32),
        "fc1_w": s * jax.random.normal(ks[4], (120, 16 * 5 * 5), jnp.float32),
        "fc1_b": s * jax.random.normal(ks[5], (120,), jnp.float32),
        "fc2_w": s * jax.random.normal(ks[6], (84, 120), jnp.float32),
        "fc2_b": s * jax.random.normal(ks[7], (84,), jnp.float32),
        "fc3_w": s * jax.random.normal(ks[8], (2, 84), jnp.float32),
        "fc3_b": s * jax.random.normal(ks[9], (2,), jnp.float32),
    }


def _reference_forward(x, params):
    hi = jax.lax.Precision.HIGHEST

    def conv(v, w, b):
        y = jax.lax.conv_general_dilated(
            v, w, window_strides=(1, 1), padding="VALID",
            dimension_numbers=("NCHW", "OIHW", "NCHW"), precision=hi)
        return y + b[None, :, None, None]

    def pool(v):
        return jax.lax.reduce_window(v, -jnp.inf, jax.lax.max,
                                     (1, 1, 2, 2), (1, 1, 2, 2), "VALID")

    v = pool(jax.nn.relu(conv(x, params["conv1_w"], params["conv1_b"])))
    v = pool(jax.nn.relu(conv(v, params["conv2_w"], params["conv2_b"])))
    v = v.reshape(v.shape[0], -1)                    # NCHW flatten == torch .view
    v = jax.nn.relu(jnp.dot(v, params["fc1_w"].T, precision=hi) + params["fc1_b"])
    v = jax.nn.relu(jnp.dot(v, params["fc2_w"].T, precision=hi) + params["fc2_b"])
    return jnp.dot(v, params["fc3_w"].T, precision=hi) + params["fc3_b"]


if __name__ == "__main__":
    key = jax.random.PRNGKey(0)
    pkey, xkey = jax.random.split(key)
    params = init_params(pkey)
    packed = pack_params(params)
    # forward() implies 32x32x3 input (-> 16*5*5 after the two pools).
    # Batch 16 = 2 grid steps of B=8 images (even grid length for v7x megacore).
    x = jax.random.normal(xkey, (16, 3, 32, 32), jnp.float32)

    out = jax.block_until_ready(jax.jit(net_forward)(x, packed))
    assert out.shape == (16, 2) and out.dtype == jnp.float32

    ref = jax.block_until_ready(_reference_forward(x, params))
    err = float(jnp.max(jnp.abs(out - ref)))
    # Dot operands are bf16 (per perf review); expected error at this scale is
    # a few 1e-4, so 2e-3 still catches any layout/packing bug by a wide margin.
    assert err < 2e-3, f"kernel vs reference mismatch: max|diff|={err:.3e}"
    print("KERNEL_OK")
</pallas_src>

<mosaic_0001>
module attributes {stable_mosaic.version = 11 : i64} {
  func.func @_net_kernel(%arg0: i32, %arg1: memref<1x256x128xf32, #tpu.memory_space<vmem>>, %arg2: memref<5x128x256xbf16, #tpu.memory_space<vmem>>, %arg3: memref<1x128xf32, #tpu.memory_space<vmem>>, %arg4: memref<5x128x256xbf16, #tpu.memory_space<vmem>>, %arg5: memref<1x128xf32, #tpu.memory_space<vmem>>, %arg6: memref<640x128xbf16, #tpu.memory_space<vmem>>, %arg7: memref<1x128xf32, #tpu.memory_space<vmem>>, %arg8: memref<128x128xbf16, #tpu.memory_space<vmem>>, %arg9: memref<1x128xf32, #tpu.memory_space<vmem>>, %arg10: memref<128x128xbf16, #tpu.memory_space<vmem>>, %arg11: memref<1x128xf32, #tpu.memory_space<vmem>>, %arg12: memref<8x128xf32, #tpu.memory_space<vmem>>, %arg13: memref<224x256xf32, #tpu.memory_space<vmem>>, %arg14: memref<80x256xf32, #tpu.memory_space<vmem>>, %arg15: memref<112x128xf32, #tpu.memory_space<vmem>>) attributes {dimension_semantics = [#tpu.dimension_semantics<parallel>], iteration_bounds = array<i64: 2>, scalar_prefetch = 0 : i64, scratch_operands = 3 : i64, tpu.core_type = #tpu.core_type<tc>, window_params = [{transform_indices = @transform_0, window_bounds = array<i64: 1, 256, 128>}, {pipeline_mode = #tpu.pipeline_mode<synchronous>, transform_indices = @transform_1, window_bounds = array<i64: 5, 128, 256>}, {pipeline_mode = #tpu.pipeline_mode<synchronous>, transform_indices = @transform_2, window_bounds = array<i64: 1, 128>}, {pipeline_mode = #tpu.pipeline_mode<synchronous>, transform_indices = @transform_3, window_bounds = array<i64: 5, 128, 256>}, {pipeline_mode = #tpu.pipeline_mode<synchronous>, transform_indices = @transform_4, window_bounds = array<i64: 1, 128>}, {pipeline_mode = #tpu.pipeline_mode<synchronous>, transform_indices = @transform_5, window_bounds = array<i64: 640, 128>}, {pipeline_mode = #tpu.pipeline_mode<synchronous>, transform_indices = @transform_6, window_bounds = array<i64: 1, 128>}, {pipeline_mode = #tpu.pipeline_mode<synchronous>, transform_indices = @transform_7, window_bounds = array<i64: 128, 128>}, {pipeline_mode = #tpu.pipeline_mode<synchronous>, transform_indices = @transform_8, window_bounds = array<i64: 1, 128>}, {pipeline_mode = #tpu.pipeline_mode<synchronous>, transform_indices = @transform_9, window_bounds = array<i64: 128, 128>}, {pipeline_mode = #tpu.pipeline_mode<synchronous>, transform_indices = @transform_10, window_bounds = array<i64: 1, 128>}, {transform_indices = @transform_11, window_bounds = array<i64: 8, 128>}]} {
    %c0 = arith.constant 0 : index
    %c0_0 = arith.constant 0 : index
    %c0_1 = arith.constant 0 : index
    %0 = vector.load %arg1[%c0, %c0_0, %c0_1] : memref<1x256x128xf32, #tpu.memory_space<vmem>>, vector<1x224x128xf32>
    %1 = vector.shape_cast %0 : vector<1x224x128xf32> to vector<224x128xf32>
    %2 = arith.truncf %1 : vector<224x128xf32> to vector<224x128xbf16>
    %c0_2 = arith.constant 0 : index
    %c0_3 = arith.constant 0 : index
    %c0_4 = arith.constant 0 : index
    %3 = vector.load %arg2[%c0_2, %c0_3, %c0_4] : memref<5x128x256xbf16, #tpu.memory_space<vmem>>, vector<1x128x256xbf16>
    %4 = vector.shape_cast %3 : vector<1x128x256xbf16> to vector<128x256xbf16>
    %cst = arith.constant dense<0.000000e+00> : vector<224x256xf32>
    %5 = tpu.matmul %2, %4, %cst {dimension_numbers = #tpu.dot_dimension_numbers<[1], [0], [0], [1], [0, 0, 1, 1], [], []>} : vector<224x128xbf16>, vector<128x256xbf16>, vector<224x256xf32> -> vector<224x256xf32>
    %c0_5 = arith.constant 0 : index
    %c0_6 = arith.constant 0 : index
    %6 = vector.load %arg13[%c0_5, %c0_6] : memref<224x256xf32, #tpu.memory_space<vmem>>, vector<224x256xf32>
    tpu.vector_store %arg13[%c0_5, %c0_6], %5 {strides = array<i32>} : memref<224x256xf32, #tpu.memory_space<vmem>>, vector<224x256xf32>,
    %c0_7 = arith.constant 0 : index
    %c8 = arith.constant 8 : index
    %c0_8 = arith.constant 0 : index
    %7 = vector.load %arg1[%c0_7, %c8, %c0_8] : memref<1x256x128xf32, #tpu.memory_space<vmem>>, vector<1x224x128xf32>
    %8 = vector.shape_cast %7 : vector<1x224x128xf32> to vector<224x128xf32>
    %9 = arith.truncf %8 : vector<224x128xf32> to vector<224x128xbf16>
    %c1 = arith.constant 1 : index
    %c0_9 = arith.constant 0 : index
    %c0_10 = arith.constant 0 : index
    %10 = vector.load %arg2[%c1, %c0_9, %c0_10] : memref<5x128x256xbf16, #tpu.memory_space<vmem>>, vector<1x128x256xbf16>
    %11 = vector.shape_cast %10 : vector<1x128x256xbf16> to vector<128x256xbf16>
    %cst_11 = arith.constant dense<0.000000e+00> : vector<224x256xf32>
    %12 = tpu.matmul %9, %11, %cst_11 {dimension_numbers = #tpu.dot_dimension_numbers<[1], [0], [0], [1], [0, 0, 1, 1], [], []>} : vector<224x128xbf16>, vector<128x256xbf16>, vector<224x256xf32> -> vector<224x256xf32>
    %c0_12 = arith.constant 0 : index
    %c0_13 = arith.constant 0 : index
    %13 = vector.load %arg13[%c0_12, %c0_13] : memref<224x256xf32, #tpu.memory_space<vmem>>, vector<224x256xf32>
    %14 = arith.addf %13, %12 : vector<224x256xf32>
    %c0_14 = arith.constant 0 : index
    %c0_15 = arith.constant 0 : index
    %15 = vector.load %arg13[%c0_14, %c0_15] : memref<224x256xf32, #tpu.memory_space<vmem>>, vector<224x256xf32>
    tpu.vector_store %arg13[%c0_14, %c0_15], %14 {strides = array<i32>} : memref<224x256xf32, #tpu.memory_space<vmem>>, vector<224x256xf32>,
    %c0_16 = arith.constant 0 : index
    %c16 = arith.constant 16 : index
    %c0_17 = arith.constant 0 : index
    %16 = vector.load %arg1[%c0_16, %c16, %c0_17] : memref<1x256x128xf32, #tpu.memory_space<vmem>>, vector<1x224x128xf32>
    %17 = vector.shape_cast %16 : vector<1x224x128xf32> to vector<224x128xf32>
    %18 = arith.truncf %17 : vector<224x128xf32> to vector<224x128xbf16>
    %c2 = arith.constant 2 : index
    %c0_18 = arith.constant 0 : index
    %c0_19 = arith.constant 0 : index
    %19 = vector.load %arg2[%c2, %c0_18, %c0_19] : memref<5x128x256xbf16, #tpu.memory_space<vmem>>, vector<1x128x256xbf16>
    %20 = vector.shape_cast %19 : vector<1x128x256xbf16> to vector<128x256xbf16>
    %cst_20 = arith.constant dense<0.000000e+00> : vector<224x256xf32>
    %21 = tpu.matmul %18, %20, %cst_20 {dimension_numbers = #tpu.dot_dimension_numbers<[1], [0], [0], [1], [0, 0, 1, 1], [], []>} : vector<224x128xbf16>, vector<128x256xbf16>, vector<224x256xf32> -> vector<224x256xf32>
    %c0_21 = arith.constant 0 : index
    %c0_22 = arith.constant 0 : index
    %22 = vector.load %arg13[%c0_21, %c0_22] : memref<224x256xf32, #tpu.memory_space<vmem>>, vector<224x256xf32>
    %23 = arith.addf %22, %21 : vector<224x256xf32>
    %c0_23 = arith.constant 0 : index
    %c0_24 = arith.constant 0 : index
    %24 = vector.load %arg13[%c0_23, %c0_24] : memref<224x256xf32, #tpu.memory_space<vmem>>, vector<224x256xf32>
    tpu.vector_store %arg13[%c0_23, %c0_24], %23 {strides = array<i32>} : memref<224x256xf32, #tpu.memory_space<vmem>>, vector<224x256xf32>,
    %c0_25 = arith.constant 0 : index
    %c24 = arith.constant 24 : index
    %c0_26 = arith.constant 0 : index
    %25 = vector.load %arg1[%c0_25, %c24, %c0_26] : memref<1x256x128xf32, #tpu.memory_space<vmem>>, vector<1x224x128xf32>
    %26 = vector.shape_cast %25 : vector<1x224x128xf32> to vector<224x128xf32>
    %27 = arith.truncf %26 : vector<224x128xf32> to vector<224x128xbf16>
    %c3 = arith.constant 3 : index
    %c0_27 = arith.constant 0 : index
    %c0_28 = arith.constant 0 : index
    %28 = vector.load %arg2[%c3, %c0_27, %c0_28] : memref<5x128x256xbf16, #tpu.memory_space<vmem>>, vector<1x128x256xbf16>
    %29 = vector.shape_cast %28 : vector<1x128x256xbf16> to vector<128x256xbf16>
    %cst_29 = arith.constant dense<0.000000e+00> : vector<224x256xf32>
    %30 = tpu.matmul %27, %29, %cst_29 {dimension_numbers = #tpu.dot_dimension_numbers<[1], [0], [0], [1], [0, 0, 1, 1], [], []>} : vector<224x128xbf16>, vector<128x256xbf16>, vector<224x256xf32> -> vector<224x256xf32>
    %c0_30 = arith.constant 0 : index
    %c0_31 = arith.constant 0 : index
    %31 = vector.load %arg13[%c0_30, %c0_31] : memref<224x256xf32, #tpu.memory_space<vmem>>, vector<224x256xf32>
    %32 = arith.addf %31, %30 : vector<224x256xf32>
    %c0_32 = arith.constant 0 : index
    %c0_33 = arith.constant 0 : index
    %33 = vector.load %arg13[%c0_32, %c0_33] : memref<224x256xf32, #tpu.memory_space<vmem>>, vector<224x256xf32>
    tpu.vector_store %arg13[%c0_32, %c0_33], %32 {strides = array<i32>} : memref<224x256xf32, #tpu.memory_space<vmem>>, vector<224x256xf32>,
    %c0_34 = arith.constant 0 : index
    %c32 = arith.constant 32 : index
    %c0_35 = arith.constant 0 : index
    %34 = vector.load %arg1[%c0_34, %c32, %c0_35] : memref<1x256x128xf32, #tpu.memory_space<vmem>>, vector<1x224x128xf32>
    %35 = vector.shape_cast %34 : vector<1x224x128xf32> to vector<224x128xf32>
    %36 = arith.truncf %35 : vector<224x128xf32> to vector<224x128xbf16>
    %c4 = arith.constant 4 : index
    %c0_36 = arith.constant 0 : index
    %c0_37 = arith.constant 0 : index
    %37 = vector.load %arg2[%c4, %c0_36, %c0_37] : memref<5x128x256xbf16, #tpu.memory_space<vmem>>, vector<1x128x256xbf16>
    %38 = vector.shape_cast %37 : vector<1x128x256xbf16> to vector<128x256xbf16>
    %cst_38 = arith.constant dense<0.000000e+00> : vector<224x256xf32>
    %39 = tpu.matmul %36, %38, %cst_38 {dimension_numbers = #tpu.dot_dimension_numbers<[1], [0], [0], [1], [0, 0, 1, 1], [], []>} : vector<224x128xbf16>, vector<128x256xbf16>, vector<224x256xf32> -> vector<224x256xf32>
    %c0_39 = arith.constant 0 : index
    %c0_40 = arith.constant 0 : index
    %40 = vector.load %arg13[%c0_39, %c0_40] : memref<224x256xf32, #tpu.memory_space<vmem>>, vector<224x256xf32>
    %41 = arith.addf %40, %39 : vector<224x256xf32>
    %c0_41 = arith.constant 0 : index
    %c0_42 = arith.constant 0 : index
    %42 = vector.load %arg13[%c0_41, %c0_42] : memref<224x256xf32, #tpu.memory_space<vmem>>, vector<224x256xf32>
    tpu.vector_store %arg13[%c0_41, %c0_42], %41 {strides = array<i32>} : memref<224x256xf32, #tpu.memory_space<vmem>>, vector<224x256xf32>,
    %c0_43 = arith.constant 0 : index
    %c0_44 = arith.constant 0 : index
    %43 = vector.load %arg13[%c0_43, %c0_44] : memref<224x256xf32, #tpu.memory_space<vmem>>, vector<224x128xf32>
    %c0_45 = arith.constant 0 : index
    %c128 = arith.constant 128 : index
    %44 = vector.load %arg13[%c0_45, %c128] : memref<224x256xf32, #tpu.memory_space<vmem>>, vector<224x128xf32>
    %45 = arith.maximumf %43, %44 : vector<224x128xf32>
    %46 = vector.shape_cast %45 : vector<224x128xf32> to vector<14x16x128xf32>
    %47 = vector.extract_strided_slice %46 {offsets = [0, 0, 0], sizes = [14, 8, 128], strides = [1, 1, 1]} : vector<14x16x128xf32> to vector<14x8x128xf32>
    %48 = vector.extract_strided_slice %46 {offsets = [0, 8, 0], sizes = [14, 8, 128], strides = [1, 1, 1]} : vector<14x16x128xf32> to vector<14x8x128xf32>
    %49 = arith.maximumf %47, %48 : vector<14x8x128xf32>
    %50 = vector.shape_cast %49 : vector<14x8x128xf32> to vector<112x128xf32>
    %c0_46 = arith.constant 0 : index
    %c0_47 = arith.constant 0 : index
    %51 = vector.load %arg3[%c0_46, %c0_47] : memref<1x128xf32, #tpu.memory_space<vmem>>, vector<1x128xf32>
    %52 = vector.broadcast %51 : vector<1x128xf32> to vector<112x128xf32>
    %53 = arith.addf %50, %52 : vector<112x128xf32>
    %cst_48 = arith.constant 0.000000e+00 : f32
    %54 = vector.broadcast %cst_48 : f32 to vector<112x128xf32>
    %55 = arith.maximumf %53, %54 : vector<112x128xf32>
    %c0_49 = arith.constant 0 : index
    %c0_50 = arith.constant 0 : index
    %56 = vector.load %arg15[%c0_49, %c0_50] : memref<112x128xf32, #tpu.memory_space<vmem>>, vector<112x128xf32>
    tpu.vector_store %arg15[%c0_49, %c0_50], %55 {strides = array<i32>} : memref<112x128xf32, #tpu.memory_space<vmem>>, vector<112x128xf32>,
    %c0_51 = arith.constant 0 : index
    %c0_52 = arith.constant 0 : index
    %57 = vector.load %arg15[%c0_51, %c0_52] : memref<112x128xf32, #tpu.memory_space<vmem>>, vector<80x128xf32>
    %58 = arith.truncf %57 : vector<80x128xf32> to vector<80x128xbf16>
    %c0_53 = arith.constant 0 : index
    %c0_54 = arith.constant 0 : index
    %c0_55 = arith.constant 0 : index
    %59 = vector.load %arg4[%c0_53, %c0_54, %c0_55] : memref<5x128x256xbf16, #tpu.memory_space<vmem>>, vector<1x128x256xbf16>
    %60 = vector.shape_cast %59 : vector<1x128x256xbf16> to vector<128x256xbf16>
    %cst_56 = arith.constant dense<0.000000e+00> : vector<80x256xf32>
    %61 = tpu.matmul %58, %60, %cst_56 {dimension_numbers = #tpu.dot_dimension_numbers<[1], [0], [0], [1], [0, 0, 1, 1], [], []>} : vector<80x128xbf16>, vector<128x256xbf16>, vector<80x256xf32> -> vector<80x256xf32>
    %c0_57 = arith.constant 0 : index
    %c0_58 = arith.constant 0 : index
    %62 = vector.load %arg14[%c0_57, %c0_58] : memref<80x256xf32, #tpu.memory_space<vmem>>, vector<80x256xf32>
    tpu.vector_store %arg14[%c0_57, %c0_58], %61 {strides = array<i32>} : memref<80x256xf32, #tpu.memory_space<vmem>>, vector<80x256xf32>,
    %c8_59 = arith.constant 8 : index
    %c0_60 = arith.constant 0 : index
    %63 = vector.load %arg15[%c8_59, %c0_60] : memref<112x128xf32, #tpu.memory_space<vmem>>, vector<80x128xf32>
    %64 = arith.truncf %63 : vector<80x128xf32> to vector<80x128xbf16>
    %c1_61 = arith.constant 1 : index
    %c0_62 = arith.constant 0 : index
    %c0_63 = arith.constant 0 : index
    %65 = vector.load %arg4[%c1_61, %c0_62, %c0_63] : memref<5x128x256xbf16, #tpu.memory_space<vmem>>, vector<1x128x256xbf16>
    %66 = vector.shape_cast %65 : vector<1x128x256xbf16> to vector<128x256xbf16>
    %cst_64 = arith.constant dense<0.000000e+00> : vector<80x256xf32>
    %67 = tpu.matmul %64, %66, %cst_64 {dimension_numbers = #tpu.dot_dimension_numbers<[1], [0], [0], [1], [0, 0, 1, 1], [], []>} : vector<80x128xbf16>, vector<128x256xbf16>, vector<80x256xf32> -> vector<80x256xf32>
    %c0_65 = arith.constant 0 : index
    %c0_66 = arith.constant 0 : index
    %68 = vector.load %arg14[%c0_65, %c0_66] : memref<80x256xf32, #tpu.memory_space<vmem>>, vector<80x256xf32>
    %69 = arith.addf %68, %67 : vector<80x256xf32>
    %c0_67 = arith.constant 0 : index
    %c0_68 = arith.constant 0 : index
    %70 = vector.load %arg14[%c0_67, %c0_68] : memref<80x256xf32, #tpu.memory_space<vmem>>, vector<80x256xf32>
    tpu.vector_store %arg14[%c0_67, %c0_68], %69 {strides = array<i32>} : memref<80x256xf32, #tpu.memory_space<vmem>>, vector<80x256xf32>,
    %c16_69 = arith.constant 16 : index
    %c0_70 = arith.constant 0 : index
    %71 = vector.load %arg15[%c16_69, %c0_70] : memref<112x128xf32, #tpu.memory_space<vmem>>, vector<80x128xf32>
    %72 = arith.truncf %71 : vector<80x128xf32> to vector<80x128xbf16>
    %c2_71 = arith.constant 2 : index
    %c0_72 = arith.constant 0 : index
    %c0_73 = arith.constant 0 : index
    %73 = vector.load %arg4[%c2_71, %c0_72, %c0_73] : memref<5x128x256xbf16, #tpu.memory_space<vmem>>, vector<1x128x256xbf16>
    %74 = vector.shape_cast %73 : vector<1x128x256xbf16> to vector<128x256xbf16>
    %cst_74 = arith.constant dense<0.000000e+00> : vector<80x256xf32>
    %75 = tpu.matmul %72, %74, %cst_74 {dimension_numbers = #tpu.dot_dimension_numbers<[1], [0], [0], [1], [0, 0, 1, 1], [], []>} : vector<80x128xbf16>, vector<128x256xbf16>, vector<80x256xf32> -> vector<80x256xf32>
    %c0_75 = arith.constant 0 : index
    %c0_76 = arith.constant 0 : index
    %76 = vector.load %arg14[%c0_75, %c0_76] : memref<80x256xf32, #tpu.memory_space<vmem>>, vector<80x256xf32>
    %77 = arith.addf %76, %75 : vector<80x256xf32>
    %c0_77 = arith.constant 0 : index
    %c0_78 = arith.constant 0 : index
    %78 = vector.load %arg14[%c0_77, %c0_78] : memref<80x256xf32, #tpu.memory_space<vmem>>, vector<80x256xf32>
    tpu.vector_store %arg14[%c0_77, %c0_78], %77 {strides = array<i32>} : memref<80x256xf32, #tpu.memory_space<vmem>>, vector<80x256xf32>,
    %c24_79 = arith.constant 24 : index
    %c0_80 = arith.constant 0 : index
    %79 = vector.load %arg15[%c24_79, %c0_80] : memref<112x128xf32, #tpu.memory_space<vmem>>, vector<80x128xf32>
    %80 = arith.truncf %79 : vector<80x128xf32> to vector<80x128xbf16>
    %c3_81 = arith.constant 3 : index
    %c0_82 = arith.constant 0 : index
    %c0_83 = arith.constant 0 : index
    %81 = vector.load %arg4[%c3_81, %c0_82, %c0_83] : memref<5x128x256xbf16, #tpu.memory_space<vmem>>, vector<1x128x256xbf16>
    %82 = vector.shape_cast %81 : vector<1x128x256xbf16> to vector<128x256xbf16>
    %cst_84 = arith.constant dense<0.000000e+00> : vector<80x256xf32>
    %83 = tpu.matmul %80, %82, %cst_84 {dimension_numbers = #tpu.dot_dimension_numbers<[1], [0], [0], [1], [0, 0, 1, 1], [], []>} : vector<80x128xbf16>, vector<128x256xbf16>, vector<80x256xf32> -> vector<80x256xf32>
    %c0_85 = arith.constant 0 : index
    %c0_86 = arith.constant 0 : index
    %84 = vector.load %arg14[%c0_85, %c0_86] : memref<80x256xf32, #tpu.memory_space<vmem>>, vector<80x256xf32>
    %85 = arith.addf %84, %83 : vector<80x256xf32>
    %c0_87 = arith.constant 0 : index
    %c0_88 = arith.constant 0 : index
    %86 = vector.load %arg14[%c0_87, %c0_88] : memref<80x256xf32, #tpu.memory_space<vmem>>, vector<80x256xf32>
    tpu.vector_store %arg14[%c0_87, %c0_88], %85 {strides = array<i32>} : memref<80x256xf32, #tpu.memory_space<vmem>>, vector<80x256xf32>,
    %c32_89 = arith.constant 32 : index
    %c0_90 = arith.constant 0 : index
    %87 = vector.load %arg15[%c32_89, %c0_90] : memref<112x128xf32, #tpu.memory_space<vmem>>, vector<80x128xf32>
    %88 = arith.truncf %87 : vector<80x128xf32> to vector<80x128xbf16>
    %c4_91 = arith.constant 4 : index
    %c0_92 = arith.constant 0 : index
    %c0_93 = arith.constant 0 : index
    %89 = vector.load %arg4[%c4_91, %c0_92, %c0_93] : memref<5x128x256xbf16, #tpu.memory_space<vmem>>, vector<1x128x256xbf16>
    %90 = vector.shape_cast %89 : vector<1x128x256xbf16> to vector<128x256xbf16>
    %cst_94 = arith.constant dense<0.000000e+00> : vector<80x256xf32>
    %91 = tpu.matmul %88, %90, %cst_94 {dimension_numbers = #tpu.dot_dimension_numbers<[1], [0], [0], [1], [0, 0, 1, 1], [], []>} : vector<80x128xbf16>, vector<128x256xbf16>, vector<80x256xf32> -> vector<80x256xf32>
    %c0_95 = arith.constant 0 : index
    %c0_96 = arith.constant 0 : index
    %92 = vector.load %arg14[%c0_95, %c0_96] : memref<80x256xf32, #tpu.memory_space<vmem>>, vector<80x256xf32>
    %93 = arith.addf %92, %91 : vector<80x256xf32>
    %c0_97 = arith.constant 0 : index
    %c0_98 = arith.constant 0 : index
    %94 = vector.load %arg14[%c0_97, %c0_98] : memref<80x256xf32, #tpu.memory_space<vmem>>, vector<80x256xf32>
    tpu.vector_store %arg14[%c0_97, %c0_98], %93 {strides = array<i32>} : memref<80x256xf32, #tpu.memory_space<vmem>>, vector<80x256xf32>,
    %c0_99 = arith.constant 0 : index
    %c0_100 = arith.constant 0 : index
    %95 = vector.load %arg14[%c0_99, %c0_100] : memref<80x256xf32, #tpu.memory_space<vmem>>, vector<80x128xf32>
    %c0_101 = arith.constant 0 : index
    %c128_102 = arith.constant 128 : index
    %96 = vector.load %arg14[%c0_101, %c128_102] : memref<80x256xf32, #tpu.memory_space<vmem>>, vector<80x128xf32>
    %97 = arith.maximumf %95, %96 : vector<80x128xf32>
    %98 = vector.shape_cast %97 : vector<80x128xf32> to vector<5x16x128xf32>
    %99 = vector.extract_strided_slice %98 {offsets = [0, 0, 0], sizes = [5, 8, 128], strides = [1, 1, 1]} : vector<5x16x128xf32> to vector<5x8x128xf32>
    %100 = vector.extract_strided_slice %98 {offsets = [0, 8, 0], sizes = [5, 8, 128], strides = [1, 1, 1]} : vector<5x16x128xf32> to vector<5x8x128xf32>
    %101 = arith.maximumf %99, %100 : vector<5x8x128xf32>
    %102 = vector.shape_cast %101 : vector<5x8x128xf32> to vector<40x128xf32>
    %c0_103 = arith.constant 0 : index
    %c0_104 = arith.constant 0 : index
    %103 = vector.load %arg5[%c0_103, %c0_104] : memref<1x128xf32, #tpu.memory_space<vmem>>, vector<1x128xf32>
    %104 = vector.broadcast %103 : vector<1x128xf32> to vector<40x128xf32>
    %105 = arith.addf %102, %104 : vector<40x128xf32>
    %cst_105 = arith.constant 0.000000e+00 : f32
    %106 = vector.broadcast %cst_105 : f32 to vector<40x128xf32>
    %107 = arith.maximumf %105, %106 : vector<40x128xf32>
    %108 = vector.extract_strided_slice %107 {offsets = [0, 0], sizes = [8, 128], strides = [1, 1]} : vector<40x128xf32> to vector<8x128xf32>
    %109 = vector.extract_strided_slice %107 {offsets = [8, 0], sizes = [8, 128], strides = [1, 1]} : vector<40x128xf32> to vector<8x128xf32>
    %110 = vector.extract_strided_slice %107 {offsets = [16, 0], sizes = [8, 128], strides = [1, 1]} : vector<40x128xf32> to vector<8x128xf32>
    %111 = vector.extract_strided_slice %107 {offsets = [24, 0], sizes = [8, 128], strides = [1, 1]} : vector<40x128xf32> to vector<8x128xf32>
    %112 = vector.extract_strided_slice %107 {offsets = [32, 0], sizes = [8, 128], strides = [1, 1]} : vector<40x128xf32> to vector<8x128xf32>
    %113 = tpu.concatenate %108, %109, %110, %111, %112 in 1 : vector<8x128xf32>, vector<8x128xf32>, vector<8x128xf32>, vector<8x128xf32>, vector<8x128xf32> -> vector<8x640xf32>
    %114 = arith.truncf %113 : vector<8x640xf32> to vector<8x640xbf16>
    %c0_106 = arith.constant 0 : index
    %c0_107 = arith.constant 0 : index
    %115 = vector.load %arg6[%c0_106, %c0_107] : memref<640x128xbf16, #tpu.memory_space<vmem>>, vector<640x128xbf16>
    %cst_108 = arith.constant dense<0.000000e+00> : vector<8x128xf32>
    %116 = tpu.matmul %114, %115, %cst_108 {dimension_numbers = #tpu.dot_dimension_numbers<[1], [0], [0], [1], [0, 0, 1, 1], [], []>} : vector<8x640xbf16>, vector<640x128xbf16>, vector<8x128xf32> -> vector<8x128xf32>
    %c0_109 = arith.constant 0 : index
    %c0_110 = arith.constant 0 : index
    %117 = vector.load %arg7[%c0_109, %c0_110] : memref<1x128xf32, #tpu.memory_space<vmem>>, vector<1x128xf32>
    %118 = vector.broadcast %117 : vector<1x128xf32> to vector<8x128xf32>
    %119 = arith.addf %116, %118 : vector<8x128xf32>
    %cst_111 = arith.constant 0.000000e+00 : f32
    %120 = vector.broadcast %cst_111 : f32 to vector<8x128xf32>
    %121 = arith.maximumf %119, %120 : vector<8x128xf32>
    %122 = arith.truncf %121 : vector<8x128xf32> to vector<8x128xbf16>
    %c0_112 = arith.constant 0 : index
    %c0_113 = arith.constant 0 : index
    %123 = vector.load %arg8[%c0_112, %c0_113] : memref<128x128xbf16, #tpu.memory_space<vmem>>, vector<128x128xbf16>
    %cst_114 = arith.constant dense<0.000000e+00> : vector<8x128xf32>
    %124 = tpu.matmul %122, %123, %cst_114 {dimension_numbers = #tpu.dot_dimension_numbers<[1], [0], [0], [1], [0, 0, 1, 1], [], []>} : vector<8x128xbf16>, vector<128x128xbf16>, vector<8x128xf32> -> vector<8x128xf32>
    %c0_115 = arith.constant 0 : index
    %c0_116 = arith.constant 0 : index
    %125 = vector.load %arg9[%c0_115, %c0_116] : memref<1x128xf32, #tpu.memory_space<vmem>>, vector<1x128xf32>
    %126 = vector.broadcast %125 : vector<1x128xf32> to vector<8x128xf32>
    %127 = arith.addf %124, %126 : vector<8x128xf32>
    %cst_117 = arith.constant 0.000000e+00 : f32
    %128 = vector.broadcast %cst_117 : f32 to vector<8x128xf32>
    %129 = arith.maximumf %127, %128 : vector<8x128xf32>
    %130 = arith.truncf %129 : vector<8x128xf32> to vector<8x128xbf16>
    %c0_118 = arith.constant 0 : index
    %c0_119 = arith.constant 0 : index
    %131 = vector.load %arg10[%c0_118, %c0_119] : memref<128x128xbf16, #tpu.memory_space<vmem>>, vector<128x128xbf16>
    %cst_120 = arith.constant dense<0.000000e+00> : vector<8x128xf32>
    %132 = tpu.matmul %130, %131, %cst_120 {dimension_numbers = #tpu.dot_dimension_numbers<[1], [0], [0], [1], [0, 0, 1, 1], [], []>} : vector<8x128xbf16>, vector<128x128xbf16>, vector<8x128xf32> -> vector<8x128xf32>
    %c0_121 = arith.constant 0 : index
    %c0_122 = arith.constant 0 : index
    %133 = vector.load %arg11[%c0_121, %c0_122] : memref<1x128xf32, #tpu.memory_space<vmem>>, vector<1x128xf32>
    %134 = vector.broadcast %133 : vector<1x128xf32> to vector<8x128xf32>
    %135 = arith.addf %132, %134 : vector<8x128xf32>
    %c0_123 = arith.constant 0 : index
    %c0_124 = arith.constant 0 : index
    %136 = vector.load %arg12[%c0_123, %c0_124] : memref<8x128xf32, #tpu.memory_space<vmem>>, vector<8x128xf32>
    tpu.vector_store %arg12[%c0_123, %c0_124], %135 {strides = array<i32>} : memref<8x128xf32, #tpu.memory_space<vmem>>, vector<8x128xf32>,
    return
  }
  func.func @transform_0(%arg0: i32) -> (i32, i32, i32) {
    %c0_i32 = arith.constant 0 : i32
    %c0_i32_0 = arith.constant 0 : i32
    %c0_i32_1 = arith.constant 0 : i32
    return %arg0, %c0_i32, %c0_i32_0 : i32, i32, i32
  }
  func.func @transform_1(%arg0: i32) -> (i32, i32, i32) {
    %c0_i32 = arith.constant 0 : i32
    %c0_i32_0 = arith.constant 0 : i32
    %c0_i32_1 = arith.constant 0 : i32
    %c0_i32_2 = arith.constant 0 : i32
    return %c0_i32, %c0_i32_0, %c0_i32_1 : i32, i32, i32
  }
  func.func @transform_2(%arg0: i32) -> (i32, i32) {
    %c0_i32 = arith.constant 0 : i32
    %c0_i32_0 = arith.constant 0 : i32
    %c0_i32_1 = arith.constant 0 : i32
    return %c0_i32, %c0_i32_0 : i32, i32
  }
  func.func @transform_3(%arg0: i32) -> (i32, i32, i32) {
    %c0_i32 = arith.constant 0 : i32
    %c0_i32_0 = arith.constant 0 : i32
    %c0_i32_1 = arith.constant 0 : i32
    %c0_i32_2 = arith.constant 0 : i32
    return %c0_i32, %c0_i32_0, %c0_i32_1 : i32, i32, i32
  }
  func.func @transform_4(%arg0: i32) -> (i32, i32) {
    %c0_i32 = arith.constant 0 : i32
    %c0_i32_0 = arith.constant 0 : i32
    %c0_i32_1 = arith.constant 0 : i32
    return %c0_i32, %c0_i32_0 : i32, i32
  }
  func.func @transform_5(%arg0: i32) -> (i32, i32) {
    %c0_i32 = arith.constant 0 : i32
    %c0_i32_0 = arith.constant 0 : i32
    %c0_i32_1 = arith.constant 0 : i32
    return %c0_i32, %c0_i32_0 : i32, i32
  }
  func.func @transform_6(%arg0: i32) -> (i32, i32) {
    %c0_i32 = arith.constant 0 : i32
    %c0_i32_0 = arith.constant 0 : i32
    %c0_i32_1 = arith.constant 0 : i32
    return %c0_i32, %c0_i32_0 : i32, i32
  }
  func.func @transform_7(%arg0: i32) -> (i32, i32) {
    %c0_i32 = arith.constant 0 : i32
    %c0_i32_0 = arith.constant 0 : i32
    %c0_i32_1 = arith.constant 0 : i32
    return %c0_i32, %c0_i32_0 : i32, i32
  }
  func.func @transform_8(%arg0: i32) -> (i32, i32) {
    %c0_i32 = arith.constant 0 : i32
    %c0_i32_0 = arith.constant 0 : i32
    %c0_i32_1 = arith.constant 0 : i32
    return %c0_i32, %c0_i32_0 : i32, i32
  }
  func.func @transform_9(%arg0: i32) -> (i32, i32) {
    %c0_i32 = arith.constant 0 : i32
    %c0_i32_0 = arith.constant 0 : i32
    %c0_i32_1 = arith.constant 0 : i32
    return %c0_i32, %c0_i32_0 : i32, i32
  }
  func.func @transform_10(%arg0: i32) -> (i32, i32) {
    %c0_i32 = arith.constant 0 : i32
    %c0_i32_0 = arith.constant 0 : i32
    %c0_i32_1 = arith.constant 0 : i32
    return %c0_i32, %c0_i32_0 : i32, i32
  }
  func.func @transform_11(%arg0: i32) -> (i32, i32) {
    %c0_i32 = arith.constant 0 : i32
    %c0_i32_0 = arith.constant 0 : i32
    return %arg0, %c0_i32 : i32, i32
  }
}

</mosaic_0001>

<llo_original>
// kernel: net_forward.1
$region0: #{net_forward.1}
  #allocation0 [shape = 'u32[]', space=smem, size = 0x4, offset = 0x4, fixed_abs, tag = 'smem constant byte address 0x4 - core index']
  #allocation1 [shape = 'u32[72,128]{1,0:T(1,128)}', space=vmem, size = 0x9000, scoped, tag = 'internal scratch']
  #allocation2 [shape = 'f32[224,256]{1,0:T(8,128)}', space=vmem, size = 0x38000, scoped, tag = 'scratch operand']
  #allocation3 [shape = 'f32[80,256]{1,0:T(8,128)}', space=vmem, size = 0x14000, scoped, tag = 'scratch operand']
  #allocation4 [shape = 'f32[112,128]{1,0:T(8,128)}', space=vmem, size = 0xe000, scoped, tag = 'scratch operand']
  %s0 = inlined_call_operand.vmem [shape: f32[2,256,128], index: 0, kind: input, shape index: {}]
  %s1 = inlined_call_operand.vmem [shape: bf16[5,128,256], index: 1, kind: input, shape index: {}]
  %s2 = inlined_call_operand.vmem [shape: f32[1,128], index: 2, kind: input, shape index: {}]
  %s3 = inlined_call_operand.vmem [shape: bf16[5,128,256], index: 3, kind: input, shape index: {}]
  %s4 = inlined_call_operand.vmem [shape: f32[1,128], index: 4, kind: input, shape index: {}]
  %s5 = inlined_call_operand.vmem [shape: bf16[640,128], index: 5, kind: input, shape index: {}]
  %s6 = inlined_call_operand.vmem [shape: f32[1,128], index: 6, kind: input, shape index: {}]
  %s7 = inlined_call_operand.vmem [shape: bf16[128,128], index: 7, kind: input, shape index: {}]
  %s8 = inlined_call_operand.vmem [shape: f32[1,128], index: 8, kind: input, shape index: {}]
  %s9 = inlined_call_operand.vmem [shape: bf16[128,128], index: 9, kind: input, shape index: {}]
  %s10 = inlined_call_operand.vmem [shape: f32[1,128], index: 10, kind: input, shape index: {}]
  %s11 = inlined_call_operand.vmem [shape: f32[16,128], index: 11, kind: output, shape index: {}]
  %s12 = sld [smem:[#allocation0]]
  $region77: #{net_forward.1} parent=0
    _
  %s14 = ssub.s32 1, %s12
  %s15 = scalar_select 0, %s14, %s12
  loop: start=0, step=1, limit=4
  $region2: #{net_forward.1} parent=0 // loop_pre_header
    _
  $region3: #{net_forward.1} parent=0 // loop_header
    %s17 = sphi 0, %s21
    %p18 = scmp.ge.s32.totalorder %s17, 4
    %s27 = sphi 0, %s29
    %s30 = sphi 0, %s27
    %s31 = sphi 0, %s30
    %s47 = sphi 0, %s31
    %s51 = sphi 0, %s51
    %s53 = sphi 0, %s51
    %s54 = sphi 0, %s53
    %s68 = sphi 0, %s54
    %s72 = sphi 0, %s72
    %s74 = sphi 0, %s72
    %s75 = sphi 0, %s74
    %s89 = sphi 0, %s75
    %s93 = sphi 0, %s93
    %s95 = sphi 0, %s93
    %s96 = sphi 0, %s95
    %s110 = sphi 0, %s96
    %s114 = sphi 0, %s114
    %s116 = sphi 0, %s114
    %s117 = sphi 0, %s116
    %s131 = sphi 0, %s117
    %s135 = sphi 0, %s135
    %s137 = sphi 0, %s135
    %s138 = sphi 0, %s137
    %s152 = sphi 0, %s138
    %s156 = sphi 0, %s156
    %s158 = sphi 0, %s156
    %s159 = sphi 0, %s158
    %s173 = sphi 0, %s159
    %s177 = sphi 0, %s177
    %s179 = sphi 0, %s177
    %s180 = sphi 0, %s179
    %s194 = sphi 0, %s180
    %s198 = sphi 0, %s198
    %s200 = sphi 0, %s198
    %s201 = sphi 0, %s200
    %s215 = sphi 0, %s201
    %s219 = sphi 0, %s219
    %s221 = sphi 0, %s219
    %s222 = sphi 0, %s221
    %s236 = sphi 0, %s222
    %s240 = sphi 0, %s240
    %s242 = sphi 0, %s240
    %s243 = sphi 0, %s242
    %s257 = sphi 0, %s243
    %s263 = sphi 0, %s265
    %s266 = sphi 0, %s263
    %s267 = sphi 0, %s266
    %s283 = sphi 0, %s267
  $region4: #{net_forward.1} parent=0 // loop_header_branch
    %20 = sbr.rel (%p18) target = $region8
  $region5: #{net_forward.1} parent=0 // loop_body
    %s22 = ssub.s32 %s17, 1
    %s23 = ssub.s32 %s17, 2
    %s24 = sadd.s32 %s17, 1
    %s25 = ssub.s32 %s17, %s24
    %p26 = scmp.eq.s32.totalorder %s25, 0
    %s28 = sadd.s32 %s27, 1
    %s29 = scalar_select %p26, %s27, %s28
    %p32 = pneg %p26
    %p33 = scmp.eq.s32.totalorder %s17, 1
    %p34 = por %p32, %p33
    %p35 = scmp.ne.s32.totalorder %s27, %s30
    %p36 = scmp.eq.s32.totalorder %s17, 0
    %p37 = por %p35, %p36
    %p38 = scmp.ne.s32.totalorder %s27, %s30
    %p39 = scmp.eq.s32.totalorder %s22, 1
    %p40 = por %p38, %p39
    %p41 = scmp.ne.s32.totalorder %s30, %s31
    %p42 = scmp.eq.s32.totalorder %s22, 0
    %p43 = por %p41, %p42
    %p44 = scmp.ne.s32.totalorder %s30, %s31
    %p45 = scmp.eq.s32.totalorder %s23, 1
    %p46 = por %p44, %p45
    %p48 = scmp.ne.s32.totalorder %s31, %s47
    %p49 = scmp.eq.s32.totalorder %s23, 0
    %p50 = por %p48, %p49
    %s52 = sadd.s32 %s51, 1
    %p55 = scmp.eq.s32.totalorder %s17, 1
    %p56 = scmp.ne.s32.totalorder %s51, %s53
    %p57 = scmp.eq.s32.totalorder %s17, 0
    %p58 = por %p56, %p57
    %p59 = scmp.ne.s32.totalorder %s51, %s53
    %p60 = scmp.eq.s32.totalorder %s22, 1
    %p61 = por %p59, %p60
    %p62 = scmp.ne.s32.totalorder %s53, %s54
    %p63 = scmp.eq.s32.totalorder %s22, 0
    %p64 = por %p62, %p63
    %p65 = scmp.ne.s32.totalorder %s53, %s54
    %p66 = scmp.eq.s32.totalorder %s23, 1
    %p67 = por %p65, %p66
    %p69 = scmp.ne.s32.totalorder %s54, %s68
    %p70 = scmp.eq.s32.totalorder %s23, 0
    %p71 = por %p69, %p70
    %s73 = sadd.s32 %s72, 1
    %p76 = scmp.eq.s32.totalorder %s17, 1
    %p77 = scmp.ne.s32.totalorder %s72, %s74
    %p78 = scmp.eq.s32.totalorder %s17, 0
    %p79 = por %p77, %p78
    %p80 = scmp.ne.s32.totalorder %s72, %s74
    %p81 = scmp.eq.s32.totalorder %s22, 1
    %p82 = por %p80, %p81
    %p83 = scmp.ne.s32.totalorder %s74, %s75
    %p84 = scmp.eq.s32.totalorder %s22, 0
    %p85 = por %p83, %p84
    %p86 = scmp.ne.s32.totalorder %s74, %s75
    %p87 = scmp.eq.s32.totalorder %s23, 1
    %p88 = por %p86, %p87
    %p90 = scmp.ne.s32.totalorder %s75, %s89
    %p91 = scmp.eq.s32.totalorder %s23, 0
    %p92 = por %p90, %p91
    %s94 = sadd.s32 %s93, 1
    %p97 = scmp.eq.s32.totalorder %s17, 1
    %p98 = scmp.ne.s32.totalorder %s93, %s95
    %p99 = scmp.eq.s32.totalorder %s17, 0
    %p100 = por %p98, %p99
    %p101 = scmp.ne.s32.totalorder %s93, %s95
    %p102 = scmp.eq.s32.totalorder %s22, 1
    %p103 = por %p101, %p102
    %p104 = scmp.ne.s32.totalorder %s95, %s96
    %p105 = scmp.eq.s32.totalorder %s22, 0
    %p106 = por %p104, %p105
    %p107 = scmp.ne.s32.totalorder %s95, %s96
    %p108 = scmp.eq.s32.totalorder %s23, 1
    %p109 = por %p107, %p108
    %p111 = scmp.ne.s32.totalorder %s96, %s110
    %p112 = scmp.eq.s32.totalorder %s23, 0
    %p113 = por %p111, %p112
    %s115 = sadd.s32 %s114, 1
    %p118 = scmp.eq.s32.totalorder %s17, 1
    %p119 = scmp.ne.s32.totalorder %s114, %s116
    %p120 = scmp.eq.s32.totalorder %s17, 0
    %p121 = por %p119, %p120
    %p122 = scmp.ne.s32.totalorder %s114, %s116
    %p123 = scmp.eq.s32.totalorder %s22, 1
    %p124 = por %p122, %p123
    %p125 = scmp.ne.s32.totalorder %s116, %s117
    %p126 = scmp.eq.s32.totalorder %s22, 0
    %p127 = por %p125, %p126
    %p128 = scmp.ne.s32.totalorder %s116, %s117
    %p129 = scmp.eq.s32.totalorder %s23, 1
    %p130 = por %p128, %p129
    %p132 = scmp.ne.s32.totalorder %s117, %s131
    %p133 = scmp.eq.s32.totalorder %s23, 0
    %p134 = por %p132, %p133
    %s136 = sadd.s32 %s135, 1
    %p139 = scmp.eq.s32.totalorder %s17, 1
    %p140 = scmp.ne.s32.totalorder %s135, %s137
    %p141 = scmp.eq.s32.totalorder %s17, 0
    %p142 = por %p140, %p141
    %p143 = scmp.ne.s32.totalorder %s135, %s137
    %p144 = scmp.eq.s32.totalorder %s22, 1
    %p145 = por %p143, %p144
    %p146 = scmp.ne.s32.totalorder %s137, %s138
    %p147 = scmp.eq.s32.totalorder %s22, 0
    %p148 = por %p146, %p147
    %p149 = scmp.ne.s32.totalorder %s137, %s138
    %p150 = scmp.eq.s32.totalorder %s23, 1
    %p151 = por %p149, %p150
    %p153 = scmp.ne.s32.totalorder %s138, %s152
    %p154 = scmp.eq.s32.totalorder %s23, 0
    %p155 = por %p153, %p154
    %s157 = sadd.s32 %s156, 1
    %p160 = scmp.eq.s32.totalorder %s17, 1
    %p161 = scmp.ne.s32.totalorder %s156, %s158
    %p162 = scmp.eq.s32.totalorder %s17, 0
    %p163 = por %p161, %p162
    %p164 = scmp.ne.s32.totalorder %s156, %s158
    %p165 = scmp.eq.s32.totalorder %s22, 1
    %p166 = por %p164, %p165
    %p167 = scmp.ne.s32.totalorder %s158, %s159
    %p168 = scmp.eq.s32.totalorder %s22, 0
    %p169 = por %p167, %p168
    %p170 = scmp.ne.s32.totalorder %s158, %s159
    %p171 = scmp.eq.s32.totalorder %s23, 1
    %p172 = por %p170, %p171
    %p174 = scmp.ne.s32.totalorder %s159, %s173
    %p175 = scmp.eq.s32.totalorder %s23, 0
    %p176 = por %p174, %p175
    %s178 = sadd.s32 %s177, 1
    %p181 = scmp.eq.s32.totalorder %s17, 1
    %p182 = scmp.ne.s32.totalorder %s177, %s179
    %p183 = scmp.eq.s32.totalorder %s17, 0
    %p184 = por %p182, %p183
    %p185 = scmp.ne.s32.totalorder %s177, %s179
    %p186 = scmp.eq.s32.totalorder %s22, 1
    %p187 = por %p185, %p186
    %p188 = scmp.ne.s32.totalorder %s179, %s180
    %p189 = scmp.eq.s32.totalorder %s22, 0
    %p190 = por %p188, %p189
    %p191 = scmp.ne.s32.totalorder %s179, %s180
    %p192 = scmp.eq.s32.totalorder %s23, 1
    %p193 = por %p191, %p192
    %p195 = scmp.ne.s32.totalorder %s180, %s194
    %p196 = scmp.eq.s32.totalorder %s23, 0
    %p197 = por %p195, %p196
    %s199 = sadd.s32 %s198, 1
    %p202 = scmp.eq.s32.totalorder %s17, 1
    %p203 = scmp.ne.s32.totalorder %s198, %s200
    %p204 = scmp.eq.s32.totalorder %s17, 0
    %p205 = por %p203, %p204
    %p206 = scmp.ne.s32.totalorder %s198, %s200
    %p207 = scmp.eq.s32.totalorder %s22, 1
    %p208 = por %p206, %p207
    %p209 = scmp.ne.s32.totalorder %s200, %s201
    %p210 = scmp.eq.s32.totalorder %s22, 0
    %p211 = por %p209, %p210
    %p212 = scmp.ne.s32.totalorder %s200, %s201
    %p213 = scmp.eq.s32.totalorder %s23, 1
    %p214 = por %p212, %p213
    %p216 = scmp.ne.s32.totalorder %s201, %s215
    %p217 = scmp.eq.s32.totalorder %s23, 0
    %p218 = por %p216, %p217
    %s220 = sadd.s32 %s219, 1
    %p223 = scmp.eq.s32.totalorder %s17, 1
    %p224 = scmp.ne.s32.totalorder %s219, %s221
    %p225 = scmp.eq.s32.totalorder %s17, 0
    %p226 = por %p224, %p225
    %p227 = scmp.ne.s32.totalorder %s219, %s221
    %p228 = scmp.eq.s32.totalorder %s22, 1
    %p229 = por %p227, %p228
    %p230 = scmp.ne.s32.totalorder %s221, %s222
    %p231 = scmp.eq.s32.totalorder %s22, 0
    %p232 = por %p230, %p231
    %p233 = scmp.ne.s32.totalorder %s221, %s222
    %p234 = scmp.eq.s32.totalorder %s23, 1
    %p235 = por %p233, %p234
    %p237 = scmp.ne.s32.totalorder %s222, %s236
    %p238 = scmp.eq.s32.totalorder %s23, 0
    %p239 = por %p237, %p238
    %s241 = sadd.s32 %s240, 1
    %p244 = scmp.eq.s32.totalorder %s17, 1
    %p245 = scmp.ne.s32.totalorder %s240, %s242
    %p246 = scmp.eq.s32.totalorder %s17, 0
    %p247 = por %p245, %p246
    %p248 = scmp.ne.s32.totalorder %s240, %s242
    %p249 = scmp.eq.s32.totalorder %s22, 1
    %p250 = por %p248, %p249
    %p251 = scmp.ne.s32.totalorder %s242, %s243
    %p252 = scmp.eq.s32.totalorder %s22, 0
    %p253 = por %p251, %p252
    %p254 = scmp.ne.s32.totalorder %s242, %s243
    %p255 = scmp.eq.s32.totalorder %s23, 1
    %p256 = por %p254, %p255
    %p258 = scmp.ne.s32.totalorder %s243, %s257
    %p259 = scmp.eq.s32.totalorder %s23, 0
    %p260 = por %p258, %p259
    %s261 = ssub.s32 %s17, %s24
    %p262 = scmp.eq.s32.totalorder %s261, 0
    %s264 = sadd.s32 %s263, 1
    %s265 = scalar_select %p262, %s263, %s264
    %p268 = pneg %p262
    %p269 = scmp.eq.s32.totalorder %s17, 1
    %p270 = por %p268, %p269
    %p271 = scmp.ne.s32.totalorder %s263, %s266
    %p272 = scmp.eq.s32.totalorder %s17, 0
    %p273 = por %p271, %p272
    %p274 = scmp.ne.s32.totalorder %s263, %s266
    %p275 = scmp.eq.s32.totalorder %s22, 1
    %p276 = por %p274, %p275
    %p277 = scmp.ne.s32.totalorder %s266, %s267
    %p278 = scmp.eq.s32.totalorder %s22, 0
    %p279 = por %p277, %p278
    %p280 = scmp.ne.s32.totalorder %s266, %s267
    %p281 = scmp.eq.s32.totalorder %s23, 1
    %p282 = por %p280, %p281
    %p284 = scmp.ne.s32.totalorder %s267, %s283
    %p285 = scmp.eq.s32.totalorder %s23, 0
    %p286 = por %p284, %p285
    %p287 = scmp.le.s32.totalorder 1, %s17
    %p288 = scmp.lt.s32.totalorder %s17, 3
    %p289 = pnand %p287, %p288
    %p290 = pneg %p289
    // Predicated region
    $region9: #{net_forward.1} parent=5 // pred_check
      _
    $region10: #{net_forward.1} parent=5 // pred_check_branch
      %292 = sbr.rel (%p289) target = $region12
    $region11: #{net_forward.1} parent=5 // pred_region
      %s293 = ssub.s32 %s17, 1
      // Predicated region
      $region13: #{net_forward.1} parent=11 // pred_check
        %p294 = pneg %p64
      $region14: #{net_forward.1} parent=11 // pred_check_branch
        %296 = sbr.rel (%p294) target = $region16
      $region15: #{net_forward.1} parent=11 // pred_region
        _
      $region16: #{net_forward.1} parent=11 // pred_fallthru
        _
      // Predicated region
      $region17: #{net_forward.1} parent=11 // pred_check
        %p297 = pneg %p85
      $region18: #{net_forward.1} parent=11 // pred_check_branch
        %299 = sbr.rel (%p297) target = $region20
      $region19: #{net_forward.1} parent=11 // pred_region
        _
      $region20: #{net_forward.1} parent=11 // pred_fallthru
        _
      // Predicated region
      $region21: #{net_forward.1} parent=11 // pred_check
        %p300 = pneg %p106
      $region22: #{net_forward.1} parent=11 // pred_check_branch
        %302 = sbr.rel (%p300) target = $region24
      $region23: #{net_forward.1} parent=11 // pred_region
        _
      $region24: #{net_forward.1} parent=11 // pred_fallthru
        _
      // Predicated region
      $region25: #{net_forward.1} parent=11 // pred_check
        %p303 = pneg %p127
      $region26: #{net_forward.1} parent=11 // pred_check_branch
        %305 = sbr.rel (%p303) target = $region28
      $region27: #{net_forward.1} parent=11 // pred_region
        _
      $region28: #{net_forward.1} parent=11 // pred_fallthru
        _
      // Predicated region
      $region29: #{net_forward.1} parent=11 // pred_check
        %p306 = pneg %p148
      $region30: #{net_forward.1} parent=11 // pred_check_branch
        %308 = sbr.rel (%p306) target = $region32
      $region31: #{net_forward.1} parent=11 // pred_region
        _
      $region32: #{net_forward.1} parent=11 // pred_fallthru
        _
      // Predicated region
      $region33: #{net_forward.1} parent=11 // pred_check
        %p309 = pneg %p169
      $region34: #{net_forward.1} parent=11 // pred_check_branch
        %311 = sbr.rel (%p309) target = $region36
      $region35: #{net_forward.1} parent=11 // pred_region
        _
      $region36: #{net_forward.1} parent=11 // pred_fallthru
        _
      // Predicated region
      $region37: #{net_forward.1} parent=11 // pred_check
        %p312 = pneg %p190
      $region38: #{net_forward.1} parent=11 // pred_check_branch
        %314 = sbr.rel (%p312) target = $region40
      $region39: #{net_forward.1} parent=11 // pred_region
        _
      $region40: #{net_forward.1} parent=11 // pred_fallthru
        _
      // Predicated region
      $region41: #{net_forward.1} parent=11 // pred_check
        %p315 = pneg %p211
      $region42: #{net_forward.1} parent=11 // pred_check_branch
        %317 = sbr.rel (%p315) target = $region44
      $region43: #{net_forward.1} parent=11 // pred_region
        _
      $region44: #{net_forward.1} parent=11 // pred_fallthru
        _
      // Predicated region
      $region45: #{net_forward.1} parent=11 // pred_check
        %p318 = pneg %p232
      $region46: #{net_forward.1} parent=11 // pred_check_branch
        %320 = sbr.rel (%p318) target = $region48
      $region47: #{net_forward.1} parent=11 // pred_region
        _
      $region48: #{net_forward.1} parent=11 // pred_fallthru
        _
      // Predicated region
      $region49: #{net_forward.1} parent=11 // pred_check
        %p321 = pneg %p253
      $region50: #{net_forward.1} parent=11 // pred_check_branch
        %323 = sbr.rel (%p321) target = $region52
      $region51: #{net_forward.1} parent=11 // pred_region
        _
      $region52: #{net_forward.1} parent=11 // pred_fallthru
        _
    $region12: #{net_forward.1} parent=5 // pred_fallthru
      _
    %p324 = scmp.lt.s32.totalorder %s17, 2
    // Predicated region
    $region53: #{net_forward.1} parent=5 // pred_check
      %p325 = pneg %p324
    $region54: #{net_forward.1} parent=5 // pred_check_branch
      %327 = sbr.rel (%p325) target = $region56
    $region55: #{net_forward.1} parent=5 // pred_region
      // Predicated region
      $region57: #{net_forward.1} parent=55 // pred_check
        %p328 = pneg %p37
      $region58: #{net_forward.1} parent=55 // pred_check_branch
        %330 = sbr.rel (%p328) target = $region60
      $region59: #{net_forward.1} parent=55 // pred_region
        %p331 = scmp.lt.s32.totalorder %s17, 1
        %s332 = scalar_select %p331, %s17, 1
        %s333 = smul.addr %s332, 32
        %s334 = smul.addr %s333, 8
        %s335 = scalar_lea.vmem %s0, %s334
      $region60: #{net_forward.1} parent=55 // pred_fallthru
        _
    $region56: #{net_forward.1} parent=5 // pred_fallthru
      _
    %p336 = scmp.le.s32.totalorder 1, %s17
    %p337 = scmp.lt.s32.totalorder %s17, 3
    %p338 = pnand %p336, %p337
    %p339 = pneg %p338
    // Predicated region
    $region61: #{net_forward.1} parent=5 // pred_check
      _
    $region62: #{net_forward.1} parent=5 // pred_check_branch
      %341 = sbr.rel (%p338) target = $region64
    $region63: #{net_forward.1} parent=5 // pred_region
      %s342 = ssub.s32 %s17, 1
      %p343 = scmp.lt.s32.totalorder %s22, 1
      %s344 = scalar_select %p343, %s22, 1
      %s345 = smul.addr %s344, 32
      %s346 = smul.addr %s345, 8
      %s347 = scalar_lea.vmem %s0, %s346
      %p348 = pneg %p43
      %p349 = pneg %p40
      %p350 = pneg %p64
      %p351 = pneg %p61
      %p352 = pneg %p85
      %p353 = pneg %p82
      %p354 = pneg %p106
      %p355 = pneg %p103
      %p356 = pneg %p127
      %p357 = pneg %p124
      %p358 = pneg %p148
      %p359 = pneg %p145
      %p360 = pneg %p169
      %p361 = pneg %p166
      %p362 = pneg %p190
      %p363 = pneg %p187
      %p364 = pneg %p211
      %p365 = pneg %p208
      %p366 = pneg %p232
      %p367 = pneg %p229
      %p368 = pneg %p253
      %p369 = pneg %p250
      %p370 = pneg %p279
      %p371 = pneg %p276
      %p372 = scmp.lt.s32.totalorder %s22, 1
      %s373 = scalar_select %p372, %s22, 1
      %s374 = smul.addr %s373, 8
      %s375 = scalar_lea.vmem %s11, %s374
      %p376 = scmp.lt.s32.totalorder %s22, 1
      %s377 = scalar_select %p376, %s22, 1
      %s378 = smul.addr %s377, 32
      %s379 = smul.addr %s378, 8
      %s380 = scalar_lea.vmem %s0, %s379
      %p381 = scmp.lt.s32.totalorder %s22, 1
      %s382 = scalar_select %p381, %s22, 1
      %s383 = smul.addr %s382, 8
      %s384 = scalar_lea.vmem %s11, %s383
      %v385 = vld [vmem:[%s380] sm:$0xff]
      %v386 = vld [vmem:[%s380 + $0x8] sm:$0xff]
      %v387 = vld [vmem:[%s380 + $0x10] sm:$0xff]
      %v388 = vld [vmem:[%s380 + $0x18] sm:$0xff]
      %v389 = vld [vmem:[%s380 + $0x20] sm:$0xff]
      %v390 = vld [vmem:[%s380 + $0x28] sm:$0xff]
      %v391 = vld [vmem:[%s380 + $0x30] sm:$0xff]
      %v392 = vld [vmem:[%s380 + $0x38] sm:$0xff]
      %v393 = vld [vmem:[%s380 + $0x40] sm:$0xff]
      %v394 = vld [vmem:[%s380 + $0x48] sm:$0xff]
      %v395 = vld [vmem:[%s380 + $0x50] sm:$0xff]
      %v396 = vld [vmem:[%s380 + $0x58] sm:$0xff]
      %v397 = vld [vmem:[%s380 + $0x60] sm:$0xff]
      %v398 = vld [vmem:[%s380 + $0x68] sm:$0xff]
      %v399 = vld [vmem:[%s380 + $0x70] sm:$0xff]
      %v400 = vld [vmem:[%s380 + $0x78] sm:$0xff]
      %v401 = vld [vmem:[%s380 + $0x80] sm:$0xff]
      %v402 = vld [vmem:[%s380 + $0x88] sm:$0xff]
      %v403 = vld [vmem:[%s380 + $0x90] sm:$0xff]
      %v404 = vld [vmem:[%s380 + $0x98] sm:$0xff]
      %v405 = vld [vmem:[%s380 + $0xa0] sm:$0xff]
      %v406 = vld [vmem:[%s380 + $0xa8] sm:$0xff]
      %v407 = vld [vmem:[%s380 + $0xb0] sm:$0xff]
      %v408 = vld [vmem:[%s380 + $0xb8] sm:$0xff]
      %v409 = vld [vmem:[%s380 + $0xc0] sm:$0xff]
      %v410 = vld [vmem:[%s380 + $0xc8] sm:$0xff]
      %v411 = vld [vmem:[%s380 + $0xd0] sm:$0xff]
      %v412 = vld [vmem:[%s380 + $0xd8] sm:$0xff]
      %v413 = vpack.c.bf16 %v386, %v385
      %v414 = vpack.c.bf16 %v388, %v387
      %v415 = vpack.c.bf16 %v390, %v389
      %v416 = vpack.c.bf16 %v392, %v391
      %v417 = vpack.c.bf16 %v394, %v393
      %v418 = vpack.c.bf16 %v396, %v395
      %v419 = vpack.c.bf16 %v398, %v397
      %v420 = vpack.c.bf16 %v400, %v399
      %v421 = vpack.c.bf16 %v402, %v401
      %v422 = vpack.c.bf16 %v404, %v403
      %v423 = vpack.c.bf16 %v406, %v405
      %v424 = vpack.c.bf16 %v408, %v407
      %v425 = vpack.c.bf16 %v410, %v409
      %v426 = vpack.c.bf16 %v412, %v411
      %v427 = vld [vmem:[%s1] sm:$0xff]
      %v428 = vld [vmem:[%s1 + $0x8] sm:$0xff]
      %v429 = vld [vmem:[%s1 + $0x10] sm:$0xff]
      %v430 = vld [vmem:[%s1 + $0x18] sm:$0xff]
      %v431 = vld [vmem:[%s1 + $0x20] sm:$0xff]
      %v432 = vld [vmem:[%s1 + $0x28] sm:$0xff]
      %v433 = vld [vmem:[%s1 + $0x30] sm:$0xff]
      %v434 = vld [vmem:[%s1 + $0x38] sm:$0xff]
      %v435 = vld [vmem:[%s1 + $0x40] sm:$0xff]
      %v436 = vld [vmem:[%s1 + $0x48] sm:$0xff]
      %v437 = vld [vmem:[%s1 + $0x50] sm:$0xff]
      %v438 = vld [vmem:[%s1 + $0x58] sm:$0xff]
      %v439 = vld [vmem:[%s1 + $0x60] sm:$0xff]
      %v440 = vld [vmem:[%s1 + $0x68] sm:$0xff]
      %v441 = vld [vmem:[%s1 + $0x70] sm:$0xff]
      %v442 = vld [vmem:[%s1 + $0x78] sm:$0xff]
      %v459 = vunpack.c.l.b16 %v427
      %v460 = vunpack.c.h.b16 %v427
      %v461 = vunpack.c.l.b16 %v428
      %v462 = vunpack.c.h.b16 %v428
      %v463 = vunpack.c.l.b16 %v429
      %v464 = vunpack.c.h.b16 %v429
      %v465 = vunpack.c.l.b16 %v430
      %v466 = vunpack.c.h.b16 %v430
      %v467 = vunpack.c.l.b16 %v431
      %v468 = vunpack.c.h.b16 %v431
      %v469 = vunpack.c.l.b16 %v432
      %v470 = vunpack.c.h.b16 %v432
      %v471 = vunpack.c.l.b16 %v433
      %v472 = vunpack.c.h.b16 %v433
      %v473 = vunpack.c.l.b16 %v434
      %v474 = vunpack.c.h.b16 %v434
      %v475 = vunpack.c.l.b16 %v435
      %v476 = vunpack.c.h.b16 %v435
      %v477 = vunpack.c.l.b16 %v436
      %v478 = vunpack.c.h.b16 %v436
      %v479 = vunpack.c.l.b16 %v437
      %v480 = vunpack.c.h.b16 %v437
      %v481 = vunpack.c.l.b16 %v438
      %v482 = vunpack.c.h.b16 %v438
      %v483 = vunpack.c.l.b16 %v439
      %v484 = vunpack.c.h.b16 %v439
      %v485 = vunpack.c.l.b16 %v440
      %v486 = vunpack.c.h.b16 %v440
      %v487 = vunpack.c.l.b16 %v441
      %v488 = vunpack.c.h.b16 %v441
      %v489 = vunpack.c.l.b16 %v442
      %v490 = vunpack.c.h.b16 %v442
      %v491 = vpack.c.b16 %v461, %v459
      %v492 = vpack.c.b16 %v462, %v460
      %v493 = vpack.c.b16 %v465, %v463
      %v494 = vpack.c.b16 %v466, %v464
      %v495 = vpack.c.b16 %v469, %v467
      %v496 = vpack.c.b16 %v470, %v468
      %v497 = vpack.c.b16 %v473, %v471
      %v498 = vpack.c.b16 %v474, %v472
      %v499 = vpack.c.b16 %v477, %v475
      %v500 = vpack.c.b16 %v478, %v476
      %v501 = vpack.c.b16 %v481, %v479
      %v502 = vpack.c.b16 %v482, %v480
      %v503 = vpack.c.b16 %v485, %v483
      %v504 = vpack.c.b16 %v486, %v484
      %v505 = vpack.c.b16 %v489, %v487
      %v506 = vpack.c.b16 %v490, %v488
      %523 = vmatpush.bf16.msra.mxu0 %v505
      %524 = vmatpush.bf16.msra.mxu0 %v503
      %525 = vmatpush.bf16.msra.mxu0 %v501
      %526 = vmatpush.bf16.msra.mxu0 %v499
      %527 = vmatpush.bf16.msra.mxu0 %v497
      %528 = vmatpush.bf16.msra.mxu0 %v495
      %529 = vmatpush.bf16.msra.mxu0 %v493
      %530 = vmatpush.bf16.msra.mxu0 %v491
      %531 = vmatmul.bf16.gmra.mxu0 %v413
      %v532 = vpop.f32.mrf.mxu0
      %v533 = vadd.f32 0.0, %v532
      %v534 = vpop.f32.mrf.mxu0
      %v535 = vadd.f32 0.0, %v534
      %536 = vmatmul.bf16.gmra.mxu0 %v414
      %v537 = vpop.f32.mrf.mxu0
      %v538 = vadd.f32 0.0, %v537
      %v539 = vpop.f32.mrf.mxu0
      %v540 = vadd.f32 0.0, %v539
      %541 = vmatmul.bf16.gmra.mxu0 %v415
      %v542 = vpop.f32.mrf.mxu0
      %v543 = vadd.f32 0.0, %v542
      %v544 = vpop.f32.mrf.mxu0
      %v545 = vadd.f32 0.0, %v544
      %546 = vmatmul.bf16.gmra.mxu0 %v416
      %v547 = vpop.f32.mrf.mxu0
      %v548 = vadd.f32 0.0, %v547
      %v549 = vpop.f32.mrf.mxu0
      %v550 = vadd.f32 0.0, %v549
      %551 = vmatmul.bf16.gmra.mxu0 %v417
      %v552 = vpop.f32.mrf.mxu0
      %v553 = vadd.f32 0.0, %v552
      %v554 = vpop.f32.mrf.mxu0
      %v555 = vadd.f32 0.0, %v554
      %556 = vmatmul.bf16.gmra.mxu0 %v418
      %v557 = vpop.f32.mrf.mxu0
      %v558 = vadd.f32 0.0, %v557
      %v559 = vpop.f32.mrf.mxu0
      %v560 = vadd.f32 0.0, %v559
      %561 = vmatmul.bf16.gmra.mxu0 %v419
      %v562 = vpop.f32.mrf.mxu0
      %v563 = vadd.f32 0.0, %v562
      %v564 = vpop.f32.mrf.mxu0
      %v565 = vadd.f32 0.0, %v564
      %566 = vmatmul.bf16.gmra.mxu0 %v420
      %v567 = vpop.f32.mrf.mxu0
      %v568 = vadd.f32 0.0, %v567
      %v569 = vpop.f32.mrf.mxu0
      %v570 = vadd.f32 0.0, %v569
      %571 = vmatmul.bf16.gmra.mxu0 %v421
      %v572 = vpop.f32.mrf.mxu0
      %v573 = vadd.f32 0.0, %v572
      %v574 = vpop.f32.mrf.mxu0
      %v575 = vadd.f32 0.0, %v574
      %576 = vmatmul.bf16.gmra.mxu0 %v422
      %v577 = vpop.f32.mrf.mxu0
      %v578 = vadd.f32 0.0, %v577
      %v579 = vpop.f32.mrf.mxu0
      %v580 = vadd.f32 0.0, %v579
      %581 = vmatmul.bf16.gmra.mxu0 %v423
      %v582 = vpop.f32.mrf.mxu0
      %v583 = vadd.f32 0.0, %v582
      %v584 = vpop.f32.mrf.mxu0
      %v585 = vadd.f32 0.0, %v584
      %586 = vmatmul.bf16.gmra.mxu0 %v424
      %v587 = vpop.f32.mrf.mxu0
      %v588 = vadd.f32 0.0, %v587
      %v589 = vpop.f32.mrf.mxu0
      %v590 = vadd.f32 0.0, %v589
      %591 = vmatmul.bf16.gmra.mxu0 %v425
      %v592 = vpop.f32.mrf.mxu0
      %v593 = vadd.f32 0.0, %v592
      %v594 = vpop.f32.mrf.mxu0
      %v595 = vadd.f32 0.0, %v594
      %596 = vmatmul.bf16.gmra.mxu0 %v426
      %v597 = vpop.f32.mrf.mxu0
      %v598 = vadd.f32 0.0, %v597
      %v599 = vpop.f32.mrf.mxu0
      %v600 = vadd.f32 0.0, %v599
      %601 = vdwg.mxu0
      %602 = vmatpush.bf16.msra.mxu0 %v506
      %603 = vmatpush.bf16.msra.mxu0 %v504
      %604 = vmatpush.bf16.msra.mxu0 %v502
      %605 = vmatpush.bf16.msra.mxu0 %v500
      %606 = vmatpush.bf16.msra.mxu0 %v498
      %607 = vmatpush.bf16.msra.mxu0 %v496
      %608 = vmatpush.bf16.msra.mxu0 %v494
      %609 = vmatpush.bf16.msra.mxu0 %v492
      %610 = vmatmul.bf16.gmra.mxu0 %v413
      %v611 = vpop.f32.mrf.mxu0
      %v612 = vadd.f32 0.0, %v611
      %v613 = vpop.f32.mrf.mxu0
      %v614 = vadd.f32 0.0, %v613
      %615 = vmatmul.bf16.gmra.mxu0 %v414
      %v616 = vpop.f32.mrf.mxu0
      %v617 = vadd.f32 0.0, %v616
      %v618 = vpop.f32.mrf.mxu0
      %v619 = vadd.f32 0.0, %v618
      %620 = vmatmul.bf16.gmra.mxu0 %v415
      %v621 = vpop.f32.mrf.mxu0
      %v622 = vadd.f32 0.0, %v621
      %v623 = vpop.f32.mrf.mxu0
      %v624 = vadd.f32 0.0, %v623
      %625 = vmatmul.bf16.gmra.mxu0 %v416
      %v626 = vpop.f32.mrf.mxu0
      %v627 = vadd.f32 0.0, %v626
      %v628 = vpop.f32.mrf.mxu0
      %v629 = vadd.f32 0.0, %v628
      %630 = vmatmul.bf16.gmra.mxu0 %v417
      %v631 = vpop.f32.mrf.mxu0
      %v632 = vadd.f32 0.0, %v631
      %v633 = vpop.f32.mrf.mxu0
      %v634 = vadd.f32 0.0, %v633
      %635 = vmatmul.bf16.gmra.mxu0 %v418
      %v636 = vpop.f32.mrf.mxu0
      %v637 = vadd.f32 0.0, %v636
      %v638 = vpop.f32.mrf.mxu0
      %v639 = vadd.f32 0.0, %v638
      %640 = vmatmul.bf16.gmra.mxu0 %v419
      %v641 = vpop.f32.mrf.mxu0
      %v642 = vadd.f32 0.0, %v641
      %v643 = vpop.f32.mrf.mxu0
      %v644 = vadd.f32 0.0, %v643
      %645 = vmatmul.bf16.gmra.mxu0 %v420
      %v646 = vpop.f32.mrf.mxu0
      %v647 = vadd.f32 0.0, %v646
      %v648 = vpop.f32.mrf.mxu0
      %v649 = vadd.f32 0.0, %v648
      %650 = vmatmul.bf16.gmra.mxu0 %v421
      %v651 = vpop.f32.mrf.mxu0
      %v652 = vadd.f32 0.0, %v651
      %v653 = vpop.f32.mrf.mxu0
      %v654 = vadd.f32 0.0, %v653
      %655 = vmatmul.bf16.gmra.mxu0 %v422
      %v656 = vpop.f32.mrf.mxu0
      %v657 = vadd.f32 0.0, %v656
      %v658 = vpop.f32.mrf.mxu0
      %v659 = vadd.f32 0.0, %v658
      %660 = vmatmul.bf16.gmra.mxu0 %v423
      %v661 = vpop.f32.mrf.mxu0
      %v662 = vadd.f32 0.0, %v661
      %v663 = vpop.f32.mrf.mxu0
      %v664 = vadd.f32 0.0, %v663
      %665 = vmatmul.bf16.gmra.mxu0 %v424
      %v666 = vpop.f32.mrf.mxu0
      %v667 = vadd.f32 0.0, %v666
      %v668 = vpop.f32.mrf.mxu0
      %v669 = vadd.f32 0.0, %v668
      %670 = vmatmul.bf16.gmra.mxu0 %v425
      %v671 = vpop.f32.mrf.mxu0
      %v672 = vadd.f32 0.0, %v671
      %v673 = vpop.f32.mrf.mxu0
      %v674 = vadd.f32 0.0, %v673
      %675 = vmatmul.bf16.gmra.mxu0 %v426
      %v676 = vpop.f32.mrf.mxu0
      %v677 = vadd.f32 0.0, %v676
      %v678 = vpop.f32.mrf.mxu0
      %v679 = vadd.f32 0.0, %v678
      %680 = vdwg.mxu0
      %681 = vst [vmem:[#allocation2] sm:$0xff] %v533
      %682 = vst [vmem:[#allocation2 + $0x8] sm:$0xff] %v612
      %683 = vst [vmem:[#allocation2 + $0x10] sm:$0xff] %v535
      %684 = vst [vmem:[#allocation2 + $0x18] sm:$0xff] %v614
      %685 = vst [vmem:[#allocation2 + $0x20] sm:$0xff] %v538
      %686 = vst [vmem:[#allocation2 + $0x28] sm:$0xff] %v617
      %687 = vst [vmem:[#allocation2 + $0x30] sm:$0xff] %v540
      %688 = vst [vmem:[#allocation2 + $0x38] sm:$0xff] %v619
      %689 = vst [vmem:[#allocation2 + $0x40] sm:$0xff] %v543
      %690 = vst [vmem:[#allocation2 + $0x48] sm:$0xff] %v622
      %691 = vst [vmem:[#allocation2 + $0x50] sm:$0xff] %v545
      %692 = vst [vmem:[#allocation2 + $0x58] sm:$0xff] %v624
      %693 = vst [vmem:[#allocation2 + $0x60] sm:$0xff] %v548
      %694 = vst [vmem:[#allocation2 + $0x68] sm:$0xff] %v627
      %695 = vst [vmem:[#allocation2 + $0x70] sm:$0xff] %v550
      %696 = vst [vmem:[#allocation2 + $0x78] sm:$0xff] %v629
      %697 = vst [vmem:[#allocation2 + $0x80] sm:$0xff] %v553
      %698 = vst [vmem:[#allocation2 + $0x88] sm:$0xff] %v632
      %699 = vst [vmem:[#allocation2 + $0x90] sm:$0xff] %v555
      %700 = vst [vmem:[#allocation2 + $0x98] sm:$0xff] %v634
      %701 = vst [vmem:[#allocation2 + $0xa0] sm:$0xff] %v558
      %702 = vst [vmem:[#allocation2 + $0xa8] sm:$0xff] %v637
      %703 = vst [vmem:[#allocation2 + $0xb0] sm:$0xff] %v560
      %704 = vst [vmem:[#allocation2 + $0xb8] sm:$0xff] %v639
      %705 = vst [vmem:[#allocation2 + $0xc0] sm:$0xff] %v563
      %706 = vst [vmem:[#allocation2 + $0xc8] sm:$0xff] %v642
      %707 = vst [vmem:[#allocation2 + $0xd0] sm:$0xff] %v565
      %708 = vst [vmem:[#allocation2 + $0xd8] sm:$0xff] %v644
      %709 = vst [vmem:[#allocation2 + $0xe0] sm:$0xff] %v568
      %710 = vst [vmem:[#allocation2 + $0xe8] sm:$0xff] %v647
      %711 = vst [vmem:[#allocation2 + $0xf0] sm:$0xff] %v570
      %712 = vst [vmem:[#allocation2 + $0xf8] sm:$0xff] %v649
      %713 = vst [vmem:[#allocation2 + $0x100] sm:$0xff] %v573
      %714 = vst [vmem:[#allocation2 + $0x108] sm:$0xff] %v652
      %715 = vst [vmem:[#allocation2 + $0x110] sm:$0xff] %v575
      %716 = vst [vmem:[#allocation2 + $0x118] sm:$0xff] %v654
      %717 = vst [vmem:[#allocation2 + $0x120] sm:$0xff] %v578
      %718 = vst [vmem:[#allocation2 + $0x128] sm:$0xff] %v657
      %719 = vst [vmem:[#allocation2 + $0x130] sm:$0xff] %v580
      %720 = vst [vmem:[#allocation2 + $0x138] sm:$0xff] %v659
      %721 = vst [vmem:[#allocation2 + $0x140] sm:$0xff] %v583
      %722 = vst [vmem:[#allocation2 + $0x148] sm:$0xff] %v662
      %723 = vst [vmem:[#allocation2 + $0x150] sm:$0xff] %v585
      %724 = vst [vmem:[#allocation2 + $0x158] sm:$0xff] %v664
      %725 = vst [vmem:[#allocation2 + $0x160] sm:$0xff] %v588
      %726 = vst [vmem:[#allocation2 + $0x168] sm:$0xff] %v667
      %727 = vst [vmem:[#allocation2 + $0x170] sm:$0xff] %v590
      %728 = vst [vmem:[#allocation2 + $0x178] sm:$0xff] %v669
      %729 = vst [vmem:[#allocation2 + $0x180] sm:$0xff] %v593
      %730 = vst [vmem:[#allocation2 + $0x188] sm:$0xff] %v672
      %731 = vst [vmem:[#allocation2 + $0x190] sm:$0xff] %v595
      %732 = vst [vmem:[#allocation2 + $0x198] sm:$0xff] %v674
      %733 = vst [vmem:[#allocation2 + $0x1a0] sm:$0xff] %v598
      %734 = vst [vmem:[#allocation2 + $0x1a8] sm:$0xff] %v677
      %735 = vst [vmem:[#allocation2 + $0x1b0] sm:$0xff] %v600
      %736 = vst [vmem:[#allocation2 + $0x1b8] sm:$0xff] %v679
      %v737 = vld [vmem:[%s380 + $0x8] sm:$0xff]
      %v738 = vld [vmem:[%s380 + $0x10] sm:$0xff]
      %v739 = vld [vmem:[%s380 + $0x18] sm:$0xff]
      %v740 = vld [vmem:[%s380 + $0x20] sm:$0xff]
      %v741 = vld [vmem:[%s380 + $0x28] sm:$0xff]
      %v742 = vld [vmem:[%s380 + $0x30] sm:$0xff]
      %v743 = vld [vmem:[%s380 + $0x38] sm:$0xff]
      %v744 = vld [vmem:[%s380 + $0x40] sm:$0xff]
      %v745 = vld [vmem:[%s380 + $0x48] sm:$0xff]
      %v746 = vld [vmem:[%s380 + $0x50] sm:$0xff]
      %v747 = vld [vmem:[%s380 + $0x58] sm:$0xff]
      %v748 = vld [vmem:[%s380 + $0x60] sm:$0xff]
      %v749 = vld [vmem:[%s380 + $0x68] sm:$0xff]
      %v750 = vld [vmem:[%s380 + $0x70] sm:$0xff]
      %v751 = vld [vmem:[%s380 + $0x78] sm:$0xff]
      %v752 = vld [vmem:[%s380 + $0x80] sm:$0xff]
      %v753 = vld [vmem:[%s380 + $0x88] sm:$0xff]
      %v754 = vld [vmem:[%s380 + $0x90] sm:$0xff]
      %v755 = vld [vmem:[%s380 + $0x98] sm:$0xff]
      %v756 = vld [vmem:[%s380 + $0xa0] sm:$0xff]
      %v757 = vld [vmem:[%s380 + $0xa8] sm:$0xff]
      %v758 = vld [vmem:[%s380 + $0xb0] sm:$0xff]
      %v759 = vld [vmem:[%s380 + $0xb8] sm:$0xff]
      %v760 = vld [vmem:[%s380 + $0xc0] sm:$0xff]
      %v761 = vld [vmem:[%s380 + $0xc8] sm:$0xff]
      %v762 = vld [vmem:[%s380 + $0xd0] sm:$0xff]
      %v763 = vld [vmem:[%s380 + $0xd8] sm:$0xff]
      %v764 = vld [vmem:[%s380 + $0xe0] sm:$0xff]
      %v765 = vpack.c.bf16 %v738, %v737
      %v766 = vpack.c.bf16 %v740, %v739
      %v767 = vpack.c.bf16 %v742, %v741
      %v768 = vpack.c.bf16 %v744, %v743
      %v769 = vpack.c.bf16 %v746, %v745
      %v770 = vpack.c.bf16 %v748, %v747
      %v771 = vpack.c.bf16 %v750, %v749
      %v772 = vpack.c.bf16 %v752, %v751
      %v773 = vpack.c.bf16 %v754, %v753
      %v774 = vpack.c.bf16 %v756, %v755
      %v775 = vpack.c.bf16 %v758, %v757
      %v776 = vpack.c.bf16 %v760, %v759
      %v777 = vpack.c.bf16 %v762, %v761
      %v778 = vpack.c.bf16 %v764, %v763
      %s779 = scalar_lea.vmem %s1, 128
      %v780 = vld [vmem:[%s779] sm:$0xff]
      %v781 = vld [vmem:[%s779 + $0x8] sm:$0xff]
      %v782 = vld [vmem:[%s779 + $0x10] sm:$0xff]
      %v783 = vld [vmem:[%s779 + $0x18] sm:$0xff]
      %v784 = vld [vmem:[%s779 + $0x20] sm:$0xff]
      %v785 = vld [vmem:[%s779 + $0x28] sm:$0xff]
      %v786 = vld [vmem:[%s779 + $0x30] sm:$0xff]
      %v787 = vld [vmem:[%s779 + $0x38] sm:$0xff]
      %v788 = vld [vmem:[%s779 + $0x40] sm:$0xff]
      %v789 = vld [vmem:[%s779 + $0x48] sm:$0xff]
      %v790 = vld [vmem:[%s779 + $0x50] sm:$0xff]
      %v791 = vld [vmem:[%s779 + $0x58] sm:$0xff]
      %v792 = vld [vmem:[%s779 + $0x60] sm:$0xff]
      %v793 = vld [vmem:[%s779 + $0x68] sm:$0xff]
      %v794 = vld [vmem:[%s779 + $0x70] sm:$0xff]
      %v795 = vld [vmem:[%s779 + $0x78] sm:$0xff]
      %v812 = vunpack.c.l.b16 %v780
      %v813 = vunpack.c.h.b16 %v780
      %v814 = vunpack.c.l.b16 %v781
      %v815 = vunpack.c.h.b16 %v781
      %v816 = vunpack.c.l.b16 %v782
      %v817 = vunpack.c.h.b16 %v782
      %v818 = vunpack.c.l.b16 %v783
      %v819 = vunpack.c.h.b16 %v783
      %v820 = vunpack.c.l.b16 %v784
      %v821 = vunpack.c.h.b16 %v784
      %v822 = vunpack.c.l.b16 %v785
      %v823 = vunpack.c.h.b16 %v785
      %v824 = vunpack.c.l.b16 %v786
      %v825 = vunpack.c.h.b16 %v786
      %v826 = vunpack.c.l.b16 %v787
      %v827 = vunpack.c.h.b16 %v787
      %v828 = vunpack.c.l.b16 %v788
      %v829 = vunpack.c.h.b16 %v788
      %v830 = vunpack.c.l.b16 %v789
      %v831 = vunpack.c.h.b16 %v789
      %v832 = vunpack.c.l.b16 %v790
      %v833 = vunpack.c.h.b16 %v790
      %v834 = vunpack.c.l.b16 %v791
      %v835 = vunpack.c.h.b16 %v791
      %v836 = vunpack.c.l.b16 %v792
      %v837 = vunpack.c.h.b16 %v792
      %v838 = vunpack.c.l.b16 %v793
      %v839 = vunpack.c.h.b16 %v793
      %v840 = vunpack.c.l.b16 %v794
      %v841 = vunpack.c.h.b16 %v794
      %v842 = vunpack.c.l.b16 %v795
      %v843 = vunpack.c.h.b16 %v795
      %v844 = vpack.c.b16 %v814, %v812
      %v845 = vpack.c.b16 %v815, %v813
      %v846 = vpack.c.b16 %v818, %v816
      %v847 = vpack.c.b16 %v819, %v817
      %v848 = vpack.c.b16 %v822, %v820
      %v849 = vpack.c.b16 %v823, %v821
      %v850 = vpack.c.b16 %v826, %v824
      %v851 = vpack.c.b16 %v827, %v825
      %v852 = vpack.c.b16 %v830, %v828
      %v853 = vpack.c.b16 %v831, %v829
      %v854 = vpack.c.b16 %v834, %v832
      %v855 = vpack.c.b16 %v835, %v833
      %v856 = vpack.c.b16 %v838, %v836
      %v857 = vpack.c.b16 %v839, %v837
      %v858 = vpack.c.b16 %v842, %v840
      %v859 = vpack.c.b16 %v843, %v841
      %876 = vmatpush.bf16.msra.mxu0 %v858
      %877 = vmatpush.bf16.msra.mxu0 %v856
      %878 = vmatpush.bf16.msra.mxu0 %v854
      %879 = vmatpush.bf16.msra.mxu0 %v852
      %880 = vmatpush.bf16.msra.mxu0 %v850
      %881 = vmatpush.bf16.msra.mxu0 %v848
      %882 = vmatpush.bf16.msra.mxu0 %v846
      %883 = vmatpush.bf16.msra.mxu0 %v844
      %884 = vmatmul.bf16.gmra.mxu0 %v765
      %v885 = vpop.f32.mrf.mxu0
      %v886 = vadd.f32 0.0, %v885
      %v887 = vpop.f32.mrf.mxu0
      %v888 = vadd.f32 0.0, %v887
      %889 = vmatmul.bf16.gmra.mxu0 %v766
      %v890 = vpop.f32.mrf.mxu0
      %v891 = vadd.f32 0.0, %v890
      %v892 = vpop.f32.mrf.mxu0
      %v893 = vadd.f32 0.0, %v892
      %894 = vmatmul.bf16.gmra.mxu0 %v767
      %v895 = vpop.f32.mrf.mxu0
      %v896 = vadd.f32 0.0, %v895
      %v897 = vpop.f32.mrf.mxu0
      %v898 = vadd.f32 0.0, %v897
      %899 = vmatmul.bf16.gmra.mxu0 %v768
      %v900 = vpop.f32.mrf.mxu0
      %v901 = vadd.f32 0.0, %v900
      %v902 = vpop.f32.mrf.mxu0
      %v903 = vadd.f32 0.0, %v902
      %904 = vmatmul.bf16.gmra.mxu0 %v769
      %v905 = vpop.f32.mrf.mxu0
      %v906 = vadd.f32 0.0, %v905
      %v907 = vpop.f32.mrf.mxu0
      %v908 = vadd.f32 0.0, %v907
      %909 = vmatmul.bf16.gmra.mxu0 %v770
      %v910 = vpop.f32.mrf.mxu0
      %v911 = vadd.f32 0.0, %v910
      %v912 = vpop.f32.mrf.mxu0
      %v913 = vadd.f32 0.0, %v912
      %914 = vmatmul.bf16.gmra.mxu0 %v771
      %v915 = vpop.f32.mrf.mxu0
      %v916 = vadd.f32 0.0, %v915
      %v917 = vpop.f32.mrf.mxu0
      %v918 = vadd.f32 0.0, %v917
      %919 = vmatmul.bf16.gmra.mxu0 %v772
      %v920 = vpop.f32.mrf.mxu0
      %v921 = vadd.f32 0.0, %v920
      %v922 = vpop.f32.mrf.mxu0
      %v923 = vadd.f32 0.0, %v922
      %924 = vmatmul.bf16.gmra.mxu0 %v773
      %v925 = vpop.f32.mrf.mxu0
      %v926 = vadd.f32 0.0, %v925
      %v927 = vpop.f32.mrf.mxu0
      %v928 = vadd.f32 0.0, %v927
      %929 = vmatmul.bf16.gmra.mxu0 %v774
      %v930 = vpop.f32.mrf.mxu0
      %v931 = vadd.f32 0.0, %v930
      %v932 = vpop.f32.mrf.mxu0
      %v933 = vadd.f32 0.0, %v932
      %934 = vmatmul.bf16.gmra.mxu0 %v775
      %v935 = vpop.f32.mrf.mxu0
      %v936 = vadd.f32 0.0, %v935
      %v937 = vpop.f32.mrf.mxu0
      %v938 = vadd.f32 0.0, %v937
      %939 = vmatmul.bf16.gmra.mxu0 %v776
      %v940 = vpop.f32.mrf.mxu0
      %v941 = vadd.f32 0.0, %v940
      %v942 = vpop.f32.mrf.mxu0
      %v943 = vadd.f32 0.0, %v942
      %944 = vmatmul.bf16.gmra.mxu0 %v777
      %v945 = vpop.f32.mrf.mxu0
      %v946 = vadd.f32 0.0, %v945
      %v947 = vpop.f32.mrf.mxu0
      %v948 = vadd.f32 0.0, %v947
      %949 = vmatmul.bf16.gmra.mxu0 %v778
      %v950 = vpop.f32.mrf.mxu0
      %v951 = vadd.f32 0.0, %v950
      %v952 = vpop.f32.mrf.mxu0
      %v953 = vadd.f32 0.0, %v952
      %954 = vdwg.mxu0
      %955 = vmatpush.bf16.msra.mxu0 %v859
      %956 = vmatpush.bf16.msra.mxu0 %v857
      %957 = vmatpush.bf16.msra.mxu0 %v855
      %958 = vmatpush.bf16.msra.mxu0 %v853
      %959 = vmatpush.bf16.msra.mxu0 %v851
      %960 = vmatpush.bf16.msra.mxu0 %v849
      %961 = vmatpush.bf16.msra.mxu0 %v847
      %962 = vmatpush.bf16.msra.mxu0 %v845
      %963 = vmatmul.bf16.gmra.mxu0 %v765
      %v964 = vpop.f32.mrf.mxu0
      %v965 = vadd.f32 0.0, %v964
      %v966 = vpop.f32.mrf.mxu0
      %v967 = vadd.f32 0.0, %v966
      %968 = vmatmul.bf16.gmra.mxu0 %v766
      %v969 = vpop.f32.mrf.mxu0
      %v970 = vadd.f32 0.0, %v969
      %v971 = vpop.f32.mrf.mxu0
      %v972 = vadd.f32 0.0, %v971
      %973 = vmatmul.bf16.gmra.mxu0 %v767
      %v974 = vpop.f32.mrf.mxu0
      %v975 = vadd.f32 0.0, %v974
      %v976 = vpop.f32.mrf.mxu0
      %v977 = vadd.f32 0.0, %v976
      %978 = vmatmul.bf16.gmra.mxu0 %v768
      %v979 = vpop.f32.mrf.mxu0
      %v980 = vadd.f32 0.0, %v979
      %v981 = vpop.f32.mrf.mxu0
      %v982 = vadd.f32 0.0, %v981
      %983 = vmatmul.bf16.gmra.mxu0 %v769
      %v984 = vpop.f32.mrf.mxu0
      %v985 = vadd.f32 0.0, %v984
      %v986 = vpop.f32.mrf.mxu0
      %v987 = vadd.f32 0.0, %v986
      %988 = vmatmul.bf16.gmra.mxu0 %v770
      %v989 = vpop.f32.mrf.mxu0
      %v990 = vadd.f32 0.0, %v989
      %v991 = vpop.f32.mrf.mxu0
      %v992 = vadd.f32 0.0, %v991
      %993 = vmatmul.bf16.gmra.mxu0 %v771
      %v994 = vpop.f32.mrf.mxu0
      %v995 = vadd.f32 0.0, %v994
      %v996 = vpop.f32.mrf.mxu0
      %v997 = vadd.f32 0.0, %v996
      %998 = vmatmul.bf16.gmra.mxu0 %v772
      %v999 = vpop.f32.mrf.mxu0
      %v1000 = vadd.f32 0.0, %v999
      %v1001 = vpop.f32.mrf.mxu0
      %v1002 = vadd.f32 0.0, %v1001
      %1003 = vmatmul.bf16.gmra.mxu0 %v773
      %v1004 = vpop.f32.mrf.mxu0
      %v1005 = vadd.f32 0.0, %v1004
      %v1006 = vpop.f32.mrf.mxu0
      %v1007 = vadd.f32 0.0, %v1006
      %1008 = vmatmul.bf16.gmra.mxu0 %v774
      %v1009 = vpop.f32.mrf.mxu0
      %v1010 = vadd.f32 0.0, %v1009
      %v1011 = vpop.f32.mrf.mxu0
      %v1012 = vadd.f32 0.0, %v1011
      %1013 = vmatmul.bf16.gmra.mxu0 %v775
      %v1014 = vpop.f32.mrf.mxu0
      %v1015 = vadd.f32 0.0, %v1014
      %v1016 = vpop.f32.mrf.mxu0
      %v1017 = vadd.f32 0.0, %v1016
      %1018 = vmatmul.bf16.gmra.mxu0 %v776
      %v1019 = vpop.f32.mrf.mxu0
      %v1020 = vadd.f32 0.0, %v1019
      %v1021 = vpop.f32.mrf.mxu0
      %v1022 = vadd.f32 0.0, %v1021
      %1023 = vmatmul.bf16.gmra.mxu0 %v777
      %v1024 = vpop.f32.mrf.mxu0
      %v1025 = vadd.f32 0.0, %v1024
      %v1026 = vpop.f32.mrf.mxu0
      %v1027 = vadd.f32 0.0, %v1026
      %1028 = vmatmul.bf16.gmra.mxu0 %v778
      %v1029 = vpop.f32.mrf.mxu0
      %v1030 = vadd.f32 0.0, %v1029
      %v1031 = vpop.f32.mrf.mxu0
      %v1032 = vadd.f32 0.0, %v1031
      %1033 = vdwg.mxu0
      %v1034 = vld [vmem:[#allocation2] sm:$0xff]
      %v1035 = vld [vmem:[#allocation2 + $0x8] sm:$0xff]
      %v1036 = vld [vmem:[#allocation2 + $0x10] sm:$0xff]
      %v1037 = vld [vmem:[#allocation2 + $0x18] sm:$0xff]
      %v1038 = vld [vmem:[#allocation2 + $0x20] sm:$0xff]
      %v1039 = vld [vmem:[#allocation2 + $0x28] sm:$0xff]
      %v1040 = vld [vmem:[#allocation2 + $0x30] sm:$0xff]
      %v1041 = vld [vmem:[#allocation2 + $0x38] sm:$0xff]
      %v1042 = vld [vmem:[#allocation2 + $0x40] sm:$0xff]
      %v1043 = vld [vmem:[#allocation2 + $0x48] sm:$0xff]
      %v1044 = vld [vmem:[#allocation2 + $0x50] sm:$0xff]
      %v1045 = vld [vmem:[#allocation2 + $0x58] sm:$0xff]
      %v1046 = vld [vmem:[#allocation2 + $0x60] sm:$0xff]
      %v1047 = vld [vmem:[#allocation2 + $0x68] sm:$0xff]
      %v1048 = vld [vmem:[#allocation2 + $0x70] sm:$0xff]
      %v1049 = vld [vmem:[#allocation2 + $0x78] sm:$0xff]
      %v1050 = vld [vmem:[#allocation2 + $0x80] sm:$0xff]
      %v1051 = vld [vmem:[#allocation2 + $0x88] sm:$0xff]
      %v1052 = vld [vmem:[#allocation2 + $0x90] sm:$0xff]
      %v1053 = vld [vmem:[#allocation2 + $0x98] sm:$0xff]
      %v1054 = vld [vmem:[#allocation2 + $0xa0] sm:$0xff]
      %v1055 = vld [vmem:[#allocation2 + $0xa8] sm:$0xff]
      %v1056 = vld [vmem:[#allocation2 + $0xb0] sm:$0xff]
      %v1057 = vld [vmem:[#allocation2 + $0xb8] sm:$0xff]
      %v1058 = vld [vmem:[#allocation2 + $0xc0] sm:$0xff]
      %v1059 = vld [vmem:[#allocation2 + $0xc8] sm:$0xff]
      %v1060 = vld [vmem:[#allocation2 + $0xd0] sm:$0xff]
      %v1061 = vld [vmem:[#allocation2 + $0xd8] sm:$0xff]
      %v1062 = vld [vmem:[#allocation2 + $0xe0] sm:$0xff]
      %v1063 = vld [vmem:[#allocation2 + $0xe8] sm:$0xff]
      %v1064 = vld [vmem:[#allocation2 + $0xf0] sm:$0xff]
      %v1065 = vld [vmem:[#allocation2 + $0xf8] sm:$0xff]
      %v1066 = vld [vmem:[#allocation2 + $0x100] sm:$0xff]
      %v1067 = vld [vmem:[#allocation2 + $0x108] sm:$0xff]
      %v1068 = vld [vmem:[#allocation2 + $0x110] sm:$0xff]
      %v1069 = vld [vmem:[#allocation2 + $0x118] sm:$0xff]
      %v1070 = vld [vmem:[#allocation2 + $0x120] sm:$0xff]
      %v1071 = vld [vmem:[#allocation2 + $0x128] sm:$0xff]
      %v1072 = vld [vmem:[#allocation2 + $0x130] sm:$0xff]
      %v1073 = vld [vmem:[#allocation2 + $0x138] sm:$0xff]
      %v1074 = vld [vmem:[#allocation2 + $0x140] sm:$0xff]
      %v1075 = vld [vmem:[#allocation2 + $0x148] sm:$0xff]
      %v1076 = vld [vmem:[#allocation2 + $0x150] sm:$0xff]
      %v1077 = vld [vmem:[#allocation2 + $0x158] sm:$0xff]
      %v1078 = vld [vmem:[#allocation2 + $0x160] sm:$0xff]
      %v1079 = vld [vmem:[#allocation2 + $0x168] sm:$0xff]
      %v1080 = vld [vmem:[#allocation2 + $0x170] sm:$0xff]
      %v1081 = vld [vmem:[#allocation2 + $0x178] sm:$0xff]
      %v1082 = vld [vmem:[#allocation2 + $0x180] sm:$0xff]
      %v1083 = vld [vmem:[#allocation2 + $0x188] sm:$0xff]
      %v1084 = vld [vmem:[#allocation2 + $0x190] sm:$0xff]
      %v1085 = vld [vmem:[#allocation2 + $0x198] sm:$0xff]
      %v1086 = vld [vmem:[#allocation2 + $0x1a0] sm:$0xff]
      %v1087 = vld [vmem:[#allocation2 + $0x1a8] sm:$0xff]
      %v1088 = vld [vmem:[#allocation2 + $0x1b0] sm:$0xff]
      %v1089 = vld [vmem:[#allocation2 + $0x1b8] sm:$0xff]
      %v1090 = vadd.f32 %v1034, %v886
      %v1091 = vadd.f32 %v1035, %v965
      %v1092 = vadd.f32 %v1036, %v888
      %v1093 = vadd.f32 %v1037, %v967
      %v1094 = vadd.f32 %v1038, %v891
      %v1095 = vadd.f32 %v1039, %v970
      %v1096 = vadd.f32 %v1040, %v893
      %v1097 = vadd.f32 %v1041, %v972
      %v1098 = vadd.f32 %v1042, %v896
      %v1099 = vadd.f32 %v1043, %v975
      %v1100 = vadd.f32 %v1044, %v898
      %v1101 = vadd.f32 %v1045, %v977
      %v1102 = vadd.f32 %v1046, %v901
      %v1103 = vadd.f32 %v1047, %v980
      %v1104 = vadd.f32 %v1048, %v903
      %v1105 = vadd.f32 %v1049, %v982
      %v1106 = vadd.f32 %v1050, %v906
      %v1107 = vadd.f32 %v1051, %v985
      %v1108 = vadd.f32 %v1052, %v908
      %v1109 = vadd.f32 %v1053, %v987
      %v1110 = vadd.f32 %v1054, %v911
      %v1111 = vadd.f32 %v1055, %v990
      %v1112 = vadd.f32 %v1056, %v913
      %v1113 = vadd.f32 %v1057, %v992
      %v1114 = vadd.f32 %v1058, %v916
      %v1115 = vadd.f32 %v1059, %v995
      %v1116 = vadd.f32 %v1060, %v918
      %v1117 = vadd.f32 %v1061, %v997
      %v1118 = vadd.f32 %v1062, %v921
      %v1119 = vadd.f32 %v1063, %v1000
      %v1120 = vadd.f32 %v1064, %v923
      %v1121 = vadd.f32 %v1065, %v1002
      %v1122 = vadd.f32 %v1066, %v926
      %v1123 = vadd.f32 %v1067, %v1005
      %v1124 = vadd.f32 %v1068, %v928
      %v1125 = vadd.f32 %v1069, %v1007
      %v1126 = vadd.f32 %v1070, %v931
      %v1127 = vadd.f32 %v1071, %v1010
      %v1128 = vadd.f32 %v1072, %v933
      %v1129 = vadd.f32 %v1073, %v1012
      %v1130 = vadd.f32 %v1074, %v936
      %v1131 = vadd.f32 %v1075, %v1015
      %v1132 = vadd.f32 %v1076, %v938
      %v1133 = vadd.f32 %v1077, %v1017
      %v1134 = vadd.f32 %v1078, %v941
      %v1135 = vadd.f32 %v1079, %v1020
      %v1136 = vadd.f32 %v1080, %v943
      %v1137 = vadd.f32 %v1081, %v1022
      %v1138 = vadd.f32 %v1082, %v946
      %v1139 = vadd.f32 %v1083, %v1025
      %v1140 = vadd.f32 %v1084, %v948
      %v1141 = vadd.f32 %v1085, %v1027
      %v1142 = vadd.f32 %v1086, %v951
      %v1143 = vadd.f32 %v1087, %v1030
      %v1144 = vadd.f32 %v1088, %v953
      %v1145 = vadd.f32 %v1089, %v1032
      %1146 = vst [vmem:[#allocation2] sm:$0xff] %v1090
      %1147 = vst [vmem:[#allocation2 + $0x8] sm:$0xff] %v1091
      %1148 = vst [vmem:[#allocation2 + $0x10] sm:$0xff] %v1092
      %1149 = vst [vmem:[#allocation2 + $0x18] sm:$0xff] %v1093
      %1150 = vst [vmem:[#allocation2 + $0x20] sm:$0xff] %v1094
      %1151 = vst [vmem:[#allocation2 + $0x28] sm:$0xff] %v1095
      %1152 = vst [vmem:[#allocation2 + $0x30] sm:$0xff] %v1096
      %1153 = vst [vmem:[#allocation2 + $0x38] sm:$0xff] %v1097
      %1154 = vst [vmem:[#allocation2 + $0x40] sm:$0xff] %v1098
      %1155 = vst [vmem:[#allocation2 + $0x48] sm:$0xff] %v1099
      %1156 = vst [vmem:[#allocation2 + $0x50] sm:$0xff] %v1100
      %1157 = vst [vmem:[#allocation2 + $0x58] sm:$0xff] %v1101
      %1158 = vst [vmem:[#allocation2 + $0x60] sm:$0xff] %v1102
      %1159 = vst [vmem:[#allocation2 + $0x68] sm:$0xff] %v1103
      %1160 = vst [vmem:[#allocation2 + $0x70] sm:$0xff] %v1104
      %1161 = vst [vmem:[#allocation2 + $0x78] sm:$0xff] %v1105
      %1162 = vst [vmem:[#allocation2 + $0x80] sm:$0xff] %v1106
      %1163 = vst [vmem:[#allocation2 + $0x88] sm:$0xff] %v1107
      %1164 = vst [vmem:[#allocation2 + $0x90] sm:$0xff] %v1108
      %1165 = vst [vmem:[#allocation2 + $0x98] sm:$0xff] %v1109
      %1166 = vst [vmem:[#allocation2 + $0xa0] sm:$0xff] %v1110
      %1167 = vst [vmem:[#allocation2 + $0xa8] sm:$0xff] %v1111
      %1168 = vst [vmem:[#allocation2 + $0xb0] sm:$0xff] %v1112
      %1169 = vst [vmem:[#allocation2 + $0xb8] sm:$0xff] %v1113
      %1170 = vst [vmem:[#allocation2 + $0xc0] sm:$0xff] %v1114
      %1171 = vst [vmem:[#allocation2 + $0xc8] sm:$0xff] %v1115
      %1172 = vst [vmem:[#allocation2 + $0xd0] sm:$0xff] %v1116
      %1173 = vst [vmem:[#allocation2 + $0xd8] sm:$0xff] %v1117
      %1174 = vst [vmem:[#allocation2 + $0xe0] sm:$0xff] %v1118
      %1175 = vst [vmem:[#allocation2 + $0xe8] sm:$0xff] %v1119
      %1176 = vst [vmem:[#allocation2 + $0xf0] sm:$0xff] %v1120
      %1177 = vst [vmem:[#allocation2 + $0xf8] sm:$0xff] %v1121
      %1178 = vst [vmem:[#allocation2 + $0x100] sm:$0xff] %v1122
      %1179 = vst [vmem:[#allocation2 + $0x108] sm:$0xff] %v1123
      %1180 = vst [vmem:[#allocation2 + $0x110] sm:$0xff] %v1124
      %1181 = vst [vmem:[#allocation2 + $0x118] sm:$0xff] %v1125
      %1182 = vst [vmem:[#allocation2 + $0x120] sm:$0xff] %v1126
      %1183 = vst [vmem:[#allocation2 + $0x128] sm:$0xff] %v1127
      %1184 = vst [vmem:[#allocation2 + $0x130] sm:$0xff] %v1128
      %1185 = vst [vmem:[#allocation2 + $0x138] sm:$0xff] %v1129
      %1186 = vst [vmem:[#allocation2 + $0x140] sm:$0xff] %v1130
      %1187 = vst [vmem:[#allocation2 + $0x148] sm:$0xff] %v1131
      %1188 = vst [vmem:[#allocation2 + $0x150] sm:$0xff] %v1132
      %1189 = vst [vmem:[#allocation2 + $0x158] sm:$0xff] %v1133
      %1190 = vst [vmem:[#allocation2 + $0x160] sm:$0xff] %v1134
      %1191 = vst [vmem:[#allocation2 + $0x168] sm:$0xff] %v1135
      %1192 = vst [vmem:[#allocation2 + $0x170] sm:$0xff] %v1136
      %1193 = vst [vmem:[#allocation2 + $0x178] sm:$0xff] %v1137
      %1194 = vst [vmem:[#allocation2 + $0x180] sm:$0xff] %v1138
      %1195 = vst [vmem:[#allocation2 + $0x188] sm:$0xff] %v1139
      %1196 = vst [vmem:[#allocation2 + $0x190] sm:$0xff] %v1140
      %1197 = vst [vmem:[#allocation2 + $0x198] sm:$0xff] %v1141
      %1198 = vst [vmem:[#allocation2 + $0x1a0] sm:$0xff] %v1142
      %1199 = vst [vmem:[#allocation2 + $0x1a8] sm:$0xff] %v1143
      %1200 = vst [vmem:[#allocation2 + $0x1b0] sm:$0xff] %v1144
      %1201 = vst [vmem:[#allocation2 + $0x1b8] sm:$0xff] %v1145
      %v1202 = vld [vmem:[%s380 + $0x10] sm:$0xff]
      %v1203 = vld [vmem:[%s380 + $0x18] sm:$0xff]
      %v1204 = vld [vmem:[%s380 + $0x20] sm:$0xff]
      %v1205 = vld [vmem:[%s380 + $0x28] sm:$0xff]
      %v1206 = vld [vmem:[%s380 + $0x30] sm:$0xff]
      %v1207 = vld [vmem:[%s380 + $0x38] sm:$0xff]
      %v1208 = vld [vmem:[%s380 + $0x40] sm:$0xff]
      %v1209 = vld [vmem:[%s380 + $0x48] sm:$0xff]
      %v1210 = vld [vmem:[%s380 + $0x50] sm:$0xff]
      %v1211 = vld [vmem:[%s380 + $0x58] sm:$0xff]
      %v1212 = vld [vmem:[%s380 + $0x60] sm:$0xff]
      %v1213 = vld [vmem:[%s380 + $0x68] sm:$0xff]
      %v1214 = vld [vmem:[%s380 + $0x70] sm:$0xff]
      %v1215 = vld [vmem:[%s380 + $0x78] sm:$0xff]
      %v1216 = vld [vmem:[%s380 + $0x80] sm:$0xff]
      %v1217 = vld [vmem:[%s380 + $0x88] sm:$0xff]
      %v1218 = vld [vmem:[%s380 + $0x90] sm:$0xff]
      %v1219 = vld [vmem:[%s380 + $0x98] sm:$0xff]
      %v1220 = vld [vmem:[%s380 + $0xa0] sm:$0xff]
      %v1221 = vld [vmem:[%s380 + $0xa8] sm:$0xff]
      %v1222 = vld [vmem:[%s380 + $0xb0] sm:$0xff]
      %v1223 = vld [vmem:[%s380 + $0xb8] sm:$0xff]
      %v1224 = vld [vmem:[%s380 + $0xc0] sm:$0xff]
      %v1225 = vld [vmem:[%s380 + $0xc8] sm:$0xff]
      %v1226 = vld [vmem:[%s380 + $0xd0] sm:$0xff]
      %v1227 = vld [vmem:[%s380 + $0xd8] sm:$0xff]
      %v1228 = vld [vmem:[%s380 + $0xe0] sm:$0xff]
      %v1229 = vld [vmem:[%s380 + $0xe8] sm:$0xff]
      %v1230 = vpack.c.bf16 %v1203, %v1202
      %v1231 = vpack.c.bf16 %v1205, %v1204
      %v1232 = vpack.c.bf16 %v1207, %v1206
      %v1233 = vpack.c.bf16 %v1209, %v1208
      %v1234 = vpack.c.bf16 %v1211, %v1210
      %v1235 = vpack.c.bf16 %v1213, %v1212
      %v1236 = vpack.c.bf16 %v1215, %v1214
      %v1237 = vpack.c.bf16 %v1217, %v1216
      %v1238 = vpack.c.bf16 %v1219, %v1218
      %v1239 = vpack.c.bf16 %v1221, %v1220
      %v1240 = vpack.c.bf16 %v1223, %v1222
      %v1241 = vpack.c.bf16 %v1225, %v1224
      %v1242 = vpack.c.bf16 %v1227, %v1226
      %v1243 = vpack.c.bf16 %v1229, %v1228
      %s1244 = scalar_lea.vmem %s1, 256
      %v1245 = vld [vmem:[%s1244] sm:$0xff]
      %v1246 = vld [vmem:[%s1244 + $0x8] sm:$0xff]
      %v1247 = vld [vmem:[%s1244 + $0x10] sm:$0xff]
      %v1248 = vld [vmem:[%s1244 + $0x18] sm:$0xff]
      %v1249 = vld [vmem:[%s1244 + $0x20] sm:$0xff]
      %v1250 = vld [vmem:[%s1244 + $0x28] sm:$0xff]
      %v1251 = vld [vmem:[%s1244 + $0x30] sm:$0xff]
      %v1252 = vld [vmem:[%s1244 + $0x38] sm:$0xff]
      %v1253 = vld [vmem:[%s1244 + $0x40] sm:$0xff]
      %v1254 = vld [vmem:[%s1244 + $0x48] sm:$0xff]
      %v1255 = vld [vmem:[%s1244 + $0x50] sm:$0xff]
      %v1256 = vld [vmem:[%s1244 + $0x58] sm:$0xff]
      %v1257 = vld [vmem:[%s1244 + $0x60] sm:$0xff]
      %v1258 = vld [vmem:[%s1244 + $0x68] sm:$0xff]
      %v1259 = vld [vmem:[%s1244 + $0x70] sm:$0xff]
      %v1260 = vld [vmem:[%s1244 + $0x78] sm:$0xff]
      %v1277 = vunpack.c.l.b16 %v1245
      %v1278 = vunpack.c.h.b16 %v1245
      %v1279 = vunpack.c.l.b16 %v1246
      %v1280 = vunpack.c.h.b16 %v1246
      %v1281 = vunpack.c.l.b16 %v1247
      %v1282 = vunpack.c.h.b16 %v1247
      %v1283 = vunpack.c.l.b16 %v1248
      %v1284 = vunpack.c.h.b16 %v1248
      %v1285 = vunpack.c.l.b16 %v1249
      %v1286 = vunpack.c.h.b16 %v1249
      %v1287 = vunpack.c.l.b16 %v1250
      %v1288 = vunpack.c.h.b16 %v1250
      %v1289 = vunpack.c.l.b16 %v1251
      %v1290 = vunpack.c.h.b16 %v1251
      %v1291 = vunpack.c.l.b16 %v1252
      %v1292 = vunpack.c.h.b16 %v1252
      %v1293 = vunpack.c.l.b16 %v1253
      %v1294 = vunpack.c.h.b16 %v1253
      %v1295 = vunpack.c.l.b16 %v1254
      %v1296 = vunpack.c.h.b16 %v1254
      %v1297 = vunpack.c.l.b16 %v1255
      %v1298 = vunpack.c.h.b16 %v1255
      %v1299 = vunpack.c.l.b16 %v1256
      %v1300 = vunpack.c.h.b16 %v1256
      %v1301 = vunpack.c.l.b16 %v1257
      %v1302 = vunpack.c.h.b16 %v1257
      %v1303 = vunpack.c.l.b16 %v1258
      %v1304 = vunpack.c.h.b16 %v1258
      %v1305 = vunpack.c.l.b16 %v1259
      %v1306 = vunpack.c.h.b16 %v1259
      %v1307 = vunpack.c.l.b16 %v1260
      %v1308 = vunpack.c.h.b16 %v1260
      %v1309 = vpack.c.b16 %v1279, %v1277
      %v1310 = vpack.c.b16 %v1280, %v1278
      %v1311 = vpack.c.b16 %v1283, %v1281
      %v1312 = vpack.c.b16 %v1284, %v1282
      %v1313 = vpack.c.b16 %v1287, %v1285
      %v1314 = vpack.c.b16 %v1288, %v1286
      %v1315 = vpack.c.b16 %v1291, %v1289
      %v1316 = vpack.c.b16 %v1292, %v1290
      %v1317 = vpack.c.b16 %v1295, %v1293
      %v1318 = vpack.c.b16 %v1296, %v1294
      %v1319 = vpack.c.b16 %v1299, %v1297
      %v1320 = vpack.c.b16 %v1300, %v1298
      %v1321 = vpack.c.b16 %v1303, %v1301
      %v1322 = vpack.c.b16 %v1304, %v1302
      %v1323 = vpack.c.b16 %v1307, %v1305
      %v1324 = vpack.c.b16 %v1308, %v1306
      %1341 = vmatpush.bf16.msra.mxu0 %v1323
      %1342 = vmatpush.bf16.msra.mxu0 %v1321
      %1343 = vmatpush.bf16.msra.mxu0 %v1319
      %1344 = vmatpush.bf16.msra.mxu0 %v1317
      %1345 = vmatpush.bf16.msra.mxu0 %v1315
      %1346 = vmatpush.bf16.msra.mxu0 %v1313
      %1347 = vmatpush.bf16.msra.mxu0 %v1311
      %1348 = vmatpush.bf16.msra.mxu0 %v1309
      %1349 = vmatmul.bf16.gmra.mxu0 %v1230
      %v1350 = vpop.f32.mrf.mxu0
      %v1351 = vadd.f32 0.0, %v1350
      %v1352 = vpop.f32.mrf.mxu0
      %v1353 = vadd.f32 0.0, %v1352
      %1354 = vmatmul.bf16.gmra.mxu0 %v1231
      %v1355 = vpop.f32.mrf.mxu0
      %v1356 = vadd.f32 0.0, %v1355
      %v1357 = vpop.f32.mrf.mxu0
      %v1358 = vadd.f32 0.0, %v1357
      %1359 = vmatmul.bf16.gmra.mxu0 %v1232
      %v1360 = vpop.f32.mrf.mxu0
      %v1361 = vadd.f32 0.0, %v1360
      %v1362 = vpop.f32.mrf.mxu0
      %v1363 = vadd.f32 0.0, %v1362
      %1364 = vmatmul.bf16.gmra.mxu0 %v1233
      %v1365 = vpop.f32.mrf.mxu0
      %v1366 = vadd.f32 0.0, %v1365
      %v1367 = vpop.f32.mrf.mxu0
      %v1368 = vadd.f32 0.0, %v1367
      %1369 = vmatmul.bf16.gmra.mxu0 %v1234
      %v1370 = vpop.f32.mrf.mxu0
      %v1371 = vadd.f32 0.0, %v1370
      %v1372 = vpop.f32.mrf.mxu0
      %v1373 = vadd.f32 0.0, %v1372
      %1374 = vmatmul.bf16.gmra.mxu0 %v1235
      %v1375 = vpop.f32.mrf.mxu0
      %v1376 = vadd.f32 0.0, %v1375
      %v1377 = vpop.f32.mrf.mxu0
      %v1378 = vadd.f32 0.0, %v1377
      %1379 = vmatmul.bf16.gmra.mxu0 %v1236
      %v1380 = vpop.f32.mrf.mxu0
      %v1381 = vadd.f32 0.0, %v1380
      %v1382 = vpop.f32.mrf.mxu0
      %v1383 = vadd.f32 0.0, %v1382
      %1384 = vmatmul.bf16.gmra.mxu0 %v1237
      %v1385 = vpop.f32.mrf.mxu0
      %v1386 = vadd.f32 0.0, %v1385
      %v1387 = vpop.f32.mrf.mxu0
      %v1388 = vadd.f32 0.0, %v1387
      %1389 = vmatmul.bf16.gmra.mxu0 %v1238
      %v1390 = vpop.f32.mrf.mxu0
      %v1391 = vadd.f32 0.0, %v1390
      %v1392 = vpop.f32.mrf.mxu0
      %v1393 = vadd.f32 0.0, %v1392
      %1394 = vmatmul.bf16.gmra.mxu0 %v1239
      %v1395 = vpop.f32.mrf.mxu0
      %v1396 = vadd.f32 0.0, %v1395
      %v1397 = vpop.f32.mrf.mxu0
      %v1398 = vadd.f32 0.0, %v1397
      %1399 = vmatmul.bf16.gmra.mxu0 %v1240
      %v1400 = vpop.f32.mrf.mxu0
      %v1401 = vadd.f32 0.0, %v1400
      %v1402 = vpop.f32.mrf.mxu0
      %v1403 = vadd.f32 0.0, %v1402
      %1404 = vmatmul.bf16.gmra.mxu0 %v1241
      %v1405 = vpop.f32.mrf.mxu0
      %v1406 = vadd.f32 0.0, %v1405
      %v1407 = vpop.f32.mrf.mxu0
      %v1408 = vadd.f32 0.0, %v1407
      %1409 = vmatmul.bf16.gmra.mxu0 %v1242
      %v1410 = vpop.f32.mrf.mxu0
      %v1411 = vadd.f32 0.0, %v1410
      %v1412 = vpop.f32.mrf.mxu0
      %v1413 = vadd.f32 0.0, %v1412
      %1414 = vmatmul.bf16.gmra.mxu0 %v1243
      %v1415 = vpop.f32.mrf.mxu0
      %v1416 = vadd.f32 0.0, %v1415
      %v1417 = vpop.f32.mrf.mxu0
      %v1418 = vadd.f32 0.0, %v1417
      %1419 = vdwg.mxu0
      %1420 = vmatpush.bf16.msra.mxu0 %v1324
      %1421 = vmatpush.bf16.msra.mxu0 %v1322
      %1422 = vmatpush.bf16.msra.mxu0 %v1320
      %1423 = vmatpush.bf16.msra.mxu0 %v1318
      %1424 = vmatpush.bf16.msra.mxu0 %v1316
      %1425 = vmatpush.bf16.msra.mxu0 %v1314
      %1426 = vmatpush.bf16.msra.mxu0 %v1312
      %1427 = vmatpush.bf16.msra.mxu0 %v1310
      %1428 = vmatmul.bf16.gmra.mxu0 %v1230
      %v1429 = vpop.f32.mrf.mxu0
      %v1430 = vadd.f32 0.0, %v1429
      %v1431 = vpop.f32.mrf.mxu0
      %v1432 = vadd.f32 0.0, %v1431
      %1433 = vmatmul.bf16.gmra.mxu0 %v1231
      %v1434 = vpop.f32.mrf.mxu0
      %v1435 = vadd.f32 0.0, %v1434
      %v1436 = vpop.f32.mrf.mxu0
      %v1437 = vadd.f32 0.0, %v1436
      %1438 = vmatmul.bf16.gmra.mxu0 %v1232
      %v1439 = vpop.f32.mrf.mxu0
      %v1440 = vadd.f32 0.0, %v1439
      %v1441 = vpop.f32.mrf.mxu0
      %v1442 = vadd.f32 0.0, %v1441
      %1443 = vmatmul.bf16.gmra.mxu0 %v1233
      %v1444 = vpop.f32.mrf.mxu0
      %v1445 = vadd.f32 0.0, %v1444
      %v1446 = vpop.f32.mrf.mxu0
      %v1447 = vadd.f32 0.0, %v1446
      %1448 = vmatmul.bf16.gmra.mxu0 %v1234
      %v1449 = vpop.f32.mrf.mxu0
      %v1450 = vadd.f32 0.0, %v1449
      %v1451 = vpop.f32.mrf.mxu0
      %v1452 = vadd.f32 0.0, %v1451
      %1453 = vmatmul.bf16.gmra.mxu0 %v1235
      %v1454 = vpop.f32.mrf.mxu0
      %v1455 = vadd.f32 0.0, %v1454
      %v1456 = vpop.f32.mrf.mxu0
      %v1457 = vadd.f32 0.0, %v1456
      %1458 = vmatmul.bf16.gmra.mxu0 %v1236
      %v1459 = vpop.f32.mrf.mxu0
      %v1460 = vadd.f32 0.0, %v1459
      %v1461 = vpop.f32.mrf.mxu0
      %v1462 = vadd.f32 0.0, %v1461
      %1463 = vmatmul.bf16.gmra.mxu0 %v1237
      %v1464 = vpop.f32.mrf.mxu0
      %v1465 = vadd.f32 0.0, %v1464
      %v1466 = vpop.f32.mrf.mxu0
      %v1467 = vadd.f32 0.0, %v1466
      %1468 = vmatmul.bf16.gmra.mxu0 %v1238
      %v1469 = vpop.f32.mrf.mxu0
      %v1470 = vadd.f32 0.0, %v1469
      %v1471 = vpop.f32.mrf.mxu0
      %v1472 = vadd.f32 0.0, %v1471
      %1473 = vmatmul.bf16.gmra.mxu0 %v1239
      %v1474 = vpop.f32.mrf.mxu0
      %v1475 = vadd.f32 0.0, %v1474
      %v1476 = vpop.f32.mrf.mxu0
      %v1477 = vadd.f32 0.0, %v1476
      %1478 = vmatmul.bf16.gmra.mxu0 %v1240
      %v1479 = vpop.f32.mrf.mxu0
      %v1480 = vadd.f32 0.0, %v1479
      %v1481 = vpop.f32.mrf.mxu0
      %v1482 = vadd.f32 0.0, %v1481
      %1483 = vmatmul.bf16.gmra.mxu0 %v1241
      %v1484 = vpop.f32.mrf.mxu0
      %v1485 = vadd.f32 0.0, %v1484
      %v1486 = vpop.f32.mrf.mxu0
      %v1487 = vadd.f32 0.0, %v1486
      %1488 = vmatmul.bf16.gmra.mxu0 %v1242
      %v1489 = vpop.f32.mrf.mxu0
      %v1490 = vadd.f32 0.0, %v1489
      %v1491 = vpop.f32.mrf.mxu0
      %v1492 = vadd.f32 0.0, %v1491
      %1493 = vmatmul.bf16.gmra.mxu0 %v1243
      %v1494 = vpop.f32.mrf.mxu0
      %v1495 = vadd.f32 0.0, %v1494
      %v1496 = vpop.f32.mrf.mxu0
      %v1497 = vadd.f32 0.0, %v1496
      %1498 = vdwg.mxu0
      %v1499 = vld [vmem:[#allocation2] sm:$0xff]
      %v1500 = vld [vmem:[#allocation2 + $0x8] sm:$0xff]
      %v1501 = vld [vmem:[#allocation2 + $0x10] sm:$0xff]
      %v1502 = vld [vmem:[#allocation2 + $0x18] sm:$0xff]
      %v1503 = vld [vmem:[#allocation2 + $0x20] sm:$0xff]
      %v1504 = vld [vmem:[#allocation2 + $0x28] sm:$0xff]
      %v1505 = vld [vmem:[#allocation2 + $0x30] sm:$0xff]
      %v1506 = vld [vmem:[#allocation2 + $0x38] sm:$0xff]
      %v1507 = vld [vmem:[#allocation2 + $0x40] sm:$0xff]
      %v1508 = vld [vmem:[#allocation2 + $0x48] sm:$0xff]
      %v1509 = vld [vmem:[#allocation2 + $0x50] sm:$0xff]
      %v1510 = vld [vmem:[#allocation2 + $0x58] sm:$0xff]
      %v1511 = vld [vmem:[#allocation2 + $0x60] sm:$0xff]
      %v1512 = vld [vmem:[#allocation2 + $0x68] sm:$0xff]
      %v1513 = vld [vmem:[#allocation2 + $0x70] sm:$0xff]
      %v1514 = vld [vmem:[#allocation2 + $0x78] sm:$0xff]
      %v1515 = vld [vmem:[#allocation2 + $0x80] sm:$0xff]
      %v1516 = vld [vmem:[#allocation2 + $0x88] sm:$0xff]
      %v1517 = vld [vmem:[#allocation2 + $0x90] sm:$0xff]
      %v1518 = vld [vmem:[#allocation2 + $0x98] sm:$0xff]
      %v1519 = vld [vmem:[#allocation2 + $0xa0] sm:$0xff]
      %v1520 = vld [vmem:[#allocation2 + $0xa8] sm:$0xff]
      %v1521 = vld [vmem:[#allocation2 + $0xb0] sm:$0xff]
      %v1522 = vld [vmem:[#allocation2 + $0xb8] sm:$0xff]
      %v1523 = vld [vmem:[#allocation2 + $0xc0] sm:$0xff]
      %v1524 = vld [vmem:[#allocation2 + $0xc8] sm:$0xff]
      %v1525 = vld [vmem:[#allocation2 + $0xd0] sm:$0xff]
      %v1526 = vld [vmem:[#allocation2 + $0xd8] sm:$0xff]
      %v1527 = vld [vmem:[#allocation2 + $0xe0] sm:$0xff]
      %v1528 = vld [vmem:[#allocation2 + $0xe8] sm:$0xff]
      %v1529 = vld [vmem:[#allocation2 + $0xf0] sm:$0xff]
      %v1530 = vld [vmem:[#allocation2 + $0xf8] sm:$0xff]
      %v1531 = vld [vmem:[#allocation2 + $0x100] sm:$0xff]
      %v1532 = vld [vmem:[#allocation2 + $0x108] sm:$0xff]
      %v1533 = vld [vmem:[#allocation2 + $0x110] sm:$0xff]
      %v1534 = vld [vmem:[#allocation2 + $0x118] sm:$0xff]
      %v1535 = vld [vmem:[#allocation2 + $0x120] sm:$0xff]
      %v1536 = vld [vmem:[#allocation2 + $0x128] sm:$0xff]
      %v1537 = vld [vmem:[#allocation2 + $0x130] sm:$0xff]
      %v1538 = vld [vmem:[#allocation2 + $0x138] sm:$0xff]
      %v1539 = vld [vmem:[#allocation2 + $0x140] sm:$0xff]
      %v1540 = vld [vmem:[#allocation2 + $0x148] sm:$0xff]
      %v1541 = vld [vmem:[#allocation2 + $0x150] sm:$0xff]
      %v1542 = vld [vmem:[#allocation2 + $0x158] sm:$0xff]
      %v1543 = vld [vmem:[#allocation2 + $0x160] sm:$0xff]
      %v1544 = vld [vmem:[#allocation2 + $0x168] sm:$0xff]
      %v1545 = vld [vmem:[#allocation2 + $0x170] sm:$0xff]
      %v1546 = vld [vmem:[#allocation2 + $0x178] sm:$0xff]
      %v1547 = vld [vmem:[#allocation2 + $0x180] sm:$0xff]
      %v1548 = vld [vmem:[#allocation2 + $0x188] sm:$0xff]
      %v1549 = vld [vmem:[#allocation2 + $0x190] sm:$0xff]
      %v1550 = vld [vmem:[#allocation2 + $0x198] sm:$0xff]
      %v1551 = vld [vmem:[#allocation2 + $0x1a0] sm:$0xff]
      %v1552 = vld [vmem:[#allocation2 + $0x1a8] sm:$0xff]
      %v1553 = vld [vmem:[#allocation2 + $0x1b0] sm:$0xff]
      %v1554 = vld [vmem:[#allocation2 + $0x1b8] sm:$0xff]
      %v1555 = vadd.f32 %v1499, %v1351
      %v1556 = vadd.f32 %v1500, %v1430
      %v1557 = vadd.f32 %v1501, %v1353
      %v1558 = vadd.f32 %v1502, %v1432
      %v1559 = vadd.f32 %v1503, %v1356
      %v1560 = vadd.f32 %v1504, %v1435
      %v1561 = vadd.f32 %v1505, %v1358
      %v1562 = vadd.f32 %v1506, %v1437
      %v1563 = vadd.f32 %v1507, %v1361
      %v1564 = vadd.f32 %v1508, %v1440
      %v1565 = vadd.f32 %v1509, %v1363
      %v1566 = vadd.f32 %v1510, %v1442
      %v1567 = vadd.f32 %v1511, %v1366
      %v1568 = vadd.f32 %v1512, %v1445
      %v1569 = vadd.f32 %v1513, %v1368
      %v1570 = vadd.f32 %v1514, %v1447
      %v1571 = vadd.f32 %v1515, %v1371
      %v1572 = vadd.f32 %v1516, %v1450
      %v1573 = vadd.f32 %v1517, %v1373
      %v1574 = vadd.f32 %v1518, %v1452
      %v1575 = vadd.f32 %v1519, %v1376
      %v1576 = vadd.f32 %v1520, %v1455
      %v1577 = vadd.f32 %v1521, %v1378
      %v1578 = vadd.f32 %v1522, %v1457
      %v1579 = vadd.f32 %v1523, %v1381
      %v1580 = vadd.f32 %v1524, %v1460
      %v1581 = vadd.f32 %v1525, %v1383
      %v1582 = vadd.f32 %v1526, %v1462
      %v1583 = vadd.f32 %v1527, %v1386
      %v1584 = vadd.f32 %v1528, %v1465
      %v1585 = vadd.f32 %v1529, %v1388
      %v1586 = vadd.f32 %v1530, %v1467
      %v1587 = vadd.f32 %v1531, %v1391
      %v1588 = vadd.f32 %v1532, %v1470
      %v1589 = vadd.f32 %v1533, %v1393
      %v1590 = vadd.f32 %v1534, %v1472
      %v1591 = vadd.f32 %v1535, %v1396
      %v1592 = vadd.f32 %v1536, %v1475
      %v1593 = vadd.f32 %v1537, %v1398
      %v1594 = vadd.f32 %v1538, %v1477
      %v1595 = vadd.f32 %v1539, %v1401
      %v1596 = vadd.f32 %v1540, %v1480
      %v1597 = vadd.f32 %v1541, %v1403
      %v1598 = vadd.f32 %v1542, %v1482
      %v1599 = vadd.f32 %v1543, %v1406
      %v1600 = vadd.f32 %v1544, %v1485
      %v1601 = vadd.f32 %v1545, %v1408
      %v1602 = vadd.f32 %v1546, %v1487
      %v1603 = vadd.f32 %v1547, %v1411
      %v1604 = vadd.f32 %v1548, %v1490
      %v1605 = vadd.f32 %v1549, %v1413
      %v1606 = vadd.f32 %v1550, %v1492
      %v1607 = vadd.f32 %v1551, %v1416
      %v1608 = vadd.f32 %v1552, %v1495
      %v1609 = vadd.f32 %v1553, %v1418
      %v1610 = vadd.f32 %v1554, %v1497
      %1611 = vst [vmem:[#allocation2] sm:$0xff] %v1555
      %1612 = vst [vmem:[#allocation2 + $0x8] sm:$0xff] %v1556
      %1613 = vst [vmem:[#allocation2 + $0x10] sm:$0xff] %v1557
      %1614 = vst [vmem:[#allocation2 + $0x18] sm:$0xff] %v1558
      %1615 = vst [vmem:[#allocation2 + $0x20] sm:$0xff] %v1559
      %1616 = vst [vmem:[#allocation2 + $0x28] sm:$0xff] %v1560
      %1617 = vst [vmem:[#allocation2 + $0x30] sm:$0xff] %v1561
      %1618 = vst [vmem:[#allocation2 + $0x38] sm:$0xff] %v1562
      %1619 = vst [vmem:[#allocation2 + $0x40] sm:$0xff] %v1563
      %1620 = vst [vmem:[#allocation2 + $0x48] sm:$0xff] %v1564
      %1621 = vst [vmem:[#allocation2 + $0x50] sm:$0xff] %v1565
      %1622 = vst [vmem:[#allocation2 + $0x58] sm:$0xff] %v1566
      %1623 = vst [vmem:[#allocation2 + $0x60] sm:$0xff] %v1567
      %1624 = vst [vmem:[#allocation2 + $0x68] sm:$0xff] %v1568
      %1625 = vst [vmem:[#allocation2 + $0x70] sm:$0xff] %v1569
      %1626 = vst [vmem:[#allocation2 + $0x78] sm:$0xff] %v1570
      %1627 = vst [vmem:[#allocation2 + $0x80] sm:$0xff] %v1571
      %1628 = vst [vmem:[#allocation2 + $0x88] sm:$0xff] %v1572
      %1629 = vst [vmem:[#allocation2 + $0x90] sm:$0xff] %v1573
      %1630 = vst [vmem:[#allocation2 + $0x98] sm:$0xff] %v1574
      %1631 = vst [vmem:[#allocation2 + $0xa0] sm:$0xff] %v1575
      %1632 = vst [vmem:[#allocation2 + $0xa8] sm:$0xff] %v1576
      %1633 = vst [vmem:[#allocation2 + $0xb0] sm:$0xff] %v1577
      %1634 = vst [vmem:[#allocation2 + $0xb8] sm:$0xff] %v1578
      %1635 = vst [vmem:[#allocation2 + $0xc0] sm:$0xff] %v1579
      %1636 = vst [vmem:[#allocation2 + $0xc8] sm:$0xff] %v1580
      %1637 = vst [vmem:[#allocation2 + $0xd0] sm:$0xff] %v1581
      %1638 = vst [vmem:[#allocation2 + $0xd8] sm:$0xff] %v1582
      %1639 = vst [vmem:[#allocation2 + $0xe0] sm:$0xff] %v1583
      %1640 = vst [vmem:[#allocation2 + $0xe8] sm:$0xff] %v1584
      %1641 = vst [vmem:[#allocation2 + $0xf0] sm:$0xff] %v1585
      %1642 = vst [vmem:[#allocation2 + $0xf8] sm:$0xff] %v1586
      %1643 = vst [vmem:[#allocation2 + $0x100] sm:$0xff] %v1587
      %1644 = vst [vmem:[#allocation2 + $0x108] sm:$0xff] %v1588
      %1645 = vst [vmem:[#allocation2 + $0x110] sm:$0xff] %v1589
      %1646 = vst [vmem:[#allocation2 + $0x118] sm:$0xff] %v1590
      %1647 = vst [vmem:[#allocation2 + $0x120] sm:$0xff] %v1591
      %1648 = vst [vmem:[#allocation2 + $0x128] sm:$0xff] %v1592
      %1649 = vst [vmem:[#allocation2 + $0x130] sm:$0xff] %v1593
      %1650 = vst [vmem:[#allocation2 + $0x138] sm:$0xff] %v1594
      %1651 = vst [vmem:[#allocation2 + $0x140] sm:$0xff] %v1595
      %1652 = vst [vmem:[#allocation2 + $0x148] sm:$0xff] %v1596
      %1653 = vst [vmem:[#allocation2 + $0x150] sm:$0xff] %v1597
      %1654 = vst [vmem:[#allocation2 + $0x158] sm:$0xff] %v1598
      %1655 = vst [vmem:[#allocation2 + $0x160] sm:$0xff] %v1599
      %1656 = vst [vmem:[#allocation2 + $0x168] sm:$0xff] %v1600
      %1657 = vst [vmem:[#allocation2 + $0x170] sm:$0xff] %v1601
      %1658 = vst [vmem:[#allocation2 + $0x178] sm:$0xff] %v1602
      %1659 = vst [vmem:[#allocation2 + $0x180] sm:$0xff] %v1603
      %1660 = vst [vmem:[#allocation2 + $0x188] sm:$0xff] %v1604
      %1661 = vst [vmem:[#allocation2 + $0x190] sm:$0xff] %v1605
      %1662 = vst [vmem:[#allocation2 + $0x198] sm:$0xff] %v1606
      %1663 = vst [vmem:[#allocation2 + $0x1a0] sm:$0xff] %v1607
      %1664 = vst [vmem:[#allocation2 + $0x1a8] sm:$0xff] %v1608
      %1665 = vst [vmem:[#allocation2 + $0x1b0] sm:$0xff] %v1609
      %1666 = vst [vmem:[#allocation2 + $0x1b8] sm:$0xff] %v1610
      %v1667 = vld [vmem:[%s380 + $0x18] sm:$0xff]
      %v1668 = vld [vmem:[%s380 + $0x20] sm:$0xff]
      %v1669 = vld [vmem:[%s380 + $0x28] sm:$0xff]
      %v1670 = vld [vmem:[%s380 + $0x30] sm:$0xff]
      %v1671 = vld [vmem:[%s380 + $0x38] sm:$0xff]
      %v1672 = vld [vmem:[%s380 + $0x40] sm:$0xff]
      %v1673 = vld [vmem:[%s380 + $0x48] sm:$0xff]
      %v1674 = vld [vmem:[%s380 + $0x50] sm:$0xff]
      %v1675 = vld [vmem:[%s380 + $0x58] sm:$0xff]
      %v1676 = vld [vmem:[%s380 + $0x60] sm:$0xff]
      %v1677 = vld [vmem:[%s380 + $0x68] sm:$0xff]
      %v1678 = vld [vmem:[%s380 + $0x70] sm:$0xff]
      %v1679 = vld [vmem:[%s380 + $0x78] sm:$0xff]
      %v1680 = vld [vmem:[%s380 + $0x80] sm:$0xff]
      %v1681 = vld [vmem:[%s380 + $0x88] sm:$0xff]
      %v1682 = vld [vmem:[%s380 + $0x90] sm:$0xff]
      %v1683 = vld [vmem:[%s380 + $0x98] sm:$0xff]
      %v1684 = vld [vmem:[%s380 + $0xa0] sm:$0xff]
      %v1685 = vld [vmem:[%s380 + $0xa8] sm:$0xff]
      %v1686 = vld [vmem:[%s380 + $0xb0] sm:$0xff]
      %v1687 = vld [vmem:[%s380 + $0xb8] sm:$0xff]
      %v1688 = vld [vmem:[%s380 + $0xc0] sm:$0xff]
      %v1689 = vld [vmem:[%s380 + $0xc8] sm:$0xff]
      %v1690 = vld [vmem:[%s380 + $0xd0] sm:$0xff]
      %v1691 = vld [vmem:[%s380 + $0xd8] sm:$0xff]
      %v1692 = vld [vmem:[%s380 + $0xe0] sm:$0xff]
      %v1693 = vld [vmem:[%s380 + $0xe8] sm:$0xff]
      %v1694 = vld [vmem:[%s380 + $0xf0] sm:$0xff]
      %v1695 = vpack.c.bf16 %v1668, %v1667
      %v1696 = vpack.c.bf16 %v1670, %v1669
      %v1697 = vpack.c.bf16 %v1672, %v1671
      %v1698 = vpack.c.bf16 %v1674, %v1673
      %v1699 = vpack.c.bf16 %v1676, %v1675
      %v1700 = vpack.c.bf16 %v1678, %v1677
      %v1701 = vpack.c.bf16 %v1680, %v1679
      %v1702 = vpack.c.bf16 %v1682, %v1681
      %v1703 = vpack.c.bf16 %v1684, %v1683
      %v1704 = vpack.c.bf16 %v1686, %v1685
      %v1705 = vpack.c.bf16 %v1688, %v1687
      %v1706 = vpack.c.bf16 %v1690, %v1689
      %v1707 = vpack.c.bf16 %v1692, %v1691
      %v1708 = vpack.c.bf16 %v1694, %v1693
      %s1709 = scalar_lea.vmem %s1, 384
      %v1710 = vld [vmem:[%s1709] sm:$0xff]
      %v1711 = vld [vmem:[%s1709 + $0x8] sm:$0xff]
      %v1712 = vld [vmem:[%s1709 + $0x10] sm:$0xff]
      %v1713 = vld [vmem:[%s1709 + $0x18] sm:$0xff]
      %v1714 = vld [vmem:[%s1709 + $0x20] sm:$0xff]
      %v1715 = vld [vmem:[%s1709 + $0x28] sm:$0xff]
      %v1716 = vld [vmem:[%s1709 + $0x30] sm:$0xff]
      %v1717 = vld [vmem:[%s1709 + $0x38] sm:$0xff]
      %v1718 = vld [vmem:[%s1709 + $0x40] sm:$0xff]
      %v1719 = vld [vmem:[%s1709 + $0x48] sm:$0xff]
      %v1720 = vld [vmem:[%s1709 + $0x50] sm:$0xff]
      %v1721 = vld [vmem:[%s1709 + $0x58] sm:$0xff]
      %v1722 = vld [vmem:[%s1709 + $0x60] sm:$0xff]
      %v1723 = vld [vmem:[%s1709 + $0x68] sm:$0xff]
      %v1724 = vld [vmem:[%s1709 + $0x70] sm:$0xff]
      %v1725 = vld [vmem:[%s1709 + $0x78] sm:$0xff]
      %v1742 = vunpack.c.l.b16 %v1710
      %v1743 = vunpack.c.h.b16 %v1710
      %v1744 = vunpack.c.l.b16 %v1711
      %v1745 = vunpack.c.h.b16 %v1711
      %v1746 = vunpack.c.l.b16 %v1712
      %v1747 = vunpack.c.h.b16 %v1712
      %v1748 = vunpack.c.l.b16 %v1713
      %v1749 = vunpack.c.h.b16 %v1713
      %v1750 = vunpack.c.l.b16 %v1714
      %v1751 = vunpack.c.h.b16 %v1714
      %v1752 = vunpack.c.l.b16 %v1715
      %v1753 = vunpack.c.h.b16 %v1715
      %v1754 = vunpack.c.l.b16 %v1716
      %v1755 = vunpack.c.h.b16 %v1716
      %v1756 = vunpack.c.l.b16 %v1717
      %v1757 = vunpack.c.h.b16 %v1717
      %v1758 = vunpack.c.l.b16 %v1718
      %v1759 = vunpack.c.h.b16 %v1718
      %v1760 = vunpack.c.l.b16 %v1719
      %v1761 = vunpack.c.h.b16 %v1719
      %v1762 = vunpack.c.l.b16 %v1720
      %v1763 = vunpack.c.h.b16 %v1720
      %v1764 = vunpack.c.l.b16 %v1721
      %v1765 = vunpack.c.h.b16 %v1721
      %v1766 = vunpack.c.l.b16 %v1722
      %v1767 = vunpack.c.h.b16 %v1722
      %v1768 = vunpack.c.l.b16 %v1723
      %v1769 = vunpack.c.h.b16 %v1723
      %v1770 = vunpack.c.l.b16 %v1724
      %v1771 = vunpack.c.h.b16 %v1724
      %v1772 = vunpack.c.l.b16 %v1725
      %v1773 = vunpack.c.h.b16 %v1725
      %v1774 = vpack.c.b16 %v1744, %v1742
      %v1775 = vpack.c.b16 %v1745, %v1743
      %v1776 = vpack.c.b16 %v1748, %v1746
      %v1777 = vpack.c.b16 %v1749, %v1747
      %v1778 = vpack.c.b16 %v1752, %v1750
      %v1779 = vpack.c.b16 %v1753, %v1751
      %v1780 = vpack.c.b16 %v1756, %v1754
      %v1781 = vpack.c.b16 %v1757, %v1755
      %v1782 = vpack.c.b16 %v1760, %v1758
      %v1783 = vpack.c.b16 %v1761, %v1759
      %v1784 = vpack.c.b16 %v1764, %v1762
      %v1785 = vpack.c.b16 %v1765, %v1763
      %v1786 = vpack.c.b16 %v1768, %v1766
      %v1787 = vpack.c.b16 %v1769, %v1767
      %v1788 = vpack.c.b16 %v1772, %v1770
      %v1789 = vpack.c.b16 %v1773, %v1771
      %1806 = vmatpush.bf16.msra.mxu0 %v1788
      %1807 = vmatpush.bf16.msra.mxu0 %v1786
      %1808 = vmatpush.bf16.msra.mxu0 %v1784
      %1809 = vmatpush.bf16.msra.mxu0 %v1782
      %1810 = vmatpush.bf16.msra.mxu0 %v1780
      %1811 = vmatpush.bf16.msra.mxu0 %v1778
      %1812 = vmatpush.bf16.msra.mxu0 %v1776
      %1813 = vmatpush.bf16.msra.mxu0 %v1774
      %1814 = vmatmul.bf16.gmra.mxu0 %v1695
      %v1815 = vpop.f32.mrf.mxu0
      %v1816 = vadd.f32 0.0, %v1815
      %v1817 = vpop.f32.mrf.mxu0
      %v1818 = vadd.f32 0.0, %v1817
      %1819 = vmatmul.bf16.gmra.mxu0 %v1696
      %v1820 = vpop.f32.mrf.mxu0
      %v1821 = vadd.f32 0.0, %v1820
      %v1822 = vpop.f32.mrf.mxu0
      %v1823 = vadd.f32 0.0, %v1822
      %1824 = vmatmul.bf16.gmra.mxu0 %v1697
      %v1825 = vpop.f32.mrf.mxu0
      %v1826 = vadd.f32 0.0, %v1825
      %v1827 = vpop.f32.mrf.mxu0
      %v1828 = vadd.f32 0.0, %v1827
      %1829 = vmatmul.bf16.gmra.mxu0 %v1698
      %v1830 = vpop.f32.mrf.mxu0
      %v1831 = vadd.f32 0.0, %v1830
      %v1832 = vpop.f32.mrf.mxu0
      %v1833 = vadd.f32 0.0, %v1832
      %1834 = vmatmul.bf16.gmra.mxu0 %v1699
      %v1835 = vpop.f32.mrf.mxu0
      %v1836 = vadd.f32 0.0, %v1835
      %v1837 = vpop.f32.mrf.mxu0
      %v1838 = vadd.f32 0.0, %v1837
      %1839 = vmatmul.bf16.gmra.mxu0 %v1700
      %v1840 = vpop.f32.mrf.mxu0
      %v1841 = vadd.f32 0.0, %v1840
      %v1842 = vpop.f32.mrf.mxu0
      %v1843 = vadd.f32 0.0, %v1842
      %1844 = vmatmul.bf16.gmra.mxu0 %v1701
      %v1845 = vpop.f32.mrf.mxu0
      %v1846 = vadd.f32 0.0, %v1845
      %v1847 = vpop.f32.mrf.mxu0
      %v1848 = vadd.f32 0.0, %v1847
      %1849 = vmatmul.bf16.gmra.mxu0 %v1702
      %v1850 = vpop.f32.mrf.mxu0
      %v1851 = vadd.f32 0.0, %v1850
      %v1852 = vpop.f32.mrf.mxu0
      %v1853 = vadd.f32 0.0, %v1852
      %1854 = vmatmul.bf16.gmra.mxu0 %v1703
      %v1855 = vpop.f32.mrf.mxu0
      %v1856 = vadd.f32 0.0, %v1855
      %v1857 = vpop.f32.mrf.mxu0
      %v1858 = vadd.f32 0.0, %v1857
      %1859 = vmatmul.bf16.gmra.mxu0 %v1704
      %v1860 = vpop.f32.mrf.mxu0
      %v1861 = vadd.f32 0.0, %v1860
      %v1862 = vpop.f32.mrf.mxu0
      %v1863 = vadd.f32 0.0, %v1862
      %1864 = vmatmul.bf16.gmra.mxu0 %v1705
      %v1865 = vpop.f32.mrf.mxu0
      %v1866 = vadd.f32 0.0, %v1865
      %v1867 = vpop.f32.mrf.mxu0
      %v1868 = vadd.f32 0.0, %v1867
      %1869 = vmatmul.bf16.gmra.mxu0 %v1706
      %v1870 = vpop.f32.mrf.mxu0
      %v1871 = vadd.f32 0.0, %v1870
      %v1872 = vpop.f32.mrf.mxu0
      %v1873 = vadd.f32 0.0, %v1872
      %1874 = vmatmul.bf16.gmra.mxu0 %v1707
      %v1875 = vpop.f32.mrf.mxu0
      %v1876 = vadd.f32 0.0, %v1875
      %v1877 = vpop.f32.mrf.mxu0
      %v1878 = vadd.f32 0.0, %v1877
      %1879 = vmatmul.bf16.gmra.mxu0 %v1708
      %v1880 = vpop.f32.mrf.mxu0
      %v1881 = vadd.f32 0.0, %v1880
      %v1882 = vpop.f32.mrf.mxu0
      %v1883 = vadd.f32 0.0, %v1882
      %1884 = vdwg.mxu0
      %1885 = vmatpush.bf16.msra.mxu0 %v1789
      %1886 = vmatpush.bf16.msra.mxu0 %v1787
      %1887 = vmatpush.bf16.msra.mxu0 %v1785
      %1888 = vmatpush.bf16.msra.mxu0 %v1783
      %1889 = vmatpush.bf16.msra.mxu0 %v1781
      %1890 = vmatpush.bf16.msra.mxu0 %v1779
      %1891 = vmatpush.bf16.msra.mxu0 %v1777
      %1892 = vmatpush.bf16.msra.mxu0 %v1775
      %1893 = vmatmul.bf16.gmra.mxu0 %v1695
      %v1894 = vpop.f32.mrf.mxu0
      %v1895 = vadd.f32 0.0, %v1894
      %v1896 = vpop.f32.mrf.mxu0
      %v1897 = vadd.f32 0.0, %v1896
      %1898 = vmatmul.bf16.gmra.mxu0 %v1696
      %v1899 = vpop.f32.mrf.mxu0
      %v1900 = vadd.f32 0.0, %v1899
      %v1901 = vpop.f32.mrf.mxu0
      %v1902 = vadd.f32 0.0, %v1901
      %1903 = vmatmul.bf16.gmra.mxu0 %v1697
      %v1904 = vpop.f32.mrf.mxu0
      %v1905 = vadd.f32 0.0, %v1904
      %v1906 = vpop.f32.mrf.mxu0
      %v1907 = vadd.f32 0.0, %v1906
      %1908 = vmatmul.bf16.gmra.mxu0 %v1698
      %v1909 = vpop.f32.mrf.mxu0
      %v1910 = vadd.f32 0.0, %v1909
      %v1911 = vpop.f32.mrf.mxu0
      %v1912 = vadd.f32 0.0, %v1911
      %1913 = vmatmul.bf16.gmra.mxu0 %v1699
      %v1914 = vpop.f32.mrf.mxu0
      %v1915 = vadd.f32 0.0, %v1914
      %v1916 = vpop.f32.mrf.mxu0
      %v1917 = vadd.f32 0.0, %v1916
      %1918 = vmatmul.bf16.gmra.mxu0 %v1700
      %v1919 = vpop.f32.mrf.mxu0
      %v1920 = vadd.f32 0.0, %v1919
      %v1921 = vpop.f32.mrf.mxu0
      %v1922 = vadd.f32 0.0, %v1921
      %1923 = vmatmul.bf16.gmra.mxu0 %v1701
      %v1924 = vpop.f32.mrf.mxu0
      %v1925 = vadd.f32 0.0, %v1924
      %v1926 = vpop.f32.mrf.mxu0
      %v1927 = vadd.f32 0.0, %v1926
      %1928 = vmatmul.bf16.gmra.mxu0 %v1702
      %v1929 = vpop.f32.mrf.mxu0
      %v1930 = vadd.f32 0.0, %v1929
      %v1931 = vpop.f32.mrf.mxu0
      %v1932 = vadd.f32 0.0, %v1931
      %1933 = vmatmul.bf16.gmra.mxu0 %v1703
      %v1934 = vpop.f32.mrf.mxu0
      %v1935 = vadd.f32 0.0, %v1934
      %v1936 = vpop.f32.mrf.mxu0
      %v1937 = vadd.f32 0.0, %v1936
      %1938 = vmatmul.bf16.gmra.mxu0 %v1704
      %v1939 = vpop.f32.mrf.mxu0
      %v1940 = vadd.f32 0.0, %v1939
      %v1941 = vpop.f32.mrf.mxu0
      %v1942 = vadd.f32 0.0, %v1941
      %1943 = vmatmul.bf16.gmra.mxu0 %v1705
      %v1944 = vpop.f32.mrf.mxu0
      %v1945 = vadd.f32 0.0, %v1944
      %v1946 = vpop.f32.mrf.mxu0
      %v1947 = vadd.f32 0.0, %v1946
      %1948 = vmatmul.bf16.gmra.mxu0 %v1706
      %v1949 = vpop.f32.mrf.mxu0
      %v1950 = vadd.f32 0.0, %v1949
      %v1951 = vpop.f32.mrf.mxu0
      %v1952 = vadd.f32 0.0, %v1951
      %1953 = vmatmul.bf16.gmra.mxu0 %v1707
      %v1954 = vpop.f32.mrf.mxu0
      %v1955 = vadd.f32 0.0, %v1954
      %v1956 = vpop.f32.mrf.mxu0
      %v1957 = vadd.f32 0.0, %v1956
      %1958 = vmatmul.bf16.gmra.mxu0 %v1708
      %v1959 = vpop.f32.mrf.mxu0
      %v1960 = vadd.f32 0.0, %v1959
      %v1961 = vpop.f32.mrf.mxu0
      %v1962 = vadd.f32 0.0, %v1961
      %1963 = vdwg.mxu0
      %v1964 = vld [vmem:[#allocation2] sm:$0xff]
      %v1965 = vld [vmem:[#allocation2 + $0x8] sm:$0xff]
      %v1966 = vld [vmem:[#allocation2 + $0x10] sm:$0xff]
      %v1967 = vld [vmem:[#allocation2 + $0x18] sm:$0xff]
      %v1968 = vld [vmem:[#allocation2 + $0x20] sm:$0xff]
      %v1969 = vld [vmem:[#allocation2 + $0x28] sm:$0xff]
      %v1970 = vld [vmem:[#allocation2 + $0x30] sm:$0xff]
      %v1971 = vld [vmem:[#allocation2 + $0x38] sm:$0xff]
      %v1972 = vld [vmem:[#allocation2 + $0x40] sm:$0xff]
      %v1973 = vld [vmem:[#allocation2 + $0x48] sm:$0xff]
      %v1974 = vld [vmem:[#allocation2 + $0x50] sm:$0xff]
      %v1975 = vld [vmem:[#allocation2 + $0x58] sm:$0xff]
      %v1976 = vld [vmem:[#allocation2 + $0x60] sm:$0xff]
      %v1977 = vld [vmem:[#allocation2 + $0x68] sm:$0xff]
      %v1978 = vld [vmem:[#allocation2 + $0x70] sm:$0xff]
      %v1979 = vld [vmem:[#allocation2 + $0x78] sm:$0xff]
      %v1980 = vld [vmem:[#allocation2 + $0x80] sm:$0xff]
      %v1981 = vld [vmem:[#allocation2 + $0x88] sm:$0xff]
      %v1982 = vld [vmem:[#allocation2 + $0x90] sm:$0xff]
      %v1983 = vld [vmem:[#allocation2 + $0x98] sm:$0xff]
      %v1984 = vld [vmem:[#allocation2 + $0xa0] sm:$0xff]
      %v1985 = vld [vmem:[#allocation2 + $0xa8] sm:$0xff]
      %v1986 = vld [vmem:[#allocation2 + $0xb0] sm:$0xff]
      %v1987 = vld [vmem:[#allocation2 + $0xb8] sm:$0xff]
      %v1988 = vld [vmem:[#allocation2 + $0xc0] sm:$0xff]
      %v1989 = vld [vmem:[#allocation2 + $0xc8] sm:$0xff]
      %v1990 = vld [vmem:[#allocation2 + $0xd0] sm:$0xff]
      %v1991 = vld [vmem:[#allocation2 + $0xd8] sm:$0xff]
      %v1992 = vld [vmem:[#allocation2 + $0xe0] sm:$0xff]
      %v1993 = vld [vmem:[#allocation2 + $0xe8] sm:$0xff]
      %v1994 = vld [vmem:[#allocation2 + $0xf0] sm:$0xff]
      %v1995 = vld [vmem:[#allocation2 + $0xf8] sm:$0xff]
      %v1996 = vld [vmem:[#allocation2 + $0x100] sm:$0xff]
      %v1997 = vld [vmem:[#allocation2 + $0x108] sm:$0xff]
      %v1998 = vld [vmem:[#allocation2 + $0x110] sm:$0xff]
      %v1999 = vld [vmem:[#allocation2 + $0x118] sm:$0xff]
      %v2000 = vld [vmem:[#allocation2 + $0x120] sm:$0xff]
      %v2001 = vld [vmem:[#allocation2 + $0x128] sm:$0xff]
      %v2002 = vld [vmem:[#allocation2 + $0x130] sm:$0xff]
      %v2003 = vld [vmem:[#allocation2 + $0x138] sm:$0xff]
      %v2004 = vld [vmem:[#allocation2 + $0x140] sm:$0xff]
      %v2005 = vld [vmem:[#allocation2 + $0x148] sm:$0xff]
      %v2006 = vld [vmem:[#allocation2 + $0x150] sm:$0xff]
      %v2007 = vld [vmem:[#allocation2 + $0x158] sm:$0xff]
      %v2008 = vld [vmem:[#allocation2 + $0x160] sm:$0xff]
      %v2009 = vld [vmem:[#allocation2 + $0x168] sm:$0xff]
      %v2010 = vld [vmem:[#allocation2 + $0x170] sm:$0xff]
      %v2011 = vld [vmem:[#allocation2 + $0x178] sm:$0xff]
      %v2012 = vld [vmem:[#allocation2 + $0x180] sm:$0xff]
      %v2013 = vld [vmem:[#allocation2 + $0x188] sm:$0xff]
      %v2014 = vld [vmem:[#allocation2 + $0x190] sm:$0xff]
      %v2015 = vld [vmem:[#allocation2 + $0x198] sm:$0xff]
      %v2016 = vld [vmem:[#allocation2 + $0x1a0] sm:$0xff]
      %v2017 = vld [vmem:[#allocation2 + $0x1a8] sm:$0xff]
      %v2018 = vld [vmem:[#allocation2 + $0x1b0] sm:$0xff]
      %v2019 = vld [vmem:[#allocation2 + $0x1b8] sm:$0xff]
      %v2020 = vadd.f32 %v1964, %v1816
      %v2021 = vadd.f32 %v1965, %v1895
      %v2022 = vadd.f32 %v1966, %v1818
      %v2023 = vadd.f32 %v1967, %v1897
      %v2024 = vadd.f32 %v1968, %v1821
      %v2025 = vadd.f32 %v1969, %v1900
      %v2026 = vadd.f32 %v1970, %v1823
      %v2027 = vadd.f32 %v1971, %v1902
      %v2028 = vadd.f32 %v1972, %v1826
      %v2029 = vadd.f32 %v1973, %v1905
      %v2030 = vadd.f32 %v1974, %v1828
      %v2031 = vadd.f32 %v1975, %v1907
      %v2032 = vadd.f32 %v1976, %v1831
      %v2033 = vadd.f32 %v1977, %v1910
      %v2034 = vadd.f32 %v1978, %v1833
      %v2035 = vadd.f32 %v1979, %v1912
      %v2036 = vadd.f32 %v1980, %v1836
      %v2037 = vadd.f32 %v1981, %v1915
      %v2038 = vadd.f32 %v1982, %v1838
      %v2039 = vadd.f32 %v1983, %v1917
      %v2040 = vadd.f32 %v1984, %v1841
      %v2041 = vadd.f32 %v1985, %v1920
      %v2042 = vadd.f32 %v1986, %v1843
      %v2043 = vadd.f32 %v1987, %v1922
      %v2044 = vadd.f32 %v1988, %v1846
      %v2045 = vadd.f32 %v1989, %v1925
      %v2046 = vadd.f32 %v1990, %v1848
      %v2047 = vadd.f32 %v1991, %v1927
      %v2048 = vadd.f32 %v1992, %v1851
      %v2049 = vadd.f32 %v1993, %v1930
      %v2050 = vadd.f32 %v1994, %v1853
      %v2051 = vadd.f32 %v1995, %v1932
      %v2052 = vadd.f32 %v1996, %v1856
      %v2053 = vadd.f32 %v1997, %v1935
      %v2054 = vadd.f32 %v1998, %v1858
      %v2055 = vadd.f32 %v1999, %v1937
      %v2056 = vadd.f32 %v2000, %v1861
      %v2057 = vadd.f32 %v2001, %v1940
      %v2058 = vadd.f32 %v2002, %v1863
      %v2059 = vadd.f32 %v2003, %v1942
      %v2060 = vadd.f32 %v2004, %v1866
      %v2061 = vadd.f32 %v2005, %v1945
      %v2062 = vadd.f32 %v2006, %v1868
      %v2063 = vadd.f32 %v2007, %v1947
      %v2064 = vadd.f32 %v2008, %v1871
      %v2065 = vadd.f32 %v2009, %v1950
      %v2066 = vadd.f32 %v2010, %v1873
      %v2067 = vadd.f32 %v2011, %v1952
      %v2068 = vadd.f32 %v2012, %v1876
      %v2069 = vadd.f32 %v2013, %v1955
      %v2070 = vadd.f32 %v2014, %v1878
      %v2071 = vadd.f32 %v2015, %v1957
      %v2072 = vadd.f32 %v2016, %v1881
      %v2073 = vadd.f32 %v2017, %v1960
      %v2074 = vadd.f32 %v2018, %v1883
      %v2075 = vadd.f32 %v2019, %v1962
      %2076 = vst [vmem:[#allocation2] sm:$0xff] %v2020
      %2077 = vst [vmem:[#allocation2 + $0x8] sm:$0xff] %v2021
      %2078 = vst [vmem:[#allocation2 + $0x10] sm:$0xff] %v2022
      %2079 = vst [vmem:[#allocation2 + $0x18] sm:$0xff] %v2023
      %2080 = vst [vmem:[#allocation2 + $0x20] sm:$0xff] %v2024
      %2081 = vst [vmem:[#allocation2 + $0x28] sm:$0xff] %v2025
      %2082 = vst [vmem:[#allocation2 + $0x30] sm:$0xff] %v2026
      %2083 = vst [vmem:[#allocation2 + $0x38] sm:$0xff] %v2027
      %2084 = vst [vmem:[#allocation2 + $0x40] sm:$0xff] %v2028
      %2085 = vst [vmem:[#allocation2 + $0x48] sm:$0xff] %v2029
      %2086 = vst [vmem:[#allocation2 + $0x50] sm:$0xff] %v2030
      %2087 = vst [vmem:[#allocation2 + $0x58] sm:$0xff] %v2031
      %2088 = vst [vmem:[#allocation2 + $0x60] sm:$0xff] %v2032
      %2089 = vst [vmem:[#allocation2 + $0x68] sm:$0xff] %v2033
      %2090 = vst [vmem:[#allocation2 + $0x70] sm:$0xff] %v2034
      %2091 = vst [vmem:[#allocation2 + $0x78] sm:$0xff] %v2035
      %2092 = vst [vmem:[#allocation2 + $0x80] sm:$0xff] %v2036
      %2093 = vst [vmem:[#allocation2 + $0x88] sm:$0xff] %v2037
      %2094 = vst [vmem:[#allocation2 + $0x90] sm:$0xff] %v2038
      %2095 = vst [vmem:[#allocation2 + $0x98] sm:$0xff] %v2039
      %2096 = vst [vmem:[#allocation2 + $0xa0] sm:$0xff] %v2040
      %2097 = vst [vmem:[#allocation2 + $0xa8] sm:$0xff] %v2041
      %2098 = vst [vmem:[#allocation2 + $0xb0] sm:$0xff] %v2042
      %2099 = vst [vmem:[#allocation2 + $0xb8] sm:$0xff] %v2043
      %2100 = vst [vmem:[#allocation2 + $0xc0] sm:$0xff] %v2044
      %2101 = vst [vmem:[#allocation2 + $0xc8] sm:$0xff] %v2045
      %2102 = vst [vmem:[#allocation2 + $0xd0] sm:$0xff] %v2046
      %2103 = vst [vmem:[#allocation2 + $0xd8] sm:$0xff] %v2047
      %2104 = vst [vmem:[#allocation2 + $0xe0] sm:$0xff] %v2048
      %2105 = vst [vmem:[#allocation2 + $0xe8] sm:$0xff] %v2049
      %2106 = vst [vmem:[#allocation2 + $0xf0] sm:$0xff] %v2050
      %2107 = vst [vmem:[#allocation2 + $0xf8] sm:$0xff] %v2051
      %2108 = vst [vmem:[#allocation2 + $0x100] sm:$0xff] %v2052
      %2109 = vst [vmem:[#allocation2 + $0x108] sm:$0xff] %v2053
      %2110 = vst [vmem:[#allocation2 + $0x110] sm:$0xff] %v2054
      %2111 = vst [vmem:[#allocation2 + $0x118] sm:$0xff] %v2055
      %2112 = vst [vmem:[#allocation2 + $0x120] sm:$0xff] %v2056
      %2113 = vst [vmem:[#allocation2 + $0x128] sm:$0xff] %v2057
      %2114 = vst [vmem:[#allocation2 + $0x130] sm:$0xff] %v2058
      %2115 = vst [vmem:[#allocation2 + $0x138] sm:$0xff] %v2059
      %2116 = vst [vmem:[#allocation2 + $0x140] sm:$0xff] %v2060
      %2117 = vst [vmem:[#allocation2 + $0x148] sm:$0xff] %v2061
      %2118 = vst [vmem:[#allocation2 + $0x150] sm:$0xff] %v2062
      %2119 = vst [vmem:[#allocation2 + $0x158] sm:$0xff] %v2063
      %2120 = vst [vmem:[#allocation2 + $0x160] sm:$0xff] %v2064
      %2121 = vst [vmem:[#allocation2 + $0x168] sm:$0xff] %v2065
      %2122 = vst [vmem:[#allocation2 + $0x170] sm:$0xff] %v2066
      %2123 = vst [vmem:[#allocation2 + $0x178] sm:$0xff] %v2067
      %2124 = vst [vmem:[#allocation2 + $0x180] sm:$0xff] %v2068
      %2125 = vst [vmem:[#allocation2 + $0x188] sm:$0xff] %v2069
      %2126 = vst [vmem:[#allocation2 + $0x190] sm:$0xff] %v2070
      %2127 = vst [vmem:[#allocation2 + $0x198] sm:$0xff] %v2071
      %2128 = vst [vmem:[#allocation2 + $0x1a0] sm:$0xff] %v2072
      %2129 = vst [vmem:[#allocation2 + $0x1a8] sm:$0xff] %v2073
      %2130 = vst [vmem:[#allocation2 + $0x1b0] sm:$0xff] %v2074
      %2131 = vst [vmem:[#allocation2 + $0x1b8] sm:$0xff] %v2075
      %v2132 = vld [vmem:[%s380 + $0x20] sm:$0xff]
      %v2133 = vld [vmem:[%s380 + $0x28] sm:$0xff]
      %v2134 = vld [vmem:[%s380 + $0x30] sm:$0xff]
      %v2135 = vld [vmem:[%s380 + $0x38] sm:$0xff]
      %v2136 = vld [vmem:[%s380 + $0x40] sm:$0xff]
      %v2137 = vld [vmem:[%s380 + $0x48] sm:$0xff]
      %v2138 = vld [vmem:[%s380 + $0x50] sm:$0xff]
      %v2139 = vld [vmem:[%s380 + $0x58] sm:$0xff]
      %v2140 = vld [vmem:[%s380 + $0x60] sm:$0xff]
      %v2141 = vld [vmem:[%s380 + $0x68] sm:$0xff]
      %v2142 = vld [vmem:[%s380 + $0x70] sm:$0xff]
      %v2143 = vld [vmem:[%s380 + $0x78] sm:$0xff]
      %v2144 = vld [vmem:[%s380 + $0x80] sm:$0xff]
      %v2145 = vld [vmem:[%s380 + $0x88] sm:$0xff]
      %v2146 = vld [vmem:[%s380 + $0x90] sm:$0xff]
      %v2147 = vld [vmem:[%s380 + $0x98] sm:$0xff]
      %v2148 = vld [vmem:[%s380 + $0xa0] sm:$0xff]
      %v2149 = vld [vmem:[%s380 + $0xa8] sm:$0xff]
      %v2150 = vld [vmem:[%s380 + $0xb0] sm:$0xff]
      %v2151 = vld [vmem:[%s380 + $0xb8] sm:$0xff]
      %v2152 = vld [vmem:[%s380 + $0xc0] sm:$0xff]
      %v2153 = vld [vmem:[%s380 + $0xc8] sm:$0xff]
      %v2154 = vld [vmem:[%s380 + $0xd0] sm:$0xff]
      %v2155 = vld [vmem:[%s380 + $0xd8] sm:$0xff]
      %v2156 = vld [vmem:[%s380 + $0xe0] sm:$0xff]
      %v2157 = vld [vmem:[%s380 + $0xe8] sm:$0xff]
      %v2158 = vld [vmem:[%s380 + $0xf0] sm:$0xff]
      %v2159 = vld [vmem:[%s380 + $0xf8] sm:$0xff]
      %v2160 = vpack.c.bf16 %v2133, %v2132
      %v2161 = vpack.c.bf16 %v2135, %v2134
      %v2162 = vpack.c.bf16 %v2137, %v2136
      %v2163 = vpack.c.bf16 %v2139, %v2138
      %v2164 = vpack.c.bf16 %v2141, %v2140
      %v2165 = vpack.c.bf16 %v2143, %v2142
      %v2166 = vpack.c.bf16 %v2145, %v2144
      %v2167 = vpack.c.bf16 %v2147, %v2146
      %v2168 = vpack.c.bf16 %v2149, %v2148
      %v2169 = vpack.c.bf16 %v2151, %v2150
      %v2170 = vpack.c.bf16 %v2153, %v2152
      %v2171 = vpack.c.bf16 %v2155, %v2154
      %v2172 = vpack.c.bf16 %v2157, %v2156
      %v2173 = vpack.c.bf16 %v2159, %v2158
      %s2174 = scalar_lea.vmem %s1, 512
      %v2175 = vld [vmem:[%s2174] sm:$0xff]
      %v2176 = vld [vmem:[%s2174 + $0x8] sm:$0xff]
      %v2177 = vld [vmem:[%s2174 + $0x10] sm:$0xff]
      %v2178 = vld [vmem:[%s2174 + $0x18] sm:$0xff]
      %v2179 = vld [vmem:[%s2174 + $0x20] sm:$0xff]
      %v2180 = vld [vmem:[%s2174 + $0x28] sm:$0xff]
      %v2181 = vld [vmem:[%s2174 + $0x30] sm:$0xff]
      %v2182 = vld [vmem:[%s2174 + $0x38] sm:$0xff]
      %v2183 = vld [vmem:[%s2174 + $0x40] sm:$0xff]
      %v2184 = vld [vmem:[%s2174 + $0x48] sm:$0xff]
      %v2185 = vld [vmem:[%s2174 + $0x50] sm:$0xff]
      %v2186 = vld [vmem:[%s2174 + $0x58] sm:$0xff]
      %v2187 = vld [vmem:[%s2174 + $0x60] sm:$0xff]
      %v2188 = vld [vmem:[%s2174 + $0x68] sm:$0xff]
      %v2189 = vld [vmem:[%s2174 + $0x70] sm:$0xff]
      %v2190 = vld [vmem:[%s2174 + $0x78] sm:$0xff]
      %v2207 = vunpack.c.l.b16 %v2175
      %v2208 = vunpack.c.h.b16 %v2175
      %v2209 = vunpack.c.l.b16 %v2176
      %v2210 = vunpack.c.h.b16 %v2176
      %v2211 = vunpack.c.l.b16 %v2177
      %v2212 = vunpack.c.h.b16 %v2177
      %v2213 = vunpack.c.l.b16 %v2178
      %v2214 = vunpack.c.h.b16 %v2178
      %v2215 = vunpack.c.l.b16 %v2179
      %v2216 = vunpack.c.h.b16 %v2179
      %v2217 = vunpack.c.l.b16 %v2180
      %v2218 = vunpack.c.h.b16 %v2180
      %v2219 = vunpack.c.l.b16 %v2181
      %v2220 = vunpack.c.h.b16 %v2181
      %v2221 = vunpack.c.l.b16 %v2182
      %v2222 = vunpack.c.h.b16 %v2182
      %v2223 = vunpack.c.l.b16 %v2183
      %v2224 = vunpack.c.h.b16 %v2183
      %v2225 = vunpack.c.l.b16 %v2184
      %v2226 = vunpack.c.h.b16 %v2184
      %v2227 = vunpack.c.l.b16 %v2185
      %v2228 = vunpack.c.h.b16 %v2185
      %v2229 = vunpack.c.l.b16 %v2186
      %v2230 = vunpack.c.h.b16 %v2186
      %v2231 = vunpack.c.l.b16 %v2187
      %v2232 = vunpack.c.h.b16 %v2187
      %v2233 = vunpack.c.l.b16 %v2188
      %v2234 = vunpack.c.h.b16 %v2188
      %v2235 = vunpack.c.l.b16 %v2189
      %v2236 = vunpack.c.h.b16 %v2189
      %v2237 = vunpack.c.l.b16 %v2190
      %v2238 = vunpack.c.h.b16 %v2190
      %v2239 = vpack.c.b16 %v2209, %v2207
      %v2240 = vpack.c.b16 %v2210, %v2208
      %v2241 = vpack.c.b16 %v2213, %v2211
      %v2242 = vpack.c.b16 %v2214, %v2212
      %v2243 = vpack.c.b16 %v2217, %v2215
      %v2244 = vpack.c.b16 %v2218, %v2216
      %v2245 = vpack.c.b16 %v2221, %v2219
      %v2246 = vpack.c.b16 %v2222, %v2220
      %v2247 = vpack.c.b16 %v2225, %v2223
      %v2248 = vpack.c.b16 %v2226, %v2224
      %v2249 = vpack.c.b16 %v2229, %v2227
      %v2250 = vpack.c.b16 %v2230, %v2228
      %v2251 = vpack.c.b16 %v2233, %v2231
      %v2252 = vpack.c.b16 %v2234, %v2232
      %v2253 = vpack.c.b16 %v2237, %v2235
      %v2254 = vpack.c.b16 %v2238, %v2236
      %2271 = vmatpush.bf16.msra.mxu0 %v2253
      %2272 = vmatpush.bf16.msra.mxu0 %v2251
      %2273 = vmatpush.bf16.msra.mxu0 %v2249
      %2274 = vmatpush.bf16.msra.mxu0 %v2247
      %2275 = vmatpush.bf16.msra.mxu0 %v2245
      %2276 = vmatpush.bf16.msra.mxu0 %v2243
      %2277 = vmatpush.bf16.msra.mxu0 %v2241
      %2278 = vmatpush.bf16.msra.mxu0 %v2239
      %2279 = vmatmul.bf16.gmra.mxu0 %v2160
      %v2280 = vpop.f32.mrf.mxu0
      %v2281 = vadd.f32 0.0, %v2280
      %v2282 = vpop.f32.mrf.mxu0
      %v2283 = vadd.f32 0.0, %v2282
      %2284 = vmatmul.bf16.gmra.mxu0 %v2161
      %v2285 = vpop.f32.mrf.mxu0
      %v2286 = vadd.f32 0.0, %v2285
      %v2287 = vpop.f32.mrf.mxu0
      %v2288 = vadd.f32 0.0, %v2287
      %2289 = vmatmul.bf16.gmra.mxu0 %v2162
      %v2290 = vpop.f32.mrf.mxu0
      %v2291 = vadd.f32 0.0, %v2290
      %v2292 = vpop.f32.mrf.mxu0
      %v2293 = vadd.f32 0.0, %v2292
      %2294 = vmatmul.bf16.gmra.mxu0 %v2163
      %v2295 = vpop.f32.mrf.mxu0
      %v2296 = vadd.f32 0.0, %v2295
      %v2297 = vpop.f32.mrf.mxu0
      %v2298 = vadd.f32 0.0, %v2297
      %2299 = vmatmul.bf16.gmra.mxu0 %v2164
      %v2300 = vpop.f32.mrf.mxu0
      %v2301 = vadd.f32 0.0, %v2300
      %v2302 = vpop.f32.mrf.mxu0
      %v2303 = vadd.f32 0.0, %v2302
      %2304 = vmatmul.bf16.gmra.mxu0 %v2165
      %v2305 = vpop.f32.mrf.mxu0
      %v2306 = vadd.f32 0.0, %v2305
      %v2307 = vpop.f32.mrf.mxu0
      %v2308 = vadd.f32 0.0, %v2307
      %2309 = vmatmul.bf16.gmra.mxu0 %v2166
      %v2310 = vpop.f32.mrf.mxu0
      %v2311 = vadd.f32 0.0, %v2310
      %v2312 = vpop.f32.mrf.mxu0
      %v2313 = vadd.f32 0.0, %v2312
      %2314 = vmatmul.bf16.gmra.mxu0 %v2167
      %v2315 = vpop.f32.mrf.mxu0
      %v2316 = vadd.f32 0.0, %v2315
      %v2317 = vpop.f32.mrf.mxu0
      %v2318 = vadd.f32 0.0, %v2317
      %2319 = vmatmul.bf16.gmra.mxu0 %v2168
      %v2320 = vpop.f32.mrf.mxu0
      %v2321 = vadd.f32 0.0, %v2320
      %v2322 = vpop.f32.mrf.mxu0
      %v2323 = vadd.f32 0.0, %v2322
      %2324 = vmatmul.bf16.gmra.mxu0 %v2169
      %v2325 = vpop.f32.mrf.mxu0
      %v2326 = vadd.f32 0.0, %v2325
      %v2327 = vpop.f32.mrf.mxu0
      %v2328 = vadd.f32 0.0, %v2327
      %2329 = vmatmul.bf16.gmra.mxu0 %v2170
      %v2330 = vpop.f32.mrf.mxu0
      %v2331 = vadd.f32 0.0, %v2330
      %v2332 = vpop.f32.mrf.mxu0
      %v2333 = vadd.f32 0.0, %v2332
      %2334 = vmatmul.bf16.gmra.mxu0 %v2171
      %v2335 = vpop.f32.mrf.mxu0
      %v2336 = vadd.f32 0.0, %v2335
      %v2337 = vpop.f32.mrf.mxu0
      %v2338 = vadd.f32 0.0, %v2337
      %2339 = vmatmul.bf16.gmra.mxu0 %v2172
      %v2340 = vpop.f32.mrf.mxu0
      %v2341 = vadd.f32 0.0, %v2340
      %v2342 = vpop.f32.mrf.mxu0
      %v2343 = vadd.f32 0.0, %v2342
      %2344 = vmatmul.bf16.gmra.mxu0 %v2173
      %v2345 = vpop.f32.mrf.mxu0
      %v2346 = vadd.f32 0.0, %v2345
      %v2347 = vpop.f32.mrf.mxu0
      %v2348 = vadd.f32 0.0, %v2347
      %2349 = vdwg.mxu0
      %2350 = vmatpush.bf16.msra.mxu0 %v2254
      %2351 = vmatpush.bf16.msra.mxu0 %v2252
      %2352 = vmatpush.bf16.msra.mxu0 %v2250
      %2353 = vmatpush.bf16.msra.mxu0 %v2248
      %2354 = vmatpush.bf16.msra.mxu0 %v2246
      %2355 = vmatpush.bf16.msra.mxu0 %v2244
      %2356 = vmatpush.bf16.msra.mxu0 %v2242
      %2357 = vmatpush.bf16.msra.mxu0 %v2240
      %2358 = vmatmul.bf16.gmra.mxu0 %v2160
      %v2359 = vpop.f32.mrf.mxu0
      %v2360 = vadd.f32 0.0, %v2359
      %v2361 = vpop.f32.mrf.mxu0
      %v2362 = vadd.f32 0.0, %v2361
      %2363 = vmatmul.bf16.gmra.mxu0 %v2161
      %v2364 = vpop.f32.mrf.mxu0
      %v2365 = vadd.f32 0.0, %v2364
      %v2366 = vpop.f32.mrf.mxu0
      %v2367 = vadd.f32 0.0, %v2366
      %2368 = vmatmul.bf16.gmra.mxu0 %v2162
      %v2369 = vpop.f32.mrf.mxu0
      %v2370 = vadd.f32 0.0, %v2369
      %v2371 = vpop.f32.mrf.mxu0
      %v2372 = vadd.f32 0.0, %v2371
      %2373 = vmatmul.bf16.gmra.mxu0 %v2163
      %v2374 = vpop.f32.mrf.mxu0
      %v2375 = vadd.f32 0.0, %v2374
      %v2376 = vpop.f32.mrf.mxu0
      %v2377 = vadd.f32 0.0, %v2376
      %2378 = vmatmul.bf16.gmra.mxu0 %v2164
      %v2379 = vpop.f32.mrf.mxu0
      %v2380 = vadd.f32 0.0, %v2379
      %v2381 = vpop.f32.mrf.mxu0
      %v2382 = vadd.f32 0.0, %v2381
      %2383 = vmatmul.bf16.gmra.mxu0 %v2165
      %v2384 = vpop.f32.mrf.mxu0
      %v2385 = vadd.f32 0.0, %v2384
      %v2386 = vpop.f32.mrf.mxu0
      %v2387 = vadd.f32 0.0, %v2386
      %2388 = vmatmul.bf16.gmra.mxu0 %v2166
      %v2389 = vpop.f32.mrf.mxu0
      %v2390 = vadd.f32 0.0, %v2389
      %v2391 = vpop.f32.mrf.mxu0
      %v2392 = vadd.f32 0.0, %v2391
      %2393 = vmatmul.bf16.gmra.mxu0 %v2167
      %v2394 = vpop.f32.mrf.mxu0
      %v2395 = vadd.f32 0.0, %v2394
      %v2396 = vpop.f32.mrf.mxu0
      %v2397 = vadd.f32 0.0, %v2396
      %2398 = vmatmul.bf16.gmra.mxu0 %v2168
      %v2399 = vpop.f32.mrf.mxu0
      %v2400 = vadd.f32 0.0, %v2399
      %v2401 = vpop.f32.mrf.mxu0
      %v2402 = vadd.f32 0.0, %v2401
      %2403 = vmatmul.bf16.gmra.mxu0 %v2169
      %v2404 = vpop.f32.mrf.mxu0
      %v2405 = vadd.f32 0.0, %v2404
      %v2406 = vpop.f32.mrf.mxu0
      %v2407 = vadd.f32 0.0, %v2406
      %2408 = vmatmul.bf16.gmra.mxu0 %v2170
      %v2409 = vpop.f32.mrf.mxu0
      %v2410 = vadd.f32 0.0, %v2409
      %v2411 = vpop.f32.mrf.mxu0
      %v2412 = vadd.f32 0.0, %v2411
      %2413 = vmatmul.bf16.gmra.mxu0 %v2171
      %v2414 = vpop.f32.mrf.mxu0
      %v2415 = vadd.f32 0.0, %v2414
      %v2416 = vpop.f32.mrf.mxu0
      %v2417 = vadd.f32 0.0, %v2416
      %2418 = vmatmul.bf16.gmra.mxu0 %v2172
      %v2419 = vpop.f32.mrf.mxu0
      %v2420 = vadd.f32 0.0, %v2419
      %v2421 = vpop.f32.mrf.mxu0
      %v2422 = vadd.f32 0.0, %v2421
      %2423 = vmatmul.bf16.gmra.mxu0 %v2173
      %v2424 = vpop.f32.mrf.mxu0
      %v2425 = vadd.f32 0.0, %v2424
      %v2426 = vpop.f32.mrf.mxu0
      %v2427 = vadd.f32 0.0, %v2426
      %2428 = vdwg.mxu0
      %v2429 = vld [vmem:[#allocation2] sm:$0xff]
      %v2430 = vld [vmem:[#allocation2 + $0x8] sm:$0xff]
      %v2431 = vld [vmem:[#allocation2 + $0x10] sm:$0xff]
      %v2432 = vld [vmem:[#allocation2 + $0x18] sm:$0xff]
      %v2433 = vld [vmem:[#allocation2 + $0x20] sm:$0xff]
      %v2434 = vld [vmem:[#allocation2 + $0x28] sm:$0xff]
      %v2435 = vld [vmem:[#allocation2 + $0x30] sm:$0xff]
      %v2436 = vld [vmem:[#allocation2 + $0x38] sm:$0xff]
      %v2437 = vld [vmem:[#allocation2 + $0x40] sm:$0xff]
      %v2438 = vld [vmem:[#allocation2 + $0x48] sm:$0xff]
      %v2439 = vld [vmem:[#allocation2 + $0x50] sm:$0xff]
      %v2440 = vld [vmem:[#allocation2 + $0x58] sm:$0xff]
      %v2441 = vld [vmem:[#allocation2 + $0x60] sm:$0xff]
      %v2442 = vld [vmem:[#allocation2 + $0x68] sm:$0xff]
      %v2443 = vld [vmem:[#allocation2 + $0x70] sm:$0xff]
      %v2444 = vld [vmem:[#allocation2 + $0x78] sm:$0xff]
      %v2445 = vld [vmem:[#allocation2 + $0x80] sm:$0xff]
      %v2446 = vld [vmem:[#allocation2 + $0x88] sm:$0xff]
      %v2447 = vld [vmem:[#allocation2 + $0x90] sm:$0xff]
      %v2448 = vld [vmem:[#allocation2 + $0x98] sm:$0xff]
      %v2449 = vld [vmem:[#allocation2 + $0xa0] sm:$0xff]
      %v2450 = vld [vmem:[#allocation2 + $0xa8] sm:$0xff]
      %v2451 = vld [vmem:[#allocation2 + $0xb0] sm:$0xff]
      %v2452 = vld [vmem:[#allocation2 + $0xb8] sm:$0xff]
      %v2453 = vld [vmem:[#allocation2 + $0xc0] sm:$0xff]
      %v2454 = vld [vmem:[#allocation2 + $0xc8] sm:$0xff]
      %v2455 = vld [vmem:[#allocation2 + $0xd0] sm:$0xff]
      %v2456 = vld [vmem:[#allocation2 + $0xd8] sm:$0xff]
      %v2457 = vld [vmem:[#allocation2 + $0xe0] sm:$0xff]
      %v2458 = vld [vmem:[#allocation2 + $0xe8] sm:$0xff]
      %v2459 = vld [vmem:[#allocation2 + $0xf0] sm:$0xff]
      %v2460 = vld [vmem:[#allocation2 + $0xf8] sm:$0xff]
      %v2461 = vld [vmem:[#allocation2 + $0x100] sm:$0xff]
      %v2462 = vld [vmem:[#allocation2 + $0x108] sm:$0xff]
      %v2463 = vld [vmem:[#allocation2 + $0x110] sm:$0xff]
      %v2464 = vld [vmem:[#allocation2 + $0x118] sm:$0xff]
      %v2465 = vld [vmem:[#allocation2 + $0x120] sm:$0xff]
      %v2466 = vld [vmem:[#allocation2 + $0x128] sm:$0xff]
      %v2467 = vld [vmem:[#allocation2 + $0x130] sm:$0xff]
      %v2468 = vld [vmem:[#allocation2 + $0x138] sm:$0xff]
      %v2469 = vld [vmem:[#allocation2 + $0x140] sm:$0xff]
      %v2470 = vld [vmem:[#allocation2 + $0x148] sm:$0xff]
      %v2471 = vld [vmem:[#allocation2 + $0x150] sm:$0xff]
      %v2472 = vld [vmem:[#allocation2 + $0x158] sm:$0xff]
      %v2473 = vld [vmem:[#allocation2 + $0x160] sm:$0xff]
      %v2474 = vld [vmem:[#allocation2 + $0x168] sm:$0xff]
      %v2475 = vld [vmem:[#allocation2 + $0x170] sm:$0xff]
      %v2476 = vld [vmem:[#allocation2 + $0x178] sm:$0xff]
      %v2477 = vld [vmem:[#allocation2 + $0x180] sm:$0xff]
      %v2478 = vld [vmem:[#allocation2 + $0x188] sm:$0xff]
      %v2479 = vld [vmem:[#allocation2 + $0x190] sm:$0xff]
      %v2480 = vld [vmem:[#allocation2 + $0x198] sm:$0xff]
      %v2481 = vld [vmem:[#allocation2 + $0x1a0] sm:$0xff]
      %v2482 = vld [vmem:[#allocation2 + $0x1a8] sm:$0xff]
      %v2483 = vld [vmem:[#allocation2 + $0x1b0] sm:$0xff]
      %v2484 = vld [vmem:[#allocation2 + $0x1b8] sm:$0xff]
      %v2485 = vadd.f32 %v2429, %v2281
      %v2486 = vadd.f32 %v2430, %v2360
      %v2487 = vadd.f32 %v2431, %v2283
      %v2488 = vadd.f32 %v2432, %v2362
      %v2489 = vadd.f32 %v2433, %v2286
      %v2490 = vadd.f32 %v2434, %v2365
      %v2491 = vadd.f32 %v2435, %v2288
      %v2492 = vadd.f32 %v2436, %v2367
      %v2493 = vadd.f32 %v2437, %v2291
      %v2494 = vadd.f32 %v2438, %v2370
      %v2495 = vadd.f32 %v2439, %v2293
      %v2496 = vadd.f32 %v2440, %v2372
      %v2497 = vadd.f32 %v2441, %v2296
      %v2498 = vadd.f32 %v2442, %v2375
      %v2499 = vadd.f32 %v2443, %v2298
      %v2500 = vadd.f32 %v2444, %v2377
      %v2501 = vadd.f32 %v2445, %v2301
      %v2502 = vadd.f32 %v2446, %v2380
      %v2503 = vadd.f32 %v2447, %v2303
      %v2504 = vadd.f32 %v2448, %v2382
      %v2505 = vadd.f32 %v2449, %v2306
      %v2506 = vadd.f32 %v2450, %v2385
      %v2507 = vadd.f32 %v2451, %v2308
      %v2508 = vadd.f32 %v2452, %v2387
      %v2509 = vadd.f32 %v2453, %v2311
      %v2510 = vadd.f32 %v2454, %v2390
      %v2511 = vadd.f32 %v2455, %v2313
      %v2512 = vadd.f32 %v2456, %v2392
      %v2513 = vadd.f32 %v2457, %v2316
      %v2514 = vadd.f32 %v2458, %v2395
      %v2515 = vadd.f32 %v2459, %v2318
      %v2516 = vadd.f32 %v2460, %v2397
      %v2517 = vadd.f32 %v2461, %v2321
      %v2518 = vadd.f32 %v2462, %v2400
      %v2519 = vadd.f32 %v2463, %v2323
      %v2520 = vadd.f32 %v2464, %v2402
      %v2521 = vadd.f32 %v2465, %v2326
      %v2522 = vadd.f32 %v2466, %v2405
      %v2523 = vadd.f32 %v2467, %v2328
      %v2524 = vadd.f32 %v2468, %v2407
      %v2525 = vadd.f32 %v2469, %v2331
      %v2526 = vadd.f32 %v2470, %v2410
      %v2527 = vadd.f32 %v2471, %v2333
      %v2528 = vadd.f32 %v2472, %v2412
      %v2529 = vadd.f32 %v2473, %v2336
      %v2530 = vadd.f32 %v2474, %v2415
      %v2531 = vadd.f32 %v2475, %v2338
      %v2532 = vadd.f32 %v2476, %v2417
      %v2533 = vadd.f32 %v2477, %v2341
      %v2534 = vadd.f32 %v2478, %v2420
      %v2535 = vadd.f32 %v2479, %v2343
      %v2536 = vadd.f32 %v2480, %v2422
      %v2537 = vadd.f32 %v2481, %v2346
      %v2538 = vadd.f32 %v2482, %v2425
      %v2539 = vadd.f32 %v2483, %v2348
      %v2540 = vadd.f32 %v2484, %v2427
      %2541 = vst [vmem:[#allocation2] sm:$0xff] %v2485
      %2542 = vst [vmem:[#allocation2 + $0x8] sm:$0xff] %v2486
      %2543 = vst [vmem:[#allocation2 + $0x10] sm:$0xff] %v2487
      %2544 = vst [vmem:[#allocation2 + $0x18] sm:$0xff] %v2488
      %2545 = vst [vmem:[#allocation2 + $0x20] sm:$0xff] %v2489
      %2546 = vst [vmem:[#allocation2 + $0x28] sm:$0xff] %v2490
      %2547 = vst [vmem:[#allocation2 + $0x30] sm:$0xff] %v2491
      %2548 = vst [vmem:[#allocation2 + $0x38] sm:$0xff] %v2492
      %2549 = vst [vmem:[#allocation2 + $0x40] sm:$0xff] %v2493
      %2550 = vst [vmem:[#allocation2 + $0x48] sm:$0xff] %v2494
      %2551 = vst [vmem:[#allocation2 + $0x50] sm:$0xff] %v2495
      %2552 = vst [vmem:[#allocation2 + $0x58] sm:$0xff] %v2496
      %2553 = vst [vmem:[#allocation2 + $0x60] sm:$0xff] %v2497
      %2554 = vst [vmem:[#allocation2 + $0x68] sm:$0xff] %v2498
      %2555 = vst [vmem:[#allocation2 + $0x70] sm:$0xff] %v2499
      %2556 = vst [vmem:[#allocation2 + $0x78] sm:$0xff] %v2500
      %2557 = vst [vmem:[#allocation2 + $0x80] sm:$0xff] %v2501
      %2558 = vst [vmem:[#allocation2 + $0x88] sm:$0xff] %v2502
      %2559 = vst [vmem:[#allocation2 + $0x90] sm:$0xff] %v2503
      %2560 = vst [vmem:[#allocation2 + $0x98] sm:$0xff] %v2504
      %2561 = vst [vmem:[#allocation2 + $0xa0] sm:$0xff] %v2505
      %2562 = vst [vmem:[#allocation2 + $0xa8] sm:$0xff] %v2506
      %2563 = vst [vmem:[#allocation2 + $0xb0] sm:$0xff] %v2507
      %2564 = vst [vmem:[#allocation2 + $0xb8] sm:$0xff] %v2508
      %2565 = vst [vmem:[#allocation2 + $0xc0] sm:$0xff] %v2509
      %2566 = vst [vmem:[#allocation2 + $0xc8] sm:$0xff] %v2510
      %2567 = vst [vmem:[#allocation2 + $0xd0] sm:$0xff] %v2511
      %2568 = vst [vmem:[#allocation2 + $0xd8] sm:$0xff] %v2512
      %2569 = vst [vmem:[#allocation2 + $0xe0] sm:$0xff] %v2513
      %2570 = vst [vmem:[#allocation2 + $0xe8] sm:$0xff] %v2514
      %2571 = vst [vmem:[#allocation2 + $0xf0] sm:$0xff] %v2515
      %2572 = vst [vmem:[#allocation2 + $0xf8] sm:$0xff] %v2516
      %2573 = vst [vmem:[#allocation2 + $0x100] sm:$0xff] %v2517
      %2574 = vst [vmem:[#allocation2 + $0x108] sm:$0xff] %v2518
      %2575 = vst [vmem:[#allocation2 + $0x110] sm:$0xff] %v2519
      %2576 = vst [vmem:[#allocation2 + $0x118] sm:$0xff] %v2520
      %2577 = vst [vmem:[#allocation2 + $0x120] sm:$0xff] %v2521
      %2578 = vst [vmem:[#allocation2 + $0x128] sm:$0xff] %v2522
      %2579 = vst [vmem:[#allocation2 + $0x130] sm:$0xff] %v2523
      %2580 = vst [vmem:[#allocation2 + $0x138] sm:$0xff] %v2524
      %2581 = vst [vmem:[#allocation2 + $0x140] sm:$0xff] %v2525
      %2582 = vst [vmem:[#allocation2 + $0x148] sm:$0xff] %v2526
      %2583 = vst [vmem:[#allocation2 + $0x150] sm:$0xff] %v2527
      %2584 = vst [vmem:[#allocation2 + $0x158] sm:$0xff] %v2528
      %2585 = vst [vmem:[#allocation2 + $0x160] sm:$0xff] %v2529
      %2586 = vst [vmem:[#allocation2 + $0x168] sm:$0xff] %v2530
      %2587 = vst [vmem:[#allocation2 + $0x170] sm:$0xff] %v2531
      %2588 = vst [vmem:[#allocation2 + $0x178] sm:$0xff] %v2532
      %2589 = vst [vmem:[#allocation2 + $0x180] sm:$0xff] %v2533
      %2590 = vst [vmem:[#allocation2 + $0x188] sm:$0xff] %v2534
      %2591 = vst [vmem:[#allocation2 + $0x190] sm:$0xff] %v2535
      %2592 = vst [vmem:[#allocation2 + $0x198] sm:$0xff] %v2536
      %2593 = vst [vmem:[#allocation2 + $0x1a0] sm:$0xff] %v2537
      %2594 = vst [vmem:[#allocation2 + $0x1a8] sm:$0xff] %v2538
      %2595 = vst [vmem:[#allocation2 + $0x1b0] sm:$0xff] %v2539
      %2596 = vst [vmem:[#allocation2 + $0x1b8] sm:$0xff] %v2540
      %v2597 = vld [vmem:[#allocation2] sm:$0xff]
      %v2598 = vld [vmem:[#allocation2 + $0x10] sm:$0xff]
      %v2599 = vld [vmem:[#allocation2 + $0x20] sm:$0xff]
      %v2600 = vld [vmem:[#allocation2 + $0x30] sm:$0xff]
      %v2601 = vld [vmem:[#allocation2 + $0x40] sm:$0xff]
      %v2602 = vld [vmem:[#allocation2 + $0x50] sm:$0xff]
      %v2603 = vld [vmem:[#allocation2 + $0x60] sm:$0xff]
      %v2604 = vld [vmem:[#allocation2 + $0x70] sm:$0xff]
      %v2605 = vld [vmem:[#allocation2 + $0x80] sm:$0xff]
      %v2606 = vld [vmem:[#allocation2 + $0x90] sm:$0xff]
      %v2607 = vld [vmem:[#allocation2 + $0xa0] sm:$0xff]
      %v2608 = vld [vmem:[#allocation2 + $0xb0] sm:$0xff]
      %v2609 = vld [vmem:[#allocation2 + $0xc0] sm:$0xff]
      %v2610 = vld [vmem:[#allocation2 + $0xd0] sm:$0xff]
      %v2611 = vld [vmem:[#allocation2 + $0xe0] sm:$0xff]
      %v2612 = vld [vmem:[#allocation2 + $0xf0] sm:$0xff]
      %v2613 = vld [vmem:[#allocation2 + $0x100] sm:$0xff]
      %v2614 = vld [vmem:[#allocation2 + $0x110] sm:$0xff]
      %v2615 = vld [vmem:[#allocation2 + $0x120] sm:$0xff]
      %v2616 = vld [vmem:[#allocation2 + $0x130] sm:$0xff]
      %v2617 = vld [vmem:[#allocation2 + $0x140] sm:$0xff]
      %v2618 = vld [vmem:[#allocation2 + $0x150] sm:$0xff]
      %v2619 = vld [vmem:[#allocation2 + $0x160] sm:$0xff]
      %v2620 = vld [vmem:[#allocation2 + $0x170] sm:$0xff]
      %v2621 = vld [vmem:[#allocation2 + $0x180] sm:$0xff]
      %v2622 = vld [vmem:[#allocation2 + $0x190] sm:$0xff]
      %v2623 = vld [vmem:[#allocation2 + $0x1a0] sm:$0xff]
      %v2624 = vld [vmem:[#allocation2 + $0x1b0] sm:$0xff]
      %v2625 = vld [vmem:[#allocation2 + $0x8] sm:$0xff]
      %v2626 = vld [vmem:[#allocation2 + $0x18] sm:$0xff]
      %v2627 = vld [vmem:[#allocation2 + $0x28] sm:$0xff]
      %v2628 = vld [vmem:[#allocation2 + $0x38] sm:$0xff]
      %v2629 = vld [vmem:[#allocation2 + $0x48] sm:$0xff]
      %v2630 = vld [vmem:[#allocation2 + $0x58] sm:$0xff]
      %v2631 = vld [vmem:[#allocation2 + $0x68] sm:$0xff]
      %v2632 = vld [vmem:[#allocation2 + $0x78] sm:$0xff]
      %v2633 = vld [vmem:[#allocation2 + $0x88] sm:$0xff]
      %v2634 = vld [vmem:[#allocation2 + $0x98] sm:$0xff]
      %v2635 = vld [vmem:[#allocation2 + $0xa8] sm:$0xff]
      %v2636 = vld [vmem:[#allocation2 + $0xb8] sm:$0xff]
      %v2637 = vld [vmem:[#allocation2 + $0xc8] sm:$0xff]
      %v2638 = vld [vmem:[#allocation2 + $0xd8] sm:$0xff]
      %v2639 = vld [vmem:[#allocation2 + $0xe8] sm:$0xff]
      %v2640 = vld [vmem:[#allocation2 + $0xf8] sm:$0xff]
      %v2641 = vld [vmem:[#allocation2 + $0x108] sm:$0xff]
      %v2642 = vld [vmem:[#allocation2 + $0x118] sm:$0xff]
      %v2643 = vld [vmem:[#allocation2 + $0x128] sm:$0xff]
      %v2644 = vld [vmem:[#allocation2 + $0x138] sm:$0xff]
      %v2645 = vld [vmem:[#allocation2 + $0x148] sm:$0xff]
      %v2646 = vld [vmem:[#allocation2 + $0x158] sm:$0xff]
      %v2647 = vld [vmem:[#allocation2 + $0x168] sm:$0xff]
      %v2648 = vld [vmem:[#allocation2 + $0x178] sm:$0xff]
      %v2649 = vld [vmem:[#allocation2 + $0x188] sm:$0xff]
      %v2650 = vld [vmem:[#allocation2 + $0x198] sm:$0xff]
      %v2651 = vld [vmem:[#allocation2 + $0x1a8] sm:$0xff]
      %v2652 = vld [vmem:[#allocation2 + $0x1b8] sm:$0xff]
      %v2653 = vmax.f32 %v2597, %v2625
      %v2654 = vmax.f32 %v2598, %v2626
      %v2655 = vmax.f32 %v2599, %v2627
      %v2656 = vmax.f32 %v2600, %v2628
      %v2657 = vmax.f32 %v2601, %v2629
      %v2658 = vmax.f32 %v2602, %v2630
      %v2659 = vmax.f32 %v2603, %v2631
      %v2660 = vmax.f32 %v2604, %v2632
      %v2661 = vmax.f32 %v2605, %v2633
      %v2662 = vmax.f32 %v2606, %v2634
      %v2663 = vmax.f32 %v2607, %v2635
      %v2664 = vmax.f32 %v2608, %v2636
      %v2665 = vmax.f32 %v2609, %v2637
      %v2666 = vmax.f32 %v2610, %v2638
      %v2667 = vmax.f32 %v2611, %v2639
      %v2668 = vmax.f32 %v2612, %v2640
      %v2669 = vmax.f32 %v2613, %v2641
      %v2670 = vmax.f32 %v2614, %v2642
      %v2671 = vmax.f32 %v2615, %v2643
      %v2672 = vmax.f32 %v2616, %v2644
      %v2673 = vmax.f32 %v2617, %v2645
      %v2674 = vmax.f32 %v2618, %v2646
      %v2675 = vmax.f32 %v2619, %v2647
      %v2676 = vmax.f32 %v2620, %v2648
      %v2677 = vmax.f32 %v2621, %v2649
      %v2678 = vmax.f32 %v2622, %v2650
      %v2679 = vmax.f32 %v2623, %v2651
      %v2680 = vmax.f32 %v2624, %v2652
      %v2681 = vmax.f32 %v2653, %v2654
      %v2682 = vmax.f32 %v2655, %v2656
      %v2683 = vmax.f32 %v2657, %v2658
      %v2684 = vmax.f32 %v2659, %v2660
      %v2685 = vmax.f32 %v2661, %v2662
      %v2686 = vmax.f32 %v2663, %v2664
      %v2687 = vmax.f32 %v2665, %v2666
      %v2688 = vmax.f32 %v2667, %v2668
      %v2689 = vmax.f32 %v2669, %v2670
      %v2690 = vmax.f32 %v2671, %v2672
      %v2691 = vmax.f32 %v2673, %v2674
      %v2692 = vmax.f32 %v2675, %v2676
      %v2693 = vmax.f32 %v2677, %v2678
      %v2694 = vmax.f32 %v2679, %v2680
      %v2695 = vld [vmem:[%s2] sm:$0x1]
      %v2697 = vperm.slane %v2695, 0
      %v2699 = vadd.f32 %v2681, %v2697
      %v2700 = vadd.f32 %v2682, %v2697
      %v2701 = vadd.f32 %v2683, %v2697
      %v2702 = vadd.f32 %v2684, %v2697
      %v2703 = vadd.f32 %v2685, %v2697
      %v2704 = vadd.f32 %v2686, %v2697
      %v2705 = vadd.f32 %v2687, %v2697
      %v2706 = vadd.f32 %v2688, %v2697
      %v2707 = vadd.f32 %v2689, %v2697
      %v2708 = vadd.f32 %v2690, %v2697
      %v2709 = vadd.f32 %v2691, %v2697
      %v2710 = vadd.f32 %v2692, %v2697
      %v2711 = vadd.f32 %v2693, %v2697
      %v2712 = vadd.f32 %v2694, %v2697
      %v2713 = vmax.f32 %v2699, 0.0
      %v2714 = vmax.f32 %v2700, 0.0
      %v2715 = vmax.f32 %v2701, 0.0
      %v2716 = vmax.f32 %v2702, 0.0
      %v2717 = vmax.f32 %v2703, 0.0
      %v2718 = vmax.f32 %v2704, 0.0
      %v2719 = vmax.f32 %v2705, 0.0
      %v2720 = vmax.f32 %v2706, 0.0
      %v2721 = vmax.f32 %v2707, 0.0
      %v2722 = vmax.f32 %v2708, 0.0
      %v2723 = vmax.f32 %v2709, 0.0
      %v2724 = vmax.f32 %v2710, 0.0
      %v2725 = vmax.f32 %v2711, 0.0
      %v2726 = vmax.f32 %v2712, 0.0
      %2727 = vst [vmem:[#allocation4] sm:$0xff] %v2713
      %2728 = vst [vmem:[#allocation4 + $0x8] sm:$0xff] %v2714
      %2729 = vst [vmem:[#allocation4 + $0x10] sm:$0xff] %v2715
      %2730 = vst [vmem:[#allocation4 + $0x18] sm:$0xff] %v2716
      %2731 = vst [vmem:[#allocation4 + $0x20] sm:$0xff] %v2717
      %2732 = vst [vmem:[#allocation4 + $0x28] sm:$0xff] %v2718
      %2733 = vst [vmem:[#allocation4 + $0x30] sm:$0xff] %v2719
      %2734 = vst [vmem:[#allocation4 + $0x38] sm:$0xff] %v2720
      %2735 = vst [vmem:[#allocation4 + $0x40] sm:$0xff] %v2721
      %2736 = vst [vmem:[#allocation4 + $0x48] sm:$0xff] %v2722
      %2737 = vst [vmem:[#allocation4 + $0x50] sm:$0xff] %v2723
      %2738 = vst [vmem:[#allocation4 + $0x58] sm:$0xff] %v2724
      %2739 = vst [vmem:[#allocation4 + $0x60] sm:$0xff] %v2725
      %2740 = vst [vmem:[#allocation4 + $0x68] sm:$0xff] %v2726
      %v2741 = vld [vmem:[#allocation4] sm:$0xff]
      %v2742 = vld [vmem:[#allocation4 + $0x8] sm:$0xff]
      %v2743 = vld [vmem:[#allocation4 + $0x10] sm:$0xff]
      %v2744 = vld [vmem:[#allocation4 + $0x18] sm:$0xff]
      %v2745 = vld [vmem:[#allocation4 + $0x20] sm:$0xff]
      %v2746 = vld [vmem:[#allocation4 + $0x28] sm:$0xff]
      %v2747 = vld [vmem:[#allocation4 + $0x30] sm:$0xff]
      %v2748 = vld [vmem:[#allocation4 + $0x38] sm:$0xff]
      %v2749 = vld [vmem:[#allocation4 + $0x40] sm:$0xff]
      %v2750 = vld [vmem:[#allocation4 + $0x48] sm:$0xff]
      %v2751 = vpack.c.bf16 %v2742, %v2741
      %v2752 = vpack.c.bf16 %v2744, %v2743
      %v2753 = vpack.c.bf16 %v2746, %v2745
      %v2754 = vpack.c.bf16 %v2748, %v2747
      %v2755 = vpack.c.bf16 %v2750, %v2749
      %v2756 = vld [vmem:[%s3] sm:$0xff]
      %v2757 = vld [vmem:[%s3 + $0x8] sm:$0xff]
      %v2758 = vld [vmem:[%s3 + $0x10] sm:$0xff]
      %v2759 = vld [vmem:[%s3 + $0x18] sm:$0xff]
      %v2760 = vld [vmem:[%s3 + $0x20] sm:$0xff]
      %v2761 = vld [vmem:[%s3 + $0x28] sm:$0xff]
      %v2762 = vld [vmem:[%s3 + $0x30] sm:$0xff]
      %v2763 = vld [vmem:[%s3 + $0x38] sm:$0xff]
      %v2764 = vld [vmem:[%s3 + $0x40] sm:$0xff]
      %v2765 = vld [vmem:[%s3 + $0x48] sm:$0xff]
      %v2766 = vld [vmem:[%s3 + $0x50] sm:$0xff]
      %v2767 = vld [vmem:[%s3 + $0x58] sm:$0xff]
      %v2768 = vld [vmem:[%s3 + $0x60] sm:$0xff]
      %v2769 = vld [vmem:[%s3 + $0x68] sm:$0xff]
      %v2770 = vld [vmem:[%s3 + $0x70] sm:$0xff]
      %v2771 = vld [vmem:[%s3 + $0x78] sm:$0xff]
      %v2788 = vunpack.c.l.b16 %v2756
      %v2789 = vunpack.c.h.b16 %v2756
      %v2790 = vunpack.c.l.b16 %v2757
      %v2791 = vunpack.c.h.b16 %v2757
      %v2792 = vunpack.c.l.b16 %v2758
      %v2793 = vunpack.c.h.b16 %v2758
      %v2794 = vunpack.c.l.b16 %v2759
      %v2795 = vunpack.c.h.b16 %v2759
      %v2796 = vunpack.c.l.b16 %v2760
      %v2797 = vunpack.c.h.b16 %v2760
      %v2798 = vunpack.c.l.b16 %v2761
      %v2799 = vunpack.c.h.b16 %v2761
      %v2800 = vunpack.c.l.b16 %v2762
      %v2801 = vunpack.c.h.b16 %v2762
      %v2802 = vunpack.c.l.b16 %v2763
      %v2803 = vunpack.c.h.b16 %v2763
      %v2804 = vunpack.c.l.b16 %v2764
      %v2805 = vunpack.c.h.b16 %v2764
      %v2806 = vunpack.c.l.b16 %v2765
      %v2807 = vunpack.c.h.b16 %v2765
      %v2808 = vunpack.c.l.b16 %v2766
      %v2809 = vunpack.c.h.b16 %v2766
      %v2810 = vunpack.c.l.b16 %v2767
      %v2811 = vunpack.c.h.b16 %v2767
      %v2812 = vunpack.c.l.b16 %v2768
      %v2813 = vunpack.c.h.b16 %v2768
      %v2814 = vunpack.c.l.b16 %v2769
      %v2815 = vunpack.c.h.b16 %v2769
      %v2816 = vunpack.c.l.b16 %v2770
      %v2817 = vunpack.c.h.b16 %v2770
      %v2818 = vunpack.c.l.b16 %v2771
      %v2819 = vunpack.c.h.b16 %v2771
      %v2820 = vpack.c.b16 %v2790, %v2788
      %v2821 = vpack.c.b16 %v2791, %v2789
      %v2822 = vpack.c.b16 %v2794, %v2792
      %v2823 = vpack.c.b16 %v2795, %v2793
      %v2824 = vpack.c.b16 %v2798, %v2796
      %v2825 = vpack.c.b16 %v2799, %v2797
      %v2826 = vpack.c.b16 %v2802, %v2800
      %v2827 = vpack.c.b16 %v2803, %v2801
      %v2828 = vpack.c.b16 %v2806, %v2804
      %v2829 = vpack.c.b16 %v2807, %v2805
      %v2830 = vpack.c.b16 %v2810, %v2808
      %v2831 = vpack.c.b16 %v2811, %v2809
      %v2832 = vpack.c.b16 %v2814, %v2812
      %v2833 = vpack.c.b16 %v2815, %v2813
      %v2834 = vpack.c.b16 %v2818, %v2816
      %v2835 = vpack.c.b16 %v2819, %v2817
      %2852 = vmatpush.bf16.msra.mxu0 %v2834
      %2853 = vmatpush.bf16.msra.mxu0 %v2832
      %2854 = vmatpush.bf16.msra.mxu0 %v2830
      %2855 = vmatpush.bf16.msra.mxu0 %v2828
      %2856 = vmatpush.bf16.msra.mxu0 %v2826
      %2857 = vmatpush.bf16.msra.mxu0 %v2824
      %2858 = vmatpush.bf16.msra.mxu0 %v2822
      %2859 = vmatpush.bf16.msra.mxu0 %v2820
      %2860 = vmatmul.bf16.gmra.mxu0 %v2751
      %v2861 = vpop.f32.mrf.mxu0
      %v2862 = vadd.f32 0.0, %v2861
      %v2863 = vpop.f32.mrf.mxu0
      %v2864 = vadd.f32 0.0, %v2863
      %2865 = vmatmul.bf16.gmra.mxu0 %v2752
      %v2866 = vpop.f32.mrf.mxu0
      %v2867 = vadd.f32 0.0, %v2866
      %v2868 = vpop.f32.mrf.mxu0
      %v2869 = vadd.f32 0.0, %v2868
      %2870 = vmatmul.bf16.gmra.mxu0 %v2753
      %v2871 = vpop.f32.mrf.mxu0
      %v2872 = vadd.f32 0.0, %v2871
      %v2873 = vpop.f32.mrf.mxu0
      %v2874 = vadd.f32 0.0, %v2873
      %2875 = vmatmul.bf16.gmra.mxu0 %v2754
      %v2876 = vpop.f32.mrf.mxu0
      %v2877 = vadd.f32 0.0, %v2876
      %v2878 = vpop.f32.mrf.mxu0
      %v2879 = vadd.f32 0.0, %v2878
      %2880 = vmatmul.bf16.gmra.mxu0 %v2755
      %v2881 = vpop.f32.mrf.mxu0
      %v2882 = vadd.f32 0.0, %v2881
      %v2883 = vpop.f32.mrf.mxu0
      %v2884 = vadd.f32 0.0, %v2883
      %2885 = vdwg.mxu0
      %2886 = vmatpush.bf16.msra.mxu0 %v2835
      %2887 = vmatpush.bf16.msra.mxu0 %v2833
      %2888 = vmatpush.bf16.msra.mxu0 %v2831
      %2889 = vmatpush.bf16.msra.mxu0 %v2829
      %2890 = vmatpush.bf16.msra.mxu0 %v2827
      %2891 = vmatpush.bf16.msra.mxu0 %v2825
      %2892 = vmatpush.bf16.msra.mxu0 %v2823
      %2893 = vmatpush.bf16.msra.mxu0 %v2821
      %2894 = vmatmul.bf16.gmra.mxu0 %v2751
      %v2895 = vpop.f32.mrf.mxu0
      %v2896 = vadd.f32 0.0, %v2895
      %v2897 = vpop.f32.mrf.mxu0
      %v2898 = vadd.f32 0.0, %v2897
      %2899 = vmatmul.bf16.gmra.mxu0 %v2752
      %v2900 = vpop.f32.mrf.mxu0
      %v2901 = vadd.f32 0.0, %v2900
      %v2902 = vpop.f32.mrf.mxu0
      %v2903 = vadd.f32 0.0, %v2902
      %2904 = vmatmul.bf16.gmra.mxu0 %v2753
      %v2905 = vpop.f32.mrf.mxu0
      %v2906 = vadd.f32 0.0, %v2905
      %v2907 = vpop.f32.mrf.mxu0
      %v2908 = vadd.f32 0.0, %v2907
      %2909 = vmatmul.bf16.gmra.mxu0 %v2754
      %v2910 = vpop.f32.mrf.mxu0
      %v2911 = vadd.f32 0.0, %v2910
      %v2912 = vpop.f32.mrf.mxu0
      %v2913 = vadd.f32 0.0, %v2912
      %2914 = vmatmul.bf16.gmra.mxu0 %v2755
      %v2915 = vpop.f32.mrf.mxu0
      %v2916 = vadd.f32 0.0, %v2915
      %v2917 = vpop.f32.mrf.mxu0
      %v2918 = vadd.f32 0.0, %v2917
      %2919 = vdwg.mxu0
      %2920 = vst [vmem:[#allocation3] sm:$0xff] %v2862
      %2921 = vst [vmem:[#allocation3 + $0x8] sm:$0xff] %v2896
      %2922 = vst [vmem:[#allocation3 + $0x10] sm:$0xff] %v2864
      %2923 = vst [vmem:[#allocation3 + $0x18] sm:$0xff] %v2898
      %2924 = vst [vmem:[#allocation3 + $0x20] sm:$0xff] %v2867
      %2925 = vst [vmem:[#allocation3 + $0x28] sm:$0xff] %v2901
      %2926 = vst [vmem:[#allocation3 + $0x30] sm:$0xff] %v2869
      %2927 = vst [vmem:[#allocation3 + $0x38] sm:$0xff] %v2903
      %2928 = vst [vmem:[#allocation3 + $0x40] sm:$0xff] %v2872
      %2929 = vst [vmem:[#allocation3 + $0x48] sm:$0xff] %v2906
      %2930 = vst [vmem:[#allocation3 + $0x50] sm:$0xff] %v2874
      %2931 = vst [vmem:[#allocation3 + $0x58] sm:$0xff] %v2908
      %2932 = vst [vmem:[#allocation3 + $0x60] sm:$0xff] %v2877
      %2933 = vst [vmem:[#allocation3 + $0x68] sm:$0xff] %v2911
      %2934 = vst [vmem:[#allocation3 + $0x70] sm:$0xff] %v2879
      %2935 = vst [vmem:[#allocation3 + $0x78] sm:$0xff] %v2913
      %2936 = vst [vmem:[#allocation3 + $0x80] sm:$0xff] %v2882
      %2937 = vst [vmem:[#allocation3 + $0x88] sm:$0xff] %v2916
      %2938 = vst [vmem:[#allocation3 + $0x90] sm:$0xff] %v2884
      %2939 = vst [vmem:[#allocation3 + $0x98] sm:$0xff] %v2918
      %v2940 = vld [vmem:[#allocation4 + $0x8] sm:$0xff]
      %v2941 = vld [vmem:[#allocation4 + $0x10] sm:$0xff]
      %v2942 = vld [vmem:[#allocation4 + $0x18] sm:$0xff]
      %v2943 = vld [vmem:[#allocation4 + $0x20] sm:$0xff]
      %v2944 = vld [vmem:[#allocation4 + $0x28] sm:$0xff]
      %v2945 = vld [vmem:[#allocation4 + $0x30] sm:$0xff]
      %v2946 = vld [vmem:[#allocation4 + $0x38] sm:$0xff]
      %v2947 = vld [vmem:[#allocation4 + $0x40] sm:$0xff]
      %v2948 = vld [vmem:[#allocation4 + $0x48] sm:$0xff]
      %v2949 = vld [vmem:[#allocation4 + $0x50] sm:$0xff]
      %v2950 = vpack.c.bf16 %v2941, %v2940
      %v2951 = vpack.c.bf16 %v2943, %v2942
      %v2952 = vpack.c.bf16 %v2945, %v2944
      %v2953 = vpack.c.bf16 %v2947, %v2946
      %v2954 = vpack.c.bf16 %v2949, %v2948
      %s2955 = scalar_lea.vmem %s3, 128
      %v2956 = vld [vmem:[%s2955] sm:$0xff]
      %v2957 = vld [vmem:[%s2955 + $0x8] sm:$0xff]
      %v2958 = vld [vmem:[%s2955 + $0x10] sm:$0xff]
      %v2959 = vld [vmem:[%s2955 + $0x18] sm:$0xff]
      %v2960 = vld [vmem:[%s2955 + $0x20] sm:$0xff]
      %v2961 = vld [vmem:[%s2955 + $0x28] sm:$0xff]
      %v2962 = vld [vmem:[%s2955 + $0x30] sm:$0xff]
      %v2963 = vld [vmem:[%s2955 + $0x38] sm:$0xff]
      %v2964 = vld [vmem:[%s2955 + $0x40] sm:$0xff]
      %v2965 = vld [vmem:[%s2955 + $0x48] sm:$0xff]
      %v2966 = vld [vmem:[%s2955 + $0x50] sm:$0xff]
      %v2967 = vld [vmem:[%s2955 + $0x58] sm:$0xff]
      %v2968 = vld [vmem:[%s2955 + $0x60] sm:$0xff]
      %v2969 = vld [vmem:[%s2955 + $0x68] sm:$0xff]
      %v2970 = vld [vmem:[%s2955 + $0x70] sm:$0xff]
      %v2971 = vld [vmem:[%s2955 + $0x78] sm:$0xff]
      %v2988 = vunpack.c.l.b16 %v2956
      %v2989 = vunpack.c.h.b16 %v2956
      %v2990 = vunpack.c.l.b16 %v2957
      %v2991 = vunpack.c.h.b16 %v2957
      %v2992 = vunpack.c.l.b16 %v2958
      %v2993 = vunpack.c.h.b16 %v2958
      %v2994 = vunpack.c.l.b16 %v2959
      %v2995 = vunpack.c.h.b16 %v2959
      %v2996 = vunpack.c.l.b16 %v2960
      %v2997 = vunpack.c.h.b16 %v2960
      %v2998 = vunpack.c.l.b16 %v2961
      %v2999 = vunpack.c.h.b16 %v2961
      %v3000 = vunpack.c.l.b16 %v2962
      %v3001 = vunpack.c.h.b16 %v2962
      %v3002 = vunpack.c.l.b16 %v2963
      %v3003 = vunpack.c.h.b16 %v2963
      %v3004 = vunpack.c.l.b16 %v2964
      %v3005 = vunpack.c.h.b16 %v2964
      %v3006 = vunpack.c.l.b16 %v2965
      %v3007 = vunpack.c.h.b16 %v2965
      %v3008 = vunpack.c.l.b16 %v2966
      %v3009 = vunpack.c.h.b16 %v2966
      %v3010 = vunpack.c.l.b16 %v2967
      %v3011 = vunpack.c.h.b16 %v2967
      %v3012 = vunpack.c.l.b16 %v2968
      %v3013 = vunpack.c.h.b16 %v2968
      %v3014 = vunpack.c.l.b16 %v2969
      %v3015 = vunpack.c.h.b16 %v2969
      %v3016 = vunpack.c.l.b16 %v2970
      %v3017 = vunpack.c.h.b16 %v2970
      %v3018 = vunpack.c.l.b16 %v2971
      %v3019 = vunpack.c.h.b16 %v2971
      %v3020 = vpack.c.b16 %v2990, %v2988
      %v3021 = vpack.c.b16 %v2991, %v2989
      %v3022 = vpack.c.b16 %v2994, %v2992
      %v3023 = vpack.c.b16 %v2995, %v2993
      %v3024 = vpack.c.b16 %v2998, %v2996
      %v3025 = vpack.c.b16 %v2999, %v2997
      %v3026 = vpack.c.b16 %v3002, %v3000
      %v3027 = vpack.c.b16 %v3003, %v3001
      %v3028 = vpack.c.b16 %v3006, %v3004
      %v3029 = vpack.c.b16 %v3007, %v3005
      %v3030 = vpack.c.b16 %v3010, %v3008
      %v3031 = vpack.c.b16 %v3011, %v3009
      %v3032 = vpack.c.b16 %v3014, %v3012
      %v3033 = vpack.c.b16 %v3015, %v3013
      %v3034 = vpack.c.b16 %v3018, %v3016
      %v3035 = vpack.c.b16 %v3019, %v3017
      %3052 = vmatpush.bf16.msra.mxu0 %v3034
      %3053 = vmatpush.bf16.msra.mxu0 %v3032
      %3054 = vmatpush.bf16.msra.mxu0 %v3030
      %3055 = vmatpush.bf16.msra.mxu0 %v3028
      %3056 = vmatpush.bf16.msra.mxu0 %v3026
      %3057 = vmatpush.bf16.msra.mxu0 %v3024
      %3058 = vmatpush.bf16.msra.mxu0 %v3022
      %3059 = vmatpush.bf16.msra.mxu0 %v3020
      %3060 = vmatmul.bf16.gmra.mxu0 %v2950
      %v3061 = vpop.f32.mrf.mxu0
      %v3062 = vadd.f32 0.0, %v3061
      %v3063 = vpop.f32.mrf.mxu0
      %v3064 = vadd.f32 0.0, %v3063
      %3065 = vmatmul.bf16.gmra.mxu0 %v2951
      %v3066 = vpop.f32.mrf.mxu0
      %v3067 = vadd.f32 0.0, %v3066
      %v3068 = vpop.f32.mrf.mxu0
      %v3069 = vadd.f32 0.0, %v3068
      %3070 = vmatmul.bf16.gmra.mxu0 %v2952
      %v3071 = vpop.f32.mrf.mxu0
      %v3072 = vadd.f32 0.0, %v3071
      %v3073 = vpop.f32.mrf.mxu0
      %v3074 = vadd.f32 0.0, %v3073
      %3075 = vmatmul.bf16.gmra.mxu0 %v2953
      %v3076 = vpop.f32.mrf.mxu0
      %v3077 = vadd.f32 0.0, %v3076
      %v3078 = vpop.f32.mrf.mxu0
      %v3079 = vadd.f32 0.0, %v3078
      %3080 = vmatmul.bf16.gmra.mxu0 %v2954
      %v3081 = vpop.f32.mrf.mxu0
      %v3082 = vadd.f32 0.0, %v3081
      %v3083 = vpop.f32.mrf.mxu0
      %v3084 = vadd.f32 0.0, %v3083
      %3085 = vdwg.mxu0
      %3086 = vmatpush.bf16.msra.mxu0 %v3035
      %3087 = vmatpush.bf16.msra.mxu0 %v3033
      %3088 = vmatpush.bf16.msra.mxu0 %v3031
      %3089 = vmatpush.bf16.msra.mxu0 %v3029
      %3090 = vmatpush.bf16.msra.mxu0 %v3027
      %3091 = vmatpush.bf16.msra.mxu0 %v3025
      %3092 = vmatpush.bf16.msra.mxu0 %v3023
      %3093 = vmatpush.bf16.msra.mxu0 %v3021
      %3094 = vmatmul.bf16.gmra.mxu0 %v2950
      %v3095 = vpop.f32.mrf.mxu0
      %v3096 = vadd.f32 0.0, %v3095
      %v3097 = vpop.f32.mrf.mxu0
      %v3098 = vadd.f32 0.0, %v3097
      %3099 = vmatmul.bf16.gmra.mxu0 %v2951
      %v3100 = vpop.f32.mrf.mxu0
      %v3101 = vadd.f32 0.0, %v3100
      %v3102 = vpop.f32.mrf.mxu0
      %v3103 = vadd.f32 0.0, %v3102
      %3104 = vmatmul.bf16.gmra.mxu0 %v2952
      %v3105 = vpop.f32.mrf.mxu0
      %v3106 = vadd.f32 0.0, %v3105
      %v3107 = vpop.f32.mrf.mxu0
      %v3108 = vadd.f32 0.0, %v3107
      %3109 = vmatmul.bf16.gmra.mxu0 %v2953
      %v3110 = vpop.f32.mrf.mxu0
      %v3111 = vadd.f32 0.0, %v3110
      %v3112 = vpop.f32.mrf.mxu0
      %v3113 = vadd.f32 0.0, %v3112
      %3114 = vmatmul.bf16.gmra.mxu0 %v2954
      %v3115 = vpop.f32.mrf.mxu0
      %v3116 = vadd.f32 0.0, %v3115
      %v3117 = vpop.f32.mrf.mxu0
      %v3118 = vadd.f32 0.0, %v3117
      %3119 = vdwg.mxu0
      %v3120 = vld [vmem:[#allocation3] sm:$0xff]
      %v3121 = vld [vmem:[#allocation3 + $0x8] sm:$0xff]
      %v3122 = vld [vmem:[#allocation3 + $0x10] sm:$0xff]
      %v3123 = vld [vmem:[#allocation3 + $0x18] sm:$0xff]
      %v3124 = vld [vmem:[#allocation3 + $0x20] sm:$0xff]
      %v3125 = vld [vmem:[#allocation3 + $0x28] sm:$0xff]
      %v3126 = vld [vmem:[#allocation3 + $0x30] sm:$0xff]
      %v3127 = vld [vmem:[#allocation3 + $0x38] sm:$0xff]
      %v3128 = vld [vmem:[#allocation3 + $0x40] sm:$0xff]
      %v3129 = vld [vmem:[#allocation3 + $0x48] sm:$0xff]
      %v3130 = vld [vmem:[#allocation3 + $0x50] sm:$0xff]
      %v3131 = vld [vmem:[#allocation3 + $0x58] sm:$0xff]
      %v3132 = vld [vmem:[#allocation3 + $0x60] sm:$0xff]
      %v3133 = vld [vmem:[#allocation3 + $0x68] sm:$0xff]
      %v3134 = vld [vmem:[#allocation3 + $0x70] sm:$0xff]
      %v3135 = vld [vmem:[#allocation3 + $0x78] sm:$0xff]
      %v3136 = vld [vmem:[#allocation3 + $0x80] sm:$0xff]
      %v3137 = vld [vmem:[#allocation3 + $0x88] sm:$0xff]
      %v3138 = vld [vmem:[#allocation3 + $0x90] sm:$0xff]
      %v3139 = vld [vmem:[#allocation3 + $0x98] sm:$0xff]
      %v3140 = vadd.f32 %v3120, %v3062
      %v3141 = vadd.f32 %v3121, %v3096
      %v3142 = vadd.f32 %v3122, %v3064
      %v3143 = vadd.f32 %v3123, %v3098
      %v3144 = vadd.f32 %v3124, %v3067
      %v3145 = vadd.f32 %v3125, %v3101
      %v3146 = vadd.f32 %v3126, %v3069
      %v3147 = vadd.f32 %v3127, %v3103
      %v3148 = vadd.f32 %v3128, %v3072
      %v3149 = vadd.f32 %v3129, %v3106
      %v3150 = vadd.f32 %v3130, %v3074
      %v3151 = vadd.f32 %v3131, %v3108
      %v3152 = vadd.f32 %v3132, %v3077
      %v3153 = vadd.f32 %v3133, %v3111
      %v3154 = vadd.f32 %v3134, %v3079
      %v3155 = vadd.f32 %v3135, %v3113
      %v3156 = vadd.f32 %v3136, %v3082
      %v3157 = vadd.f32 %v3137, %v3116
      %v3158 = vadd.f32 %v3138, %v3084
      %v3159 = vadd.f32 %v3139, %v3118
      %3160 = vst [vmem:[#allocation3] sm:$0xff] %v3140
      %3161 = vst [vmem:[#allocation3 + $0x8] sm:$0xff] %v3141
      %3162 = vst [vmem:[#allocation3 + $0x10] sm:$0xff] %v3142
      %3163 = vst [vmem:[#allocation3 + $0x18] sm:$0xff] %v3143
      %3164 = vst [vmem:[#allocation3 + $0x20] sm:$0xff] %v3144
      %3165 = vst [vmem:[#allocation3 + $0x28] sm:$0xff] %v3145
      %3166 = vst [vmem:[#allocation3 + $0x30] sm:$0xff] %v3146
      %3167 = vst [vmem:[#allocation3 + $0x38] sm:$0xff] %v3147
      %3168 = vst [vmem:[#allocation3 + $0x40] sm:$0xff] %v3148
      %3169 = vst [vmem:[#allocation3 + $0x48] sm:$0xff] %v3149
      %3170 = vst [vmem:[#allocation3 + $0x50] sm:$0xff] %v3150
      %3171 = vst [vmem:[#allocation3 + $0x58] sm:$0xff] %v3151
      %3172 = vst [vmem:[#allocation3 + $0x60] sm:$0xff] %v3152
      %3173 = vst [vmem:[#allocation3 + $0x68] sm:$0xff] %v3153
      %3174 = vst [vmem:[#allocation3 + $0x70] sm:$0xff] %v3154
      %3175 = vst [vmem:[#allocation3 + $0x78] sm:$0xff] %v3155
      %3176 = vst [vmem:[#allocation3 + $0x80] sm:$0xff] %v3156
      %3177 = vst [vmem:[#allocation3 + $0x88] sm:$0xff] %v3157
      %3178 = vst [vmem:[#allocation3 + $0x90] sm:$0xff] %v3158
      %3179 = vst [vmem:[#allocation3 + $0x98] sm:$0xff] %v3159
      %v3180 = vld [vmem:[#allocation4 + $0x10] sm:$0xff]
      %v3181 = vld [vmem:[#allocation4 + $0x18] sm:$0xff]
      %v3182 = vld [vmem:[#allocation4 + $0x20] sm:$0xff]
      %v3183 = vld [vmem:[#allocation4 + $0x28] sm:$0xff]
      %v3184 = vld [vmem:[#allocation4 + $0x30] sm:$0xff]
      %v3185 = vld [vmem:[#allocation4 + $0x38] sm:$0xff]
      %v3186 = vld [vmem:[#allocation4 + $0x40] sm:$0xff]
      %v3187 = vld [vmem:[#allocation4 + $0x48] sm:$0xff]
      %v3188 = vld [vmem:[#allocation4 + $0x50] sm:$0xff]
      %v3189 = vld [vmem:[#allocation4 + $0x58] sm:$0xff]
      %v3190 = vpack.c.bf16 %v3181, %v3180
      %v3191 = vpack.c.bf16 %v3183, %v3182
      %v3192 = vpack.c.bf16 %v3185, %v3184
      %v3193 = vpack.c.bf16 %v3187, %v3186
      %v3194 = vpack.c.bf16 %v3189, %v3188
      %s3195 = scalar_lea.vmem %s3, 256
      %v3196 = vld [vmem:[%s3195] sm:$0xff]
      %v3197 = vld [vmem:[%s3195 + $0x8] sm:$0xff]
      %v3198 = vld [vmem:[%s3195 + $0x10] sm:$0xff]
      %v3199 = vld [vmem:[%s3195 + $0x18] sm:$0xff]
      %v3200 = vld [vmem:[%s3195 + $0x20] sm:$0xff]
      %v3201 = vld [vmem:[%s3195 + $0x28] sm:$0xff]
      %v3202 = vld [vmem:[%s3195 + $0x30] sm:$0xff]
      %v3203 = vld [vmem:[%s3195 + $0x38] sm:$0xff]
      %v3204 = vld [vmem:[%s3195 + $0x40] sm:$0xff]
      %v3205 = vld [vmem:[%s3195 + $0x48] sm:$0xff]
      %v3206 = vld [vmem:[%s3195 + $0x50] sm:$0xff]
      %v3207 = vld [vmem:[%s3195 + $0x58] sm:$0xff]
      %v3208 = vld [vmem:[%s3195 + $0x60] sm:$0xff]
      %v3209 = vld [vmem:[%s3195 + $0x68] sm:$0xff]
      %v3210 = vld [vmem:[%s3195 + $0x70] sm:$0xff]
      %v3211 = vld [vmem:[%s3195 + $0x78] sm:$0xff]
      %v3228 = vunpack.c.l.b16 %v3196
      %v3229 = vunpack.c.h.b16 %v3196
      %v3230 = vunpack.c.l.b16 %v3197
      %v3231 = vunpack.c.h.b16 %v3197
      %v3232 = vunpack.c.l.b16 %v3198
      %v3233 = vunpack.c.h.b16 %v3198
      %v3234 = vunpack.c.l.b16 %v3199
      %v3235 = vunpack.c.h.b16 %v3199
      %v3236 = vunpack.c.l.b16 %v3200
      %v3237 = vunpack.c.h.b16 %v3200
      %v3238 = vunpack.c.l.b16 %v3201
      %v3239 = vunpack.c.h.b16 %v3201
      %v3240 = vunpack.c.l.b16 %v3202
      %v3241 = vunpack.c.h.b16 %v3202
      %v3242 = vunpack.c.l.b16 %v3203
      %v3243 = vunpack.c.h.b16 %v3203
      %v3244 = vunpack.c.l.b16 %v3204
      %v3245 = vunpack.c.h.b16 %v3204
      %v3246 = vunpack.c.l.b16 %v3205
      %v3247 = vunpack.c.h.b16 %v3205
      %v3248 = vunpack.c.l.b16 %v3206
      %v3249 = vunpack.c.h.b16 %v3206
      %v3250 = vunpack.c.l.b16 %v3207
      %v3251 = vunpack.c.h.b16 %v3207
      %v3252 = vunpack.c.l.b16 %v3208
      %v3253 = vunpack.c.h.b16 %v3208
      %v3254 = vunpack.c.l.b16 %v3209
      %v3255 = vunpack.c.h.b16 %v3209
      %v3256 = vunpack.c.l.b16 %v3210
      %v3257 = vunpack.c.h.b16 %v3210
      %v3258 = vunpack.c.l.b16 %v3211
      %v3259 = vunpack.c.h.b16 %v3211
      %v3260 = vpack.c.b16 %v3230, %v3228
      %v3261 = vpack.c.b16 %v3231, %v3229
      %v3262 = vpack.c.b16 %v3234, %v3232
      %v3263 = vpack.c.b16 %v3235, %v3233
      %v3264 = vpack.c.b16 %v3238, %v3236
      %v3265 = vpack.c.b16 %v3239, %v3237
      %v3266 = vpack.c.b16 %v3242, %v3240
      %v3267 = vpack.c.b16 %v3243, %v3241
      %v3268 = vpack.c.b16 %v3246, %v3244
      %v3269 = vpack.c.b16 %v3247, %v3245
      %v3270 = vpack.c.b16 %v3250, %v3248
      %v3271 = vpack.c.b16 %v3251, %v3249
      %v3272 = vpack.c.b16 %v3254, %v3252
      %v3273 = vpack.c.b16 %v3255, %v3253
      %v3274 = vpack.c.b16 %v3258, %v3256
      %v3275 = vpack.c.b16 %v3259, %v3257
      %3292 = vmatpush.bf16.msra.mxu0 %v3274
      %3293 = vmatpush.bf16.msra.mxu0 %v3272
      %3294 = vmatpush.bf16.msra.mxu0 %v3270
      %3295 = vmatpush.bf16.msra.mxu0 %v3268
      %3296 = vmatpush.bf16.msra.mxu0 %v3266
      %3297 = vmatpush.bf16.msra.mxu0 %v3264
      %3298 = vmatpush.bf16.msra.mxu0 %v3262
      %3299 = vmatpush.bf16.msra.mxu0 %v3260
      %3300 = vmatmul.bf16.gmra.mxu0 %v3190
      %v3301 = vpop.f32.mrf.mxu0
      %v3302 = vadd.f32 0.0, %v3301
      %v3303 = vpop.f32.mrf.mxu0
      %v3304 = vadd.f32 0.0, %v3303
      %3305 = vmatmul.bf16.gmra.mxu0 %v3191
      %v3306 = vpop.f32.mrf.mxu0
      %v3307 = vadd.f32 0.0, %v3306
      %v3308 = vpop.f32.mrf.mxu0
      %v3309 = vadd.f32 0.0, %v3308
      %3310 = vmatmul.bf16.gmra.mxu0 %v3192
      %v3311 = vpop.f32.mrf.mxu0
      %v3312 = vadd.f32 0.0, %v3311
      %v3313 = vpop.f32.mrf.mxu0
      %v3314 = vadd.f32 0.0, %v3313
      %3315 = vmatmul.bf16.gmra.mxu0 %v3193
      %v3316 = vpop.f32.mrf.mxu0
      %v3317 = vadd.f32 0.0, %v3316
      %v3318 = vpop.f32.mrf.mxu0
      %v3319 = vadd.f32 0.0, %v3318
      %3320 = vmatmul.bf16.gmra.mxu0 %v3194
      %v3321 = vpop.f32.mrf.mxu0
      %v3322 = vadd.f32 0.0, %v3321
      %v3323 = vpop.f32.mrf.mxu0
      %v3324 = vadd.f32 0.0, %v3323
      %3325 = vdwg.mxu0
      %3326 = vmatpush.bf16.msra.mxu0 %v3275
      %3327 = vmatpush.bf16.msra.mxu0 %v3273
      %3328 = vmatpush.bf16.msra.mxu0 %v3271
      %3329 = vmatpush.bf16.msra.mxu0 %v3269
      %3330 = vmatpush.bf16.msra.mxu0 %v3267
      %3331 = vmatpush.bf16.msra.mxu0 %v3265
      %3332 = vmatpush.bf16.msra.mxu0 %v3263
      %3333 = vmatpush.bf16.msra.mxu0 %v3261
      %3334 = vmatmul.bf16.gmra.mxu0 %v3190
      %v3335 = vpop.f32.mrf.mxu0
      %v3336 = vadd.f32 0.0, %v3335
      %v3337 = vpop.f32.mrf.mxu0
      %v3338 = vadd.f32 0.0, %v3337
      %3339 = vmatmul.bf16.gmra.mxu0 %v3191
      %v3340 = vpop.f32.mrf.mxu0
      %v3341 = vadd.f32 0.0, %v3340
      %v3342 = vpop.f32.mrf.mxu0
      %v3343 = vadd.f32 0.0, %v3342
      %3344 = vmatmul.bf16.gmra.mxu0 %v3192
      %v3345 = vpop.f32.mrf.mxu0
      %v3346 = vadd.f32 0.0, %v3345
      %v3347 = vpop.f32.mrf.mxu0
      %v3348 = vadd.f32 0.0, %v3347
      %3349 = vmatmul.bf16.gmra.mxu0 %v3193
      %v3350 = vpop.f32.mrf.mxu0
      %v3351 = vadd.f32 0.0, %v3350
      %v3352 = vpop.f32.mrf.mxu0
      %v3353 = vadd.f32 0.0, %v3352
      %3354 = vmatmul.bf16.gmra.mxu0 %v3194
      %v3355 = vpop.f32.mrf.mxu0
      %v3356 = vadd.f32 0.0, %v3355
      %v3357 = vpop.f32.mrf.mxu0
      %v3358 = vadd.f32 0.0, %v3357
      %3359 = vdwg.mxu0
      %v3360 = vld [vmem:[#allocation3] sm:$0xff]
      %v3361 = vld [vmem:[#allocation3 + $0x8] sm:$0xff]
      %v3362 = vld [vmem:[#allocation3 + $0x10] sm:$0xff]
      %v3363 = vld [vmem:[#allocation3 + $0x18] sm:$0xff]
      %v3364 = vld [vmem:[#allocation3 + $0x20] sm:$0xff]
      %v3365 = vld [vmem:[#allocation3 + $0x28] sm:$0xff]
      %v3366 = vld [vmem:[#allocation3 + $0x30] sm:$0xff]
      %v3367 = vld [vmem:[#allocation3 + $0x38] sm:$0xff]
      %v3368 = vld [vmem:[#allocation3 + $0x40] sm:$0xff]
      %v3369 = vld [vmem:[#allocation3 + $0x48] sm:$0xff]
      %v3370 = vld [vmem:[#allocation3 + $0x50] sm:$0xff]
      %v3371 = vld [vmem:[#allocation3 + $0x58] sm:$0xff]
      %v3372 = vld [vmem:[#allocation3 + $0x60] sm:$0xff]
      %v3373 = vld [vmem:[#allocation3 + $0x68] sm:$0xff]
      %v3374 = vld [vmem:[#allocation3 + $0x70] sm:$0xff]
      %v3375 = vld [vmem:[#allocation3 + $0x78] sm:$0xff]
      %v3376 = vld [vmem:[#allocation3 + $0x80] sm:$0xff]
      %v3377 = vld [vmem:[#allocation3 + $0x88] sm:$0xff]
      %v3378 = vld [vmem:[#allocation3 + $0x90] sm:$0xff]
      %v3379 = vld [vmem:[#allocation3 + $0x98] sm:$0xff]
      %v3380 = vadd.f32 %v3360, %v3302
      %v3381 = vadd.f32 %v3361, %v3336
      %v3382 = vadd.f32 %v3362, %v3304
      %v3383 = vadd.f32 %v3363, %v3338
      %v3384 = vadd.f32 %v3364, %v3307
      %v3385 = vadd.f32 %v3365, %v3341
      %v3386 = vadd.f32 %v3366, %v3309
      %v3387 = vadd.f32 %v3367, %v3343
      %v3388 = vadd.f32 %v3368, %v3312
      %v3389 = vadd.f32 %v3369, %v3346
      %v3390 = vadd.f32 %v3370, %v3314
      %v3391 = vadd.f32 %v3371, %v3348
      %v3392 = vadd.f32 %v3372, %v3317
      %v3393 = vadd.f32 %v3373, %v3351
      %v3394 = vadd.f32 %v3374, %v3319
      %v3395 = vadd.f32 %v3375, %v3353
      %v3396 = vadd.f32 %v3376, %v3322
      %v3397 = vadd.f32 %v3377, %v3356
      %v3398 = vadd.f32 %v3378, %v3324
      %v3399 = vadd.f32 %v3379, %v3358
      %3400 = vst [vmem:[#allocation3] sm:$0xff] %v3380
      %3401 = vst [vmem:[#allocation3 + $0x8] sm:$0xff] %v3381
      %3402 = vst [vmem:[#allocation3 + $0x10] sm:$0xff] %v3382
      %3403 = vst [vmem:[#allocation3 + $0x18] sm:$0xff] %v3383
      %3404 = vst [vmem:[#allocation3 + $0x20] sm:$0xff] %v3384
      %3405 = vst [vmem:[#allocation3 + $0x28] sm:$0xff] %v3385
      %3406 = vst [vmem:[#allocation3 + $0x30] sm:$0xff] %v3386
      %3407 = vst [vmem:[#allocation3 + $0x38] sm:$0xff] %v3387
      %3408 = vst [vmem:[#allocation3 + $0x40] sm:$0xff] %v3388
      %3409 = vst [vmem:[#allocation3 + $0x48] sm:$0xff] %v3389
      %3410 = vst [vmem:[#allocation3 + $0x50] sm:$0xff] %v3390
      %3411 = vst [vmem:[#allocation3 + $0x58] sm:$0xff] %v3391
      %3412 = vst [vmem:[#allocation3 + $0x60] sm:$0xff] %v3392
      %3413 = vst [vmem:[#allocation3 + $0x68] sm:$0xff] %v3393
      %3414 = vst [vmem:[#allocation3 + $0x70] sm:$0xff] %v3394
      %3415 = vst [vmem:[#allocation3 + $0x78] sm:$0xff] %v3395
      %3416 = vst [vmem:[#allocation3 + $0x80] sm:$0xff] %v3396
      %3417 = vst [vmem:[#allocation3 + $0x88] sm:$0xff] %v3397
      %3418 = vst [vmem:[#allocation3 + $0x90] sm:$0xff] %v3398
      %3419 = vst [vmem:[#allocation3 + $0x98] sm:$0xff] %v3399
      %v3420 = vld [vmem:[#allocation4 + $0x18] sm:$0xff]
      %v3421 = vld [vmem:[#allocation4 + $0x20] sm:$0xff]
      %v3422 = vld [vmem:[#allocation4 + $0x28] sm:$0xff]
      %v3423 = vld [vmem:[#allocation4 + $0x30] sm:$0xff]
      %v3424 = vld [vmem:[#allocation4 + $0x38] sm:$0xff]
      %v3425 = vld [vmem:[#allocation4 + $0x40] sm:$0xff]
      %v3426 = vld [vmem:[#allocation4 + $0x48] sm:$0xff]
      %v3427 = vld [vmem:[#allocation4 + $0x50] sm:$0xff]
      %v3428 = vld [vmem:[#allocation4 + $0x58] sm:$0xff]
      %v3429 = vld [vmem:[#allocation4 + $0x60] sm:$0xff]
      %v3430 = vpack.c.bf16 %v3421, %v3420
      %v3431 = vpack.c.bf16 %v3423, %v3422
      %v3432 = vpack.c.bf16 %v3425, %v3424
      %v3433 = vpack.c.bf16 %v3427, %v3426
      %v3434 = vpack.c.bf16 %v3429, %v3428
      %s3435 = scalar_lea.vmem %s3, 384
      %v3436 = vld [vmem:[%s3435] sm:$0xff]
      %v3437 = vld [vmem:[%s3435 + $0x8] sm:$0xff]
      %v3438 = vld [vmem:[%s3435 + $0x10] sm:$0xff]
      %v3439 = vld [vmem:[%s3435 + $0x18] sm:$0xff]
      %v3440 = vld [vmem:[%s3435 + $0x20] sm:$0xff]
      %v3441 = vld [vmem:[%s3435 + $0x28] sm:$0xff]
      %v3442 = vld [vmem:[%s3435 + $0x30] sm:$0xff]
      %v3443 = vld [vmem:[%s3435 + $0x38] sm:$0xff]
      %v3444 = vld [vmem:[%s3435 + $0x40] sm:$0xff]
      %v3445 = vld [vmem:[%s3435 + $0x48] sm:$0xff]
      %v3446 = vld [vmem:[%s3435 + $0x50] sm:$0xff]
      %v3447 = vld [vmem:[%s3435 + $0x58] sm:$0xff]
      %v3448 = vld [vmem:[%s3435 + $0x60] sm:$0xff]
      %v3449 = vld [vmem:[%s3435 + $0x68] sm:$0xff]
      %v3450 = vld [vmem:[%s3435 + $0x70] sm:$0xff]
      %v3451 = vld [vmem:[%s3435 + $0x78] sm:$0xff]
      %v3468 = vunpack.c.l.b16 %v3436
      %v3469 = vunpack.c.h.b16 %v3436
      %v3470 = vunpack.c.l.b16 %v3437
      %v3471 = vunpack.c.h.b16 %v3437
      %v3472 = vunpack.c.l.b16 %v3438
      %v3473 = vunpack.c.h.b16 %v3438
      %v3474 = vunpack.c.l.b16 %v3439
      %v3475 = vunpack.c.h.b16 %v3439
      %v3476 = vunpack.c.l.b16 %v3440
      %v3477 = vunpack.c.h.b16 %v3440
      %v3478 = vunpack.c.l.b16 %v3441
      %v3479 = vunpack.c.h.b16 %v3441
      %v3480 = vunpack.c.l.b16 %v3442
      %v3481 = vunpack.c.h.b16 %v3442
      %v3482 = vunpack.c.l.b16 %v3443
      %v3483 = vunpack.c.h.b16 %v3443
      %v3484 = vunpack.c.l.b16 %v3444
      %v3485 = vunpack.c.h.b16 %v3444
      %v3486 = vunpack.c.l.b16 %v3445
      %v3487 = vunpack.c.h.b16 %v3445
      %v3488 = vunpack.c.l.b16 %v3446
      %v3489 = vunpack.c.h.b16 %v3446
      %v3490 = vunpack.c.l.b16 %v3447
      %v3491 = vunpack.c.h.b16 %v3447
      %v3492 = vunpack.c.l.b16 %v3448
      %v3493 = vunpack.c.h.b16 %v3448
      %v3494 = vunpack.c.l.b16 %v3449
      %v3495 = vunpack.c.h.b16 %v3449
      %v3496 = vunpack.c.l.b16 %v3450
      %v3497 = vunpack.c.h.b16 %v3450
      %v3498 = vunpack.c.l.b16 %v3451
      %v3499 = vunpack.c.h.b16 %v3451
      %v3500 = vpack.c.b16 %v3470, %v3468
      %v3501 = vpack.c.b16 %v3471, %v3469
      %v3502 = vpack.c.b16 %v3474, %v3472
      %v3503 = vpack.c.b16 %v3475, %v3473
      %v3504 = vpack.c.b16 %v3478, %v3476
      %v3505 = vpack.c.b16 %v3479, %v3477
      %v3506 = vpack.c.b16 %v3482, %v3480
      %v3507 = vpack.c.b16 %v3483, %v3481
      %v3508 = vpack.c.b16 %v3486, %v3484
      %v3509 = vpack.c.b16 %v3487, %v3485
      %v3510 = vpack.c.b16 %v3490, %v3488
      %v3511 = vpack.c.b16 %v3491, %v3489
      %v3512 = vpack.c.b16 %v3494, %v3492
      %v3513 = vpack.c.b16 %v3495, %v3493
      %v3514 = vpack.c.b16 %v3498, %v3496
      %v3515 = vpack.c.b16 %v3499, %v3497
      %3532 = vmatpush.bf16.msra.mxu0 %v3514
      %3533 = vmatpush.bf16.msra.mxu0 %v3512
      %3534 = vmatpush.bf16.msra.mxu0 %v3510
      %3535 = vmatpush.bf16.msra.mxu0 %v3508
      %3536 = vmatpush.bf16.msra.mxu0 %v3506
      %3537 = vmatpush.bf16.msra.mxu0 %v3504
      %3538 = vmatpush.bf16.msra.mxu0 %v3502
      %3539 = vmatpush.bf16.msra.mxu0 %v3500
      %3540 = vmatmul.bf16.gmra.mxu0 %v3430
      %v3541 = vpop.f32.mrf.mxu0
      %v3542 = vadd.f32 0.0, %v3541
      %v3543 = vpop.f32.mrf.mxu0
      %v3544 = vadd.f32 0.0, %v3543
      %3545 = vmatmul.bf16.gmra.mxu0 %v3431
      %v3546 = vpop.f32.mrf.mxu0
      %v3547 = vadd.f32 0.0, %v3546
      %v3548 = vpop.f32.mrf.mxu0
      %v3549 = vadd.f32 0.0, %v3548
      %3550 = vmatmul.bf16.gmra.mxu0 %v3432
      %v3551 = vpop.f32.mrf.mxu0
      %v3552 = vadd.f32 0.0, %v3551
      %v3553 = vpop.f32.mrf.mxu0
      %v3554 = vadd.f32 0.0, %v3553
      %3555 = vmatmul.bf16.gmra.mxu0 %v3433
      %v3556 = vpop.f32.mrf.mxu0
      %v3557 = vadd.f32 0.0, %v3556
      %v3558 = vpop.f32.mrf.mxu0
      %v3559 = vadd.f32 0.0, %v3558
      %3560 = vmatmul.bf16.gmra.mxu0 %v3434
      %v3561 = vpop.f32.mrf.mxu0
      %v3562 = vadd.f32 0.0, %v3561
      %v3563 = vpop.f32.mrf.mxu0
      %v3564 = vadd.f32 0.0, %v3563
      %3565 = vdwg.mxu0
      %3566 = vmatpush.bf16.msra.mxu0 %v3515
      %3567 = vmatpush.bf16.msra.mxu0 %v3513
      %3568 = vmatpush.bf16.msra.mxu0 %v3511
      %3569 = vmatpush.bf16.msra.mxu0 %v3509
      %3570 = vmatpush.bf16.msra.mxu0 %v3507
      %3571 = vmatpush.bf16.msra.mxu0 %v3505
      %3572 = vmatpush.bf16.msra.mxu0 %v3503
      %3573 = vmatpush.bf16.msra.mxu0 %v3501
      %3574 = vmatmul.bf16.gmra.mxu0 %v3430
      %v3575 = vpop.f32.mrf.mxu0
      %v3576 = vadd.f32 0.0, %v3575
      %v3577 = vpop.f32.mrf.mxu0
      %v3578 = vadd.f32 0.0, %v3577
      %3579 = vmatmul.bf16.gmra.mxu0 %v3431
      %v3580 = vpop.f32.mrf.mxu0
      %v3581 = vadd.f32 0.0, %v3580
      %v3582 = vpop.f32.mrf.mxu0
      %v3583 = vadd.f32 0.0, %v3582
      %3584 = vmatmul.bf16.gmra.mxu0 %v3432
      %v3585 = vpop.f32.mrf.mxu0
      %v3586 = vadd.f32 0.0, %v3585
      %v3587 = vpop.f32.mrf.mxu0
      %v3588 = vadd.f32 0.0, %v3587
      %3589 = vmatmul.bf16.gmra.mxu0 %v3433
      %v3590 = vpop.f32.mrf.mxu0
      %v3591 = vadd.f32 0.0, %v3590
      %v3592 = vpop.f32.mrf.mxu0
      %v3593 = vadd.f32 0.0, %v3592
      %3594 = vmatmul.bf16.gmra.mxu0 %v3434
      %v3595 = vpop.f32.mrf.mxu0
      %v3596 = vadd.f32 0.0, %v3595
      %v3597 = vpop.f32.mrf.mxu0
      %v3598 = vadd.f32 0.0, %v3597
      %3599 = vdwg.mxu0
      %v3600 = vld [vmem:[#allocation3] sm:$0xff]
      %v3601 = vld [vmem:[#allocation3 + $0x8] sm:$0xff]
      %v3602 = vld [vmem:[#allocation3 + $0x10] sm:$0xff]
      %v3603 = vld [vmem:[#allocation3 + $0x18] sm:$0xff]
      %v3604 = vld [vmem:[#allocation3 + $0x20] sm:$0xff]
      %v3605 = vld [vmem:[#allocation3 + $0x28] sm:$0xff]
      %v3606 = vld [vmem:[#allocation3 + $0x30] sm:$0xff]
      %v3607 = vld [vmem:[#allocation3 + $0x38] sm:$0xff]
      %v3608 = vld [vmem:[#allocation3 + $0x40] sm:$0xff]
      %v3609 = vld [vmem:[#allocation3 + $0x48] sm:$0xff]
      %v3610 = vld [vmem:[#allocation3 + $0x50] sm:$0xff]
      %v3611 = vld [vmem:[#allocation3 + $0x58] sm:$0xff]
      %v3612 = vld [vmem:[#allocation3 + $0x60] sm:$0xff]
      %v3613 = vld [vmem:[#allocation3 + $0x68] sm:$0xff]
      %v3614 = vld [vmem:[#allocation3 + $0x70] sm:$0xff]
      %v3615 = vld [vmem:[#allocation3 + $0x78] sm:$0xff]
      %v3616 = vld [vmem:[#allocation3 + $0x80] sm:$0xff]
      %v3617 = vld [vmem:[#allocation3 + $0x88] sm:$0xff]
      %v3618 = vld [vmem:[#allocation3 + $0x90] sm:$0xff]
      %v3619 = vld [vmem:[#allocation3 + $0x98] sm:$0xff]
      %v3620 = vadd.f32 %v3600, %v3542
      %v3621 = vadd.f32 %v3601, %v3576
      %v3622 = vadd.f32 %v3602, %v3544
      %v3623 = vadd.f32 %v3603, %v3578
      %v3624 = vadd.f32 %v3604, %v3547
      %v3625 = vadd.f32 %v3605, %v3581
      %v3626 = vadd.f32 %v3606, %v3549
      %v3627 = vadd.f32 %v3607, %v3583
      %v3628 = vadd.f32 %v3608, %v3552
      %v3629 = vadd.f32 %v3609, %v3586
      %v3630 = vadd.f32 %v3610, %v3554
      %v3631 = vadd.f32 %v3611, %v3588
      %v3632 = vadd.f32 %v3612, %v3557
      %v3633 = vadd.f32 %v3613, %v3591
      %v3634 = vadd.f32 %v3614, %v3559
      %v3635 = vadd.f32 %v3615, %v3593
      %v3636 = vadd.f32 %v3616, %v3562
      %v3637 = vadd.f32 %v3617, %v3596
      %v3638 = vadd.f32 %v3618, %v3564
      %v3639 = vadd.f32 %v3619, %v3598
      %3640 = vst [vmem:[#allocation3] sm:$0xff] %v3620
      %3641 = vst [vmem:[#allocation3 + $0x8] sm:$0xff] %v3621
      %3642 = vst [vmem:[#allocation3 + $0x10] sm:$0xff] %v3622
      %3643 = vst [vmem:[#allocation3 + $0x18] sm:$0xff] %v3623
      %3644 = vst [vmem:[#allocation3 + $0x20] sm:$0xff] %v3624
      %3645 = vst [vmem:[#allocation3 + $0x28] sm:$0xff] %v3625
      %3646 = vst [vmem:[#allocation3 + $0x30] sm:$0xff] %v3626
      %3647 = vst [vmem:[#allocation3 + $0x38] sm:$0xff] %v3627
      %3648 = vst [vmem:[#allocation3 + $0x40] sm:$0xff] %v3628
      %3649 = vst [vmem:[#allocation3 + $0x48] sm:$0xff] %v3629
      %3650 = vst [vmem:[#allocation3 + $0x50] sm:$0xff] %v3630
      %3651 = vst [vmem:[#allocation3 + $0x58] sm:$0xff] %v3631
      %3652 = vst [vmem:[#allocation3 + $0x60] sm:$0xff] %v3632
      %3653 = vst [vmem:[#allocation3 + $0x68] sm:$0xff] %v3633
      %3654 = vst [vmem:[#allocation3 + $0x70] sm:$0xff] %v3634
      %3655 = vst [vmem:[#allocation3 + $0x78] sm:$0xff] %v3635
      %3656 = vst [vmem:[#allocation3 + $0x80] sm:$0xff] %v3636
      %3657 = vst [vmem:[#allocation3 + $0x88] sm:$0xff] %v3637
      %3658 = vst [vmem:[#allocation3 + $0x90] sm:$0xff] %v3638
      %3659 = vst [vmem:[#allocation3 + $0x98] sm:$0xff] %v3639
      %v3660 = vld [vmem:[#allocation4 + $0x20] sm:$0xff]
      %v3661 = vld [vmem:[#allocation4 + $0x28] sm:$0xff]
      %v3662 = vld [vmem:[#allocation4 + $0x30] sm:$0xff]
      %v3663 = vld [vmem:[#allocation4 + $0x38] sm:$0xff]
      %v3664 = vld [vmem:[#allocation4 + $0x40] sm:$0xff]
      %v3665 = vld [vmem:[#allocation4 + $0x48] sm:$0xff]
      %v3666 = vld [vmem:[#allocation4 + $0x50] sm:$0xff]
      %v3667 = vld [vmem:[#allocation4 + $0x58] sm:$0xff]
      %v3668 = vld [vmem:[#allocation4 + $0x60] sm:$0xff]
      %v3669 = vld [vmem:[#allocation4 + $0x68] sm:$0xff]
      %v3670 = vpack.c.bf16 %v3661, %v3660
      %v3671 = vpack.c.bf16 %v3663, %v3662
      %v3672 = vpack.c.bf16 %v3665, %v3664
      %v3673 = vpack.c.bf16 %v3667, %v3666
      %v3674 = vpack.c.bf16 %v3669, %v3668
      %s3675 = scalar_lea.vmem %s3, 512
      %v3676 = vld [vmem:[%s3675] sm:$0xff]
      %v3677 = vld [vmem:[%s3675 + $0x8] sm:$0xff]
      %v3678 = vld [vmem:[%s3675 + $0x10] sm:$0xff]
      %v3679 = vld [vmem:[%s3675 + $0x18] sm:$0xff]
      %v3680 = vld [vmem:[%s3675 + $0x20] sm:$0xff]
      %v3681 = vld [vmem:[%s3675 + $0x28] sm:$0xff]
      %v3682 = vld [vmem:[%s3675 + $0x30] sm:$0xff]
      %v3683 = vld [vmem:[%s3675 + $0x38] sm:$0xff]
      %v3684 = vld [vmem:[%s3675 + $0x40] sm:$0xff]
      %v3685 = vld [vmem:[%s3675 + $0x48] sm:$0xff]
      %v3686 = vld [vmem:[%s3675 + $0x50] sm:$0xff]
      %v3687 = vld [vmem:[%s3675 + $0x58] sm:$0xff]
      %v3688 = vld [vmem:[%s3675 + $0x60] sm:$0xff]
      %v3689 = vld [vmem:[%s3675 + $0x68] sm:$0xff]
      %v3690 = vld [vmem:[%s3675 + $0x70] sm:$0xff]
      %v3691 = vld [vmem:[%s3675 + $0x78] sm:$0xff]
      %v3708 = vunpack.c.l.b16 %v3676
      %v3709 = vunpack.c.h.b16 %v3676
      %v3710 = vunpack.c.l.b16 %v3677
      %v3711 = vunpack.c.h.b16 %v3677
      %v3712 = vunpack.c.l.b16 %v3678
      %v3713 = vunpack.c.h.b16 %v3678
      %v3714 = vunpack.c.l.b16 %v3679
      %v3715 = vunpack.c.h.b16 %v3679
      %v3716 = vunpack.c.l.b16 %v3680
      %v3717 = vunpack.c.h.b16 %v3680
      %v3718 = vunpack.c.l.b16 %v3681
      %v3719 = vunpack.c.h.b16 %v3681
      %v3720 = vunpack.c.l.b16 %v3682
      %v3721 = vunpack.c.h.b16 %v3682
      %v3722 = vunpack.c.l.b16 %v3683
      %v3723 = vunpack.c.h.b16 %v3683
      %v3724 = vunpack.c.l.b16 %v3684
      %v3725 = vunpack.c.h.b16 %v3684
      %v3726 = vunpack.c.l.b16 %v3685
      %v3727 = vunpack.c.h.b16 %v3685
      %v3728 = vunpack.c.l.b16 %v3686
      %v3729 = vunpack.c.h.b16 %v3686
      %v3730 = vunpack.c.l.b16 %v3687
      %v3731 = vunpack.c.h.b16 %v3687
      %v3732 = vunpack.c.l.b16 %v3688
      %v3733 = vunpack.c.h.b16 %v3688
      %v3734 = vunpack.c.l.b16 %v3689
      %v3735 = vunpack.c.h.b16 %v3689
      %v3736 = vunpack.c.l.b16 %v3690
      %v3737 = vunpack.c.h.b16 %v3690
      %v3738 = vunpack.c.l.b16 %v3691
      %v3739 = vunpack.c.h.b16 %v3691
      %v3740 = vpack.c.b16 %v3710, %v3708
      %v3741 = vpack.c.b16 %v3711, %v3709
      %v3742 = vpack.c.b16 %v3714, %v3712
      %v3743 = vpack.c.b16 %v3715, %v3713
      %v3744 = vpack.c.b16 %v3718, %v3716
      %v3745 = vpack.c.b16 %v3719, %v3717
      %v3746 = vpack.c.b16 %v3722, %v3720
      %v3747 = vpack.c.b16 %v3723, %v3721
      %v3748 = vpack.c.b16 %v3726, %v3724
      %v3749 = vpack.c.b16 %v3727, %v3725
      %v3750 = vpack.c.b16 %v3730, %v3728
      %v3751 = vpack.c.b16 %v3731, %v3729
      %v3752 = vpack.c.b16 %v3734, %v3732
      %v3753 = vpack.c.b16 %v3735, %v3733
      %v3754 = vpack.c.b16 %v3738, %v3736
      %v3755 = vpack.c.b16 %v3739, %v3737
      %3772 = vmatpush.bf16.msra.mxu0 %v3754
      %3773 = vmatpush.bf16.msra.mxu0 %v3752
      %3774 = vmatpush.bf16.msra.mxu0 %v3750
      %3775 = vmatpush.bf16.msra.mxu0 %v3748
      %3776 = vmatpush.bf16.msra.mxu0 %v3746
      %3777 = vmatpush.bf16.msra.mxu0 %v3744
      %3778 = vmatpush.bf16.msra.mxu0 %v3742
      %3779 = vmatpush.bf16.msra.mxu0 %v3740
      %3780 = vmatmul.bf16.gmra.mxu0 %v3670
      %v3781 = vpop.f32.mrf.mxu0
      %v3782 = vadd.f32 0.0, %v3781
      %v3783 = vpop.f32.mrf.mxu0
      %v3784 = vadd.f32 0.0, %v3783
      %3785 = vmatmul.bf16.gmra.mxu0 %v3671
      %v3786 = vpop.f32.mrf.mxu0
      %v3787 = vadd.f32 0.0, %v3786
      %v3788 = vpop.f32.mrf.mxu0
      %v3789 = vadd.f32 0.0, %v3788
      %3790 = vmatmul.bf16.gmra.mxu0 %v3672
      %v3791 = vpop.f32.mrf.mxu0
      %v3792 = vadd.f32 0.0, %v3791
      %v3793 = vpop.f32.mrf.mxu0
      %v3794 = vadd.f32 0.0, %v3793
      %3795 = vmatmul.bf16.gmra.mxu0 %v3673
      %v3796 = vpop.f32.mrf.mxu0
      %v3797 = vadd.f32 0.0, %v3796
      %v3798 = vpop.f32.mrf.mxu0
      %v3799 = vadd.f32 0.0, %v3798
      %3800 = vmatmul.bf16.gmra.mxu0 %v3674
      %v3801 = vpop.f32.mrf.mxu0
      %v3802 = vadd.f32 0.0, %v3801
      %v3803 = vpop.f32.mrf.mxu0
      %v3804 = vadd.f32 0.0, %v3803
      %3805 = vdwg.mxu0
      %3806 = vmatpush.bf16.msra.mxu0 %v3755
      %3807 = vmatpush.bf16.msra.mxu0 %v3753
      %3808 = vmatpush.bf16.msra.mxu0 %v3751
      %3809 = vmatpush.bf16.msra.mxu0 %v3749
      %3810 = vmatpush.bf16.msra.mxu0 %v3747
      %3811 = vmatpush.bf16.msra.mxu0 %v3745
      %3812 = vmatpush.bf16.msra.mxu0 %v3743
      %3813 = vmatpush.bf16.msra.mxu0 %v3741
      %3814 = vmatmul.bf16.gmra.mxu0 %v3670
      %v3815 = vpop.f32.mrf.mxu0
      %v3816 = vadd.f32 0.0, %v3815
      %v3817 = vpop.f32.mrf.mxu0
      %v3818 = vadd.f32 0.0, %v3817
      %3819 = vmatmul.bf16.gmra.mxu0 %v3671
      %v3820 = vpop.f32.mrf.mxu0
      %v3821 = vadd.f32 0.0, %v3820
      %v3822 = vpop.f32.mrf.mxu0
      %v3823 = vadd.f32 0.0, %v3822
      %3824 = vmatmul.bf16.gmra.mxu0 %v3672
      %v3825 = vpop.f32.mrf.mxu0
      %v3826 = vadd.f32 0.0, %v3825
      %v3827 = vpop.f32.mrf.mxu0
      %v3828 = vadd.f32 0.0, %v3827
      %3829 = vmatmul.bf16.gmra.mxu0 %v3673
      %v3830 = vpop.f32.mrf.mxu0
      %v3831 = vadd.f32 0.0, %v3830
      %v3832 = vpop.f32.mrf.mxu0
      %v3833 = vadd.f32 0.0, %v3832
      %3834 = vmatmul.bf16.gmra.mxu0 %v3674
      %v3835 = vpop.f32.mrf.mxu0
      %v3836 = vadd.f32 0.0, %v3835
      %v3837 = vpop.f32.mrf.mxu0
      %v3838 = vadd.f32 0.0, %v3837
      %3839 = vdwg.mxu0
      %v3840 = vld [vmem:[#allocation3] sm:$0xff]
      %v3841 = vld [vmem:[#allocation3 + $0x8] sm:$0xff]
      %v3842 = vld [vmem:[#allocation3 + $0x10] sm:$0xff]
      %v3843 = vld [vmem:[#allocation3 + $0x18] sm:$0xff]
      %v3844 = vld [vmem:[#allocation3 + $0x20] sm:$0xff]
      %v3845 = vld [vmem:[#allocation3 + $0x28] sm:$0xff]
      %v3846 = vld [vmem:[#allocation3 + $0x30] sm:$0xff]
      %v3847 = vld [vmem:[#allocation3 + $0x38] sm:$0xff]
      %v3848 = vld [vmem:[#allocation3 + $0x40] sm:$0xff]
      %v3849 = vld [vmem:[#allocation3 + $0x48] sm:$0xff]
      %v3850 = vld [vmem:[#allocation3 + $0x50] sm:$0xff]
      %v3851 = vld [vmem:[#allocation3 + $0x58] sm:$0xff]
      %v3852 = vld [vmem:[#allocation3 + $0x60] sm:$0xff]
      %v3853 = vld [vmem:[#allocation3 + $0x68] sm:$0xff]
      %v3854 = vld [vmem:[#allocation3 + $0x70] sm:$0xff]
      %v3855 = vld [vmem:[#allocation3 + $0x78] sm:$0xff]
      %v3856 = vld [vmem:[#allocation3 + $0x80] sm:$0xff]
      %v3857 = vld [vmem:[#allocation3 + $0x88] sm:$0xff]
      %v3858 = vld [vmem:[#allocation3 + $0x90] sm:$0xff]
      %v3859 = vld [vmem:[#allocation3 + $0x98] sm:$0xff]
      %v3860 = vadd.f32 %v3840, %v3782
      %v3861 = vadd.f32 %v3841, %v3816
      %v3862 = vadd.f32 %v3842, %v3784
      %v3863 = vadd.f32 %v3843, %v3818
      %v3864 = vadd.f32 %v3844, %v3787
      %v3865 = vadd.f32 %v3845, %v3821
      %v3866 = vadd.f32 %v3846, %v3789
      %v3867 = vadd.f32 %v3847, %v3823
      %v3868 = vadd.f32 %v3848, %v3792
      %v3869 = vadd.f32 %v3849, %v3826
      %v3870 = vadd.f32 %v3850, %v3794
      %v3871 = vadd.f32 %v3851, %v3828
      %v3872 = vadd.f32 %v3852, %v3797
      %v3873 = vadd.f32 %v3853, %v3831
      %v3874 = vadd.f32 %v3854, %v3799
      %v3875 = vadd.f32 %v3855, %v3833
      %v3876 = vadd.f32 %v3856, %v3802
      %v3877 = vadd.f32 %v3857, %v3836
      %v3878 = vadd.f32 %v3858, %v3804
      %v3879 = vadd.f32 %v3859, %v3838
      %3880 = vst [vmem:[#allocation3] sm:$0xff] %v3860
      %3881 = vst [vmem:[#allocation3 + $0x8] sm:$0xff] %v3861
      %3882 = vst [vmem:[#allocation3 + $0x10] sm:$0xff] %v3862
      %3883 = vst [vmem:[#allocation3 + $0x18] sm:$0xff] %v3863
      %3884 = vst [vmem:[#allocation3 + $0x20] sm:$0xff] %v3864
      %3885 = vst [vmem:[#allocation3 + $0x28] sm:$0xff] %v3865
      %3886 = vst [vmem:[#allocation3 + $0x30] sm:$0xff] %v3866
      %3887 = vst [vmem:[#allocation3 + $0x38] sm:$0xff] %v3867
      %3888 = vst [vmem:[#allocation3 + $0x40] sm:$0xff] %v3868
      %3889 = vst [vmem:[#allocation3 + $0x48] sm:$0xff] %v3869
      %3890 = vst [vmem:[#allocation3 + $0x50] sm:$0xff] %v3870
      %3891 = vst [vmem:[#allocation3 + $0x58] sm:$0xff] %v3871
      %3892 = vst [vmem:[#allocation3 + $0x60] sm:$0xff] %v3872
      %3893 = vst [vmem:[#allocation3 + $0x68] sm:$0xff] %v3873
      %3894 = vst [vmem:[#allocation3 + $0x70] sm:$0xff] %v3874
      %3895 = vst [vmem:[#allocation3 + $0x78] sm:$0xff] %v3875
      %3896 = vst [vmem:[#allocation3 + $0x80] sm:$0xff] %v3876
      %3897 = vst [vmem:[#allocation3 + $0x88] sm:$0xff] %v3877
      %3898 = vst [vmem:[#allocation3 + $0x90] sm:$0xff] %v3878
      %3899 = vst [vmem:[#allocation3 + $0x98] sm:$0xff] %v3879
      %v3900 = vld [vmem:[#allocation3] sm:$0xff]
      %v3901 = vld [vmem:[#allocation3 + $0x10] sm:$0xff]
      %v3902 = vld [vmem:[#allocation3 + $0x20] sm:$0xff]
      %v3903 = vld [vmem:[#allocation3 + $0x30] sm:$0xff]
      %v3904 = vld [vmem:[#allocation3 + $0x40] sm:$0xff]
      %v3905 = vld [vmem:[#allocation3 + $0x50] sm:$0xff]
      %v3906 = vld [vmem:[#allocation3 + $0x60] sm:$0xff]
      %v3907 = vld [vmem:[#allocation3 + $0x70] sm:$0xff]
      %v3908 = vld [vmem:[#allocation3 + $0x80] sm:$0xff]
      %v3909 = vld [vmem:[#allocation3 + $0x90] sm:$0xff]
      %v3910 = vld [vmem:[#allocation3 + $0x8] sm:$0xff]
      %v3911 = vld [vmem:[#allocation3 + $0x18] sm:$0xff]
      %v3912 = vld [vmem:[#allocation3 + $0x28] sm:$0xff]
      %v3913 = vld [vmem:[#allocation3 + $0x38] sm:$0xff]
      %v3914 = vld [vmem:[#allocation3 + $0x48] sm:$0xff]
      %v3915 = vld [vmem:[#allocation3 + $0x58] sm:$0xff]
      %v3916 = vld [vmem:[#allocation3 + $0x68] sm:$0xff]
      %v3917 = vld [vmem:[#allocation3 + $0x78] sm:$0xff]
      %v3918 = vld [vmem:[#allocation3 + $0x88] sm:$0xff]
      %v3919 = vld [vmem:[#allocation3 + $0x98] sm:$0xff]
      %v3920 = vmax.f32 %v3900, %v3910
      %v3921 = vmax.f32 %v3901, %v3911
      %v3922 = vmax.f32 %v3902, %v3912
      %v3923 = vmax.f32 %v3903, %v3913
      %v3924 = vmax.f32 %v3904, %v3914
      %v3925 = vmax.f32 %v3905, %v3915
      %v3926 = vmax.f32 %v3906, %v3916
      %v3927 = vmax.f32 %v3907, %v3917
      %v3928 = vmax.f32 %v3908, %v3918
      %v3929 = vmax.f32 %v3909, %v3919
      %v3930 = vmax.f32 %v3920, %v3921
      %v3931 = vmax.f32 %v3922, %v3923
      %v3932 = vmax.f32 %v3924, %v3925
      %v3933 = vmax.f32 %v3926, %v3927
      %v3934 = vmax.f32 %v3928, %v3929
      %v3935 = vld [vmem:[%s4] sm:$0x1]
      %v3937 = vperm.slane %v3935, 0
      %v3939 = vadd.f32 %v3930, %v3937
      %v3940 = vadd.f32 %v3931, %v3937
      %v3941 = vadd.f32 %v3932, %v3937
      %v3942 = vadd.f32 %v3933, %v3937
      %v3943 = vadd.f32 %v3934, %v3937
      %v3944 = vmax.f32 %v3939, 0.0
      %v3945 = vmax.f32 %v3940, 0.0
      %v3946 = vmax.f32 %v3941, 0.0
      %v3947 = vmax.f32 %v3942, 0.0
      %v3948 = vmax.f32 %v3943, 0.0
      %v3949 = vpack.c.bf16 %v3944, %v3944
      %v3950 = vpack.c.bf16 %v3945, %v3945
      %v3951 = vpack.c.bf16 %v3946, %v3946
      %v3952 = vpack.c.bf16 %v3947, %v3947
      %v3953 = vpack.c.bf16 %v3948, %v3948
      %v3954 = vld [vmem:[%s5] sm:$0xf]
      %v3955 = vld [vmem:[%s5 + $0x4] sm:$0xf]
      %v3956 = vld [vmem:[%s5 + $0x8] sm:$0xf]
      %v3957 = vld [vmem:[%s5 + $0xc] sm:$0xf]
      %v3958 = vld [vmem:[%s5 + $0x10] sm:$0xf]
      %v3959 = vld [vmem:[%s5 + $0x14] sm:$0xf]
      %v3960 = vld [vmem:[%s5 + $0x18] sm:$0xf]
      %v3961 = vld [vmem:[%s5 + $0x1c] sm:$0xf]
      %v3962 = vld [vmem:[%s5 + $0x20] sm:$0xf]
      %v3963 = vld [vmem:[%s5 + $0x24] sm:$0xf]
      %v3964 = vld [vmem:[%s5 + $0x28] sm:$0xf]
      %v3965 = vld [vmem:[%s5 + $0x2c] sm:$0xf]
      %v3966 = vld [vmem:[%s5 + $0x30] sm:$0xf]
      %v3967 = vld [vmem:[%s5 + $0x34] sm:$0xf]
      %v3968 = vld [vmem:[%s5 + $0x38] sm:$0xf]
      %v3969 = vld [vmem:[%s5 + $0x3c] sm:$0xf]
      %v3970 = vld [vmem:[%s5 + $0x40] sm:$0xf]
      %v3971 = vld [vmem:[%s5 + $0x44] sm:$0xf]
      %v3972 = vld [vmem:[%s5 + $0x48] sm:$0xf]
      %v3973 = vld [vmem:[%s5 + $0x4c] sm:$0xf]
      %v3974 = vld [vmem:[%s5 + $0x50] sm:$0xf]
      %v3975 = vld [vmem:[%s5 + $0x54] sm:$0xf]
      %v3976 = vld [vmem:[%s5 + $0x58] sm:$0xf]
      %v3977 = vld [vmem:[%s5 + $0x5c] sm:$0xf]
      %v3978 = vld [vmem:[%s5 + $0x60] sm:$0xf]
      %v3979 = vld [vmem:[%s5 + $0x64] sm:$0xf]
      %v3980 = vld [vmem:[%s5 + $0x68] sm:$0xf]
      %v3981 = vld [vmem:[%s5 + $0x6c] sm:$0xf]
      %v3982 = vld [vmem:[%s5 + $0x70] sm:$0xf]
      %v3983 = vld [vmem:[%s5 + $0x74] sm:$0xf]
      %v3984 = vld [vmem:[%s5 + $0x78] sm:$0xf]
      %v3985 = vld [vmem:[%s5 + $0x7c] sm:$0xf]
      %v3986 = vld [vmem:[%s5 + $0x80] sm:$0xf]
      %v3987 = vld [vmem:[%s5 + $0x84] sm:$0xf]
      %v3988 = vld [vmem:[%s5 + $0x88] sm:$0xf]
      %v3989 = vld [vmem:[%s5 + $0x8c] sm:$0xf]
      %v3990 = vld [vmem:[%s5 + $0x90] sm:$0xf]
      %v3991 = vld [vmem:[%s5 + $0x94] sm:$0xf]
      %v3992 = vld [vmem:[%s5 + $0x98] sm:$0xf]
      %v3993 = vld [vmem:[%s5 + $0x9c] sm:$0xf]
      %v3994 = vld [vmem:[%s5 + $0xa0] sm:$0xf]
      %v3995 = vld [vmem:[%s5 + $0xa4] sm:$0xf]
      %v3996 = vld [vmem:[%s5 + $0xa8] sm:$0xf]
      %v3997 = vld [vmem:[%s5 + $0xac] sm:$0xf]
      %v3998 = vld [vmem:[%s5 + $0xb0] sm:$0xf]
      %v3999 = vld [vmem:[%s5 + $0xb4] sm:$0xf]
      %v4000 = vld [vmem:[%s5 + $0xb8] sm:$0xf]
      %v4001 = vld [vmem:[%s5 + $0xbc] sm:$0xf]
      %v4002 = vld [vmem:[%s5 + $0xc0] sm:$0xf]
      %v4003 = vld [vmem:[%s5 + $0xc4] sm:$0xf]
      %v4004 = vld [vmem:[%s5 + $0xc8] sm:$0xf]
      %v4005 = vld [vmem:[%s5 + $0xcc] sm:$0xf]
      %v4006 = vld [vmem:[%s5 + $0xd0] sm:$0xf]
      %v4007 = vld [vmem:[%s5 + $0xd4] sm:$0xf]
      %v4008 = vld [vmem:[%s5 + $0xd8] sm:$0xf]
      %v4009 = vld [vmem:[%s5 + $0xdc] sm:$0xf]
      %v4010 = vld [vmem:[%s5 + $0xe0] sm:$0xf]
      %v4011 = vld [vmem:[%s5 + $0xe4] sm:$0xf]
      %v4012 = vld [vmem:[%s5 + $0xe8] sm:$0xf]
      %v4013 = vld [vmem:[%s5 + $0xec] sm:$0xf]
      %v4014 = vld [vmem:[%s5 + $0xf0] sm:$0xf]
      %v4015 = vld [vmem:[%s5 + $0xf4] sm:$0xf]
      %v4016 = vld [vmem:[%s5 + $0xf8] sm:$0xf]
      %v4017 = vld [vmem:[%s5 + $0xfc] sm:$0xf]
      %v4018 = vld [vmem:[%s5 + $0x100] sm:$0xf]
      %v4019 = vld [vmem:[%s5 + $0x104] sm:$0xf]
      %v4020 = vld [vmem:[%s5 + $0x108] sm:$0xf]
      %v4021 = vld [vmem:[%s5 + $0x10c] sm:$0xf]
      %v4022 = vld [vmem:[%s5 + $0x110] sm:$0xf]
      %v4023 = vld [vmem:[%s5 + $0x114] sm:$0xf]
      %v4024 = vld [vmem:[%s5 + $0x118] sm:$0xf]
      %v4025 = vld [vmem:[%s5 + $0x11c] sm:$0xf]
      %v4026 = vld [vmem:[%s5 + $0x120] sm:$0xf]
      %v4027 = vld [vmem:[%s5 + $0x124] sm:$0xf]
      %v4028 = vld [vmem:[%s5 + $0x128] sm:$0xf]
      %v4029 = vld [vmem:[%s5 + $0x12c] sm:$0xf]
      %v4030 = vld [vmem:[%s5 + $0x130] sm:$0xf]
      %v4031 = vld [vmem:[%s5 + $0x134] sm:$0xf]
      %v4032 = vld [vmem:[%s5 + $0x138] sm:$0xf]
      %v4033 = vld [vmem:[%s5 + $0x13c] sm:$0xf]
      %v4034 = vld [vmem:[%s6] sm:$0x1]
      %v4036 = vperm.slane %v4034, 0
      %v4118 = vunpack.c.l.b16 %v3954
      %v4119 = vunpack.c.l.b16 %v3955
      %v4120 = vunpack.c.l.b16 %v3956
      %v4121 = vunpack.c.l.b16 %v3957
      %v4122 = vunpack.c.l.b16 %v3958
      %v4123 = vunpack.c.l.b16 %v3959
      %v4124 = vunpack.c.l.b16 %v3960
      %v4125 = vunpack.c.l.b16 %v3961
      %v4126 = vunpack.c.l.b16 %v3962
      %v4127 = vunpack.c.l.b16 %v3963
      %v4128 = vunpack.c.l.b16 %v3964
      %v4129 = vunpack.c.l.b16 %v3965
      %v4130 = vunpack.c.l.b16 %v3966
      %v4131 = vunpack.c.l.b16 %v3967
      %v4132 = vunpack.c.l.b16 %v3968
      %v4133 = vunpack.c.l.b16 %v3969
      %v4134 = vunpack.c.l.b16 %v3970
      %v4135 = vunpack.c.l.b16 %v3971
      %v4136 = vunpack.c.l.b16 %v3972
      %v4137 = vunpack.c.l.b16 %v3973
      %v4138 = vunpack.c.l.b16 %v3974
      %v4139 = vunpack.c.l.b16 %v3975
      %v4140 = vunpack.c.l.b16 %v3976
      %v4141 = vunpack.c.l.b16 %v3977
      %v4142 = vunpack.c.l.b16 %v3978
      %v4143 = vunpack.c.l.b16 %v3979
      %v4144 = vunpack.c.l.b16 %v3980
      %v4145 = vunpack.c.l.b16 %v3981
      %v4146 = vunpack.c.l.b16 %v3982
      %v4147 = vunpack.c.l.b16 %v3983
      %v4148 = vunpack.c.l.b16 %v3984
      %v4149 = vunpack.c.l.b16 %v3985
      %v4150 = vunpack.c.l.b16 %v3986
      %v4151 = vunpack.c.l.b16 %v3987
      %v4152 = vunpack.c.l.b16 %v3988
      %v4153 = vunpack.c.l.b16 %v3989
      %v4154 = vunpack.c.l.b16 %v3990
      %v4155 = vunpack.c.l.b16 %v3991
      %v4156 = vunpack.c.l.b16 %v3992
      %v4157 = vunpack.c.l.b16 %v3993
      %v4158 = vunpack.c.l.b16 %v3994
      %v4159 = vunpack.c.l.b16 %v3995
      %v4160 = vunpack.c.l.b16 %v3996
      %v4161 = vunpack.c.l.b16 %v3997
      %v4162 = vunpack.c.l.b16 %v3998
      %v4163 = vunpack.c.l.b16 %v3999
      %v4164 = vunpack.c.l.b16 %v4000
      %v4165 = vunpack.c.l.b16 %v4001
      %v4166 = vunpack.c.l.b16 %v4002
      %v4167 = vunpack.c.l.b16 %v4003
      %v4168 = vunpack.c.l.b16 %v4004
      %v4169 = vunpack.c.l.b16 %v4005
      %v4170 = vunpack.c.l.b16 %v4006
      %v4171 = vunpack.c.l.b16 %v4007
      %v4172 = vunpack.c.l.b16 %v4008
      %v4173 = vunpack.c.l.b16 %v4009
      %v4174 = vunpack.c.l.b16 %v4010
      %v4175 = vunpack.c.l.b16 %v4011
      %v4176 = vunpack.c.l.b16 %v4012
      %v4177 = vunpack.c.l.b16 %v4013
      %v4178 = vunpack.c.l.b16 %v4014
      %v4179 = vunpack.c.l.b16 %v4015
      %v4180 = vunpack.c.l.b16 %v4016
      %v4181 = vunpack.c.l.b16 %v4017
      %v4182 = vunpack.c.l.b16 %v4018
      %v4183 = vunpack.c.l.b16 %v4019
      %v4184 = vunpack.c.l.b16 %v4020
      %v4185 = vunpack.c.l.b16 %v4021
      %v4186 = vunpack.c.l.b16 %v4022
      %v4187 = vunpack.c.l.b16 %v4023
      %v4188 = vunpack.c.l.b16 %v4024
      %v4189 = vunpack.c.l.b16 %v4025
      %v4190 = vunpack.c.l.b16 %v4026
      %v4191 = vunpack.c.l.b16 %v4027
      %v4192 = vunpack.c.l.b16 %v4028
      %v4193 = vunpack.c.l.b16 %v4029
      %v4194 = vunpack.c.l.b16 %v4030
      %v4195 = vunpack.c.l.b16 %v4031
      %v4196 = vunpack.c.l.b16 %v4032
      %v4197 = vunpack.c.l.b16 %v4033
      %v4198 = vpack.c.b16 %v4119, %v4118
      %v4199 = vpack.c.b16 %v4121, %v4120
      %v4200 = vpack.c.b16 %v4123, %v4122
      %v4201 = vpack.c.b16 %v4125, %v4124
      %v4202 = vpack.c.b16 %v4127, %v4126
      %v4203 = vpack.c.b16 %v4129, %v4128
      %v4204 = vpack.c.b16 %v4131, %v4130
      %v4205 = vpack.c.b16 %v4133, %v4132
      %v4206 = vpack.c.b16 %v4135, %v4134
      %v4207 = vpack.c.b16 %v4137, %v4136
      %v4208 = vpack.c.b16 %v4139, %v4138
      %v4209 = vpack.c.b16 %v4141, %v4140
      %v4210 = vpack.c.b16 %v4143, %v4142
      %v4211 = vpack.c.b16 %v4145, %v4144
      %v4212 = vpack.c.b16 %v4147, %v4146
      %v4213 = vpack.c.b16 %v4149, %v4148
      %v4214 = vpack.c.b16 %v4151, %v4150
      %v4215 = vpack.c.b16 %v4153, %v4152
      %v4216 = vpack.c.b16 %v4155, %v4154
      %v4217 = vpack.c.b16 %v4157, %v4156
      %v4218 = vpack.c.b16 %v4159, %v4158
      %v4219 = vpack.c.b16 %v4161, %v4160
      %v4220 = vpack.c.b16 %v4163, %v4162
      %v4221 = vpack.c.b16 %v4165, %v4164
      %v4222 = vpack.c.b16 %v4167, %v4166
      %v4223 = vpack.c.b16 %v4169, %v4168
      %v4224 = vpack.c.b16 %v4171, %v4170
      %v4225 = vpack.c.b16 %v4173, %v4172
      %v4226 = vpack.c.b16 %v4175, %v4174
      %v4227 = vpack.c.b16 %v4177, %v4176
      %v4228 = vpack.c.b16 %v4179, %v4178
      %v4229 = vpack.c.b16 %v4181, %v4180
      %v4230 = vpack.c.b16 %v4183, %v4182
      %v4231 = vpack.c.b16 %v4185, %v4184
      %v4232 = vpack.c.b16 %v4187, %v4186
      %v4233 = vpack.c.b16 %v4189, %v4188
      %v4234 = vpack.c.b16 %v4191, %v4190
      %v4235 = vpack.c.b16 %v4193, %v4192
      %v4236 = vpack.c.b16 %v4195, %v4194
      %v4237 = vpack.c.b16 %v4197, %v4196
      %4278 = vmatpush.bf16.msra.mxu0 %v4205
      %4279 = vmatpush.bf16.msra.mxu0 %v4204
      %4280 = vmatpush.bf16.msra.mxu0 %v4203
      %4281 = vmatpush.bf16.msra.mxu0 %v4202
      %4282 = vmatpush.bf16.msra.mxu0 %v4201
      %4283 = vmatpush.bf16.msra.mxu0 %v4200
      %4284 = vmatpush.bf16.msra.mxu0 %v4199
      %4285 = vmatpush.bf16.msra.mxu0 %v4198
      %4286 = vmatmul.bf16.gmra.mxu0 %v3949
      %v4287 = vpop.f32.mrf.mxu0
      %v4288 = vadd.f32 %v4036, %v4287
      %v4289 = vpop.f32.mrf.mxu0
      %4290 = vdwg.mxu0
      %4291 = vmatpush.bf16.msra.mxu0 %v4213
      %4292 = vmatpush.bf16.msra.mxu0 %v4212
      %4293 = vmatpush.bf16.msra.mxu0 %v4211
      %4294 = vmatpush.bf16.msra.mxu0 %v4210
      %4295 = vmatpush.bf16.msra.mxu0 %v4209
      %4296 = vmatpush.bf16.msra.mxu0 %v4208
      %4297 = vmatpush.bf16.msra.mxu0 %v4207
      %4298 = vmatpush.bf16.msra.mxu0 %v4206
      %4299 = vmatmul.bf16.gmra.mxu0 %v3950
      %v4300 = vpop.f32.mrf.mxu0
      %v4301 = vadd.f32 %v4288, %v4300
      %v4302 = vpop.f32.mrf.mxu0
      %4303 = vdwg.mxu0
      %4304 = vmatpush.bf16.msra.mxu0 %v4221
      %4305 = vmatpush.bf16.msra.mxu0 %v4220
      %4306 = vmatpush.bf16.msra.mxu0 %v4219
      %4307 = vmatpush.bf16.msra.mxu0 %v4218
      %4308 = vmatpush.bf16.msra.mxu0 %v4217
      %4309 = vmatpush.bf16.msra.mxu0 %v4216
      %4310 = vmatpush.bf16.msra.mxu0 %v4215
      %4311 = vmatpush.bf16.msra.mxu0 %v4214
      %4312 = vmatmul.bf16.gmra.mxu0 %v3951
      %v4313 = vpop.f32.mrf.mxu0
      %v4314 = vadd.f32 %v4301, %v4313
      %v4315 = vpop.f32.mrf.mxu0
      %4316 = vdwg.mxu0
      %4317 = vmatpush.bf16.msra.mxu0 %v4229
      %4318 = vmatpush.bf16.msra.mxu0 %v4228
      %4319 = vmatpush.bf16.msra.mxu0 %v4227
      %4320 = vmatpush.bf16.msra.mxu0 %v4226
      %4321 = vmatpush.bf16.msra.mxu0 %v4225
      %4322 = vmatpush.bf16.msra.mxu0 %v4224
      %4323 = vmatpush.bf16.msra.mxu0 %v4223
      %4324 = vmatpush.bf16.msra.mxu0 %v4222
      %4325 = vmatmul.bf16.gmra.mxu0 %v3952
      %v4326 = vpop.f32.mrf.mxu0
      %v4327 = vadd.f32 %v4314, %v4326
      %v4328 = vpop.f32.mrf.mxu0
      %4329 = vdwg.mxu0
      %4330 = vmatpush.bf16.msra.mxu0 %v4237
      %4331 = vmatpush.bf16.msra.mxu0 %v4236
      %4332 = vmatpush.bf16.msra.mxu0 %v4235
      %4333 = vmatpush.bf16.msra.mxu0 %v4234
      %4334 = vmatpush.bf16.msra.mxu0 %v4233
      %4335 = vmatpush.bf16.msra.mxu0 %v4232
      %4336 = vmatpush.bf16.msra.mxu0 %v4231
      %4337 = vmatpush.bf16.msra.mxu0 %v4230
      %4338 = vmatmul.bf16.gmra.mxu0 %v3953
      %v4339 = vpop.f32.mrf.mxu0
      %v4340 = vadd.f32 %v4327, %v4339
      %v4341 = vpop.f32.mrf.mxu0
      %4342 = vdwg.mxu0
      %v4343 = vmax.f32 %v4340, 0.0
      %v4344 = vpack.c.bf16 %v4343, %v4343
      %v4345 = vld [vmem:[%s7] sm:$0xf]
      %v4346 = vld [vmem:[%s7 + $0x4] sm:$0xf]
      %v4347 = vld [vmem:[%s7 + $0x8] sm:$0xf]
      %v4348 = vld [vmem:[%s7 + $0xc] sm:$0xf]
      %v4349 = vld [vmem:[%s7 + $0x10] sm:$0xf]
      %v4350 = vld [vmem:[%s7 + $0x14] sm:$0xf]
      %v4351 = vld [vmem:[%s7 + $0x18] sm:$0xf]
      %v4352 = vld [vmem:[%s7 + $0x1c] sm:$0xf]
      %v4353 = vld [vmem:[%s7 + $0x20] sm:$0xf]
      %v4354 = vld [vmem:[%s7 + $0x24] sm:$0xf]
      %v4355 = vld [vmem:[%s7 + $0x28] sm:$0xf]
      %v4356 = vld [vmem:[%s7 + $0x2c] sm:$0xf]
      %v4357 = vld [vmem:[%s7 + $0x30] sm:$0xf]
      %v4358 = vld [vmem:[%s7 + $0x34] sm:$0xf]
      %v4359 = vld [vmem:[%s7 + $0x38] sm:$0xf]
      %v4360 = vld [vmem:[%s7 + $0x3c] sm:$0xf]
      %v4361 = vld [vmem:[%s8] sm:$0x1]
      %v4363 = vperm.slane %v4361, 0
      %v4381 = vunpack.c.l.b16 %v4345
      %v4382 = vunpack.c.l.b16 %v4346
      %v4383 = vunpack.c.l.b16 %v4347
      %v4384 = vunpack.c.l.b16 %v4348
      %v4385 = vunpack.c.l.b16 %v4349
      %v4386 = vunpack.c.l.b16 %v4350
      %v4387 = vunpack.c.l.b16 %v4351
      %v4388 = vunpack.c.l.b16 %v4352
      %v4389 = vunpack.c.l.b16 %v4353
      %v4390 = vunpack.c.l.b16 %v4354
      %v4391 = vunpack.c.l.b16 %v4355
      %v4392 = vunpack.c.l.b16 %v4356
      %v4393 = vunpack.c.l.b16 %v4357
      %v4394 = vunpack.c.l.b16 %v4358
      %v4395 = vunpack.c.l.b16 %v4359
      %v4396 = vunpack.c.l.b16 %v4360
      %v4397 = vpack.c.b16 %v4382, %v4381
      %v4398 = vpack.c.b16 %v4384, %v4383
      %v4399 = vpack.c.b16 %v4386, %v4385
      %v4400 = vpack.c.b16 %v4388, %v4387
      %v4401 = vpack.c.b16 %v4390, %v4389
      %v4402 = vpack.c.b16 %v4392, %v4391
      %v4403 = vpack.c.b16 %v4394, %v4393
      %v4404 = vpack.c.b16 %v4396, %v4395
      %4413 = vmatpush.bf16.msra.mxu0 %v4404
      %4414 = vmatpush.bf16.msra.mxu0 %v4403
      %4415 = vmatpush.bf16.msra.mxu0 %v4402
      %4416 = vmatpush.bf16.msra.mxu0 %v4401
      %4417 = vmatpush.bf16.msra.mxu0 %v4400
      %4418 = vmatpush.bf16.msra.mxu0 %v4399
      %4419 = vmatpush.bf16.msra.mxu0 %v4398
      %4420 = vmatpush.bf16.msra.mxu0 %v4397
      %4421 = vmatmul.bf16.gmra.mxu0 %v4344
      %v4422 = vpop.f32.mrf.mxu0
      %v4423 = vadd.f32 %v4363, %v4422
      %v4424 = vpop.f32.mrf.mxu0
      %4425 = vdwg.mxu0
      %v4426 = vmax.f32 %v4423, 0.0
      %v4427 = vpack.c.bf16 %v4426, %v4426
      %v4428 = vld [vmem:[%s9] sm:$0xf]
      %v4429 = vld [vmem:[%s9 + $0x4] sm:$0xf]
      %v4430 = vld [vmem:[%s9 + $0x8] sm:$0xf]
      %v4431 = vld [vmem:[%s9 + $0xc] sm:$0xf]
      %v4432 = vld [vmem:[%s9 + $0x10] sm:$0xf]
      %v4433 = vld [vmem:[%s9 + $0x14] sm:$0xf]
      %v4434 = vld [vmem:[%s9 + $0x18] sm:$0xf]
      %v4435 = vld [vmem:[%s9 + $0x1c] sm:$0xf]
      %v4436 = vld [vmem:[%s9 + $0x20] sm:$0xf]
      %v4437 = vld [vmem:[%s9 + $0x24] sm:$0xf]
      %v4438 = vld [vmem:[%s9 + $0x28] sm:$0xf]
      %v4439 = vld [vmem:[%s9 + $0x2c] sm:$0xf]
      %v4440 = vld [vmem:[%s9 + $0x30] sm:$0xf]
      %v4441 = vld [vmem:[%s9 + $0x34] sm:$0xf]
      %v4442 = vld [vmem:[%s9 + $0x38] sm:$0xf]
      %v4443 = vld [vmem:[%s9 + $0x3c] sm:$0xf]
      %v4444 = vld [vmem:[%s10] sm:$0x1]
      %v4446 = vperm.slane %v4444, 0
      %v4464 = vunpack.c.l.b16 %v4428
      %v4465 = vunpack.c.l.b16 %v4429
      %v4466 = vunpack.c.l.b16 %v4430
      %v4467 = vunpack.c.l.b16 %v4431
      %v4468 = vunpack.c.l.b16 %v4432
      %v4469 = vunpack.c.l.b16 %v4433
      %v4470 = vunpack.c.l.b16 %v4434
      %v4471 = vunpack.c.l.b16 %v4435
      %v4472 = vunpack.c.l.b16 %v4436
      %v4473 = vunpack.c.l.b16 %v4437
      %v4474 = vunpack.c.l.b16 %v4438
      %v4475 = vunpack.c.l.b16 %v4439
      %v4476 = vunpack.c.l.b16 %v4440
      %v4477 = vunpack.c.l.b16 %v4441
      %v4478 = vunpack.c.l.b16 %v4442
      %v4479 = vunpack.c.l.b16 %v4443
      %v4480 = vpack.c.b16 %v4465, %v4464
      %v4481 = vpack.c.b16 %v4467, %v4466
      %v4482 = vpack.c.b16 %v4469, %v4468
      %v4483 = vpack.c.b16 %v4471, %v4470
      %v4484 = vpack.c.b16 %v4473, %v4472
      %v4485 = vpack.c.b16 %v4475, %v4474
      %v4486 = vpack.c.b16 %v4477, %v4476
      %v4487 = vpack.c.b16 %v4479, %v4478
      %4496 = vmatpush.bf16.msra.mxu0 %v4487
      %4497 = vmatpush.bf16.msra.mxu0 %v4486
      %4498 = vmatpush.bf16.msra.mxu0 %v4485
      %4499 = vmatpush.bf16.msra.mxu0 %v4484
      %4500 = vmatpush.bf16.msra.mxu0 %v4483
      %4501 = vmatpush.bf16.msra.mxu0 %v4482
      %4502 = vmatpush.bf16.msra.mxu0 %v4481
      %4503 = vmatpush.bf16.msra.mxu0 %v4480
      %4504 = vmatmul.bf16.gmra.mxu0 %v4427
      %v4505 = vpop.f32.mrf.mxu0
      %v4506 = vadd.f32 %v4446, %v4505
      %v4507 = vpop.f32.mrf.mxu0
      %4508 = vdwg.mxu0
      %4509 = vst [vmem:[%s384] sm:$0xff] %v4506
      %p4510 = scmp.lt.s32.totalorder %s22, 1
      %s4511 = scalar_select %p4510, %s22, 1
      %s4512 = smul.addr %s4511, 8
      %s4513 = scalar_lea.vmem %s11, %s4512
      // Predicated region
      $region65: #{net_forward.1} parent=63 // pred_check
        %p4514 = pneg %p276
      $region66: #{net_forward.1} parent=63 // pred_check_branch
        %4516 = sbr.rel (%p4514) target = $region68
      $region67: #{net_forward.1} parent=63 // pred_region
        _
      $region68: #{net_forward.1} parent=63 // pred_fallthru
        _
    $region64: #{net_forward.1} parent=5 // pred_fallthru
      _
    %p4517 = scmp.le.s32.totalorder 2, %s17
    // Predicated region
    $region69: #{net_forward.1} parent=5 // pred_check
      %p4518 = pneg %p4517
    $region70: #{net_forward.1} parent=5 // pred_check_branch
      %4520 = sbr.rel (%p4518) target = $region72
    $region71: #{net_forward.1} parent=5 // pred_region
      %s4521 = ssub.s32 %s17, 2
      // Predicated region
      $region73: #{net_forward.1} parent=71 // pred_check
        %p4522 = pneg %p282
      $region74: #{net_forward.1} parent=71 // pred_check_branch
        %4524 = sbr.rel (%p4522) target = $region76
      $region75: #{net_forward.1} parent=71 // pred_region
        %p4525 = scmp.lt.s32.totalorder %s23, 1
        %s4526 = scalar_select %p4525, %s23, 1
        %s4527 = smul.addr %s4526, 8
        %s4528 = scalar_lea.vmem %s11, %s4527
      $region76: #{net_forward.1} parent=71 // pred_fallthru
        _
    $region72: #{net_forward.1} parent=5 // pred_fallthru
      _
  $region6: #{net_forward.1} parent=0 // loop_footer
    %s21 = sadd.s32 1, %s17
  $region7: #{net_forward.1} parent=0 // loop_footer_branch
    %16 = sbr.rel target = $region3
  $region8: #{net_forward.1} parent=0 // loop_exit
    _

</llo_original>
